<compile_context>
chip_gen: v6e
topology: v6e:2x2x1
jax: 0.10.0
libtpu: 0.0.40
codegen_flags: <defaults>
</compile_context>

<pallas_src>
import functools

import jax
import jax.numpy as jnp
from jax import lax
from jax.experimental import pallas as pl
from jax.experimental.pallas import tpu as pltpu

EPS = 1e-5          # nn.GroupNorm default eps
NUM_GROUPS = 32


def _round_up(x, m):
    return ((x + m - 1) // m) * m


def _pick_batch_block(B, HW, target_m=256):
    """Images per grid step: fill MXU M (>=128 v5e, >=256 v6e/v7x) but keep
    >=2 parallel grid steps when possible so both v7x TensorCores are used."""
    bb = min(B, max(1, target_m // max(HW, 1)))
    while bb > 1 and B % bb:
        bb -= 1
    while bb > 1 and B // bb < 2:
        bb -= 1
        while bb > 1 and B % bb:
            bb -= 1
    return max(bb, 1)


def _group_norm_silu(h, gmat, gamma, beta):
    """GroupNorm(32, C) + SiLU on a stacked block h: (Bb, HW, C) f32.

    gmat[i, j] = 1/group_size if channels i, j share a group else 0, so
    per-channel spatial moments @ gmat = per-group moments broadcast to channels.
    Mean and E[x^2] are stacked so the group reduction is a single matmul.
    """
    Bb = h.shape[0]
    mean_c = jnp.mean(h, axis=1)                                 # (Bb, C)
    sq_c = jnp.mean(h * h, axis=1)                               # (Bb, C)
    mom = jnp.concatenate([mean_c, sq_c], axis=0)                # (2*Bb, C)
    g = jnp.dot(mom, gmat, preferred_element_type=jnp.float32)   # one MXU op
    gmean = g[:Bb][:, None, :]                                   # (Bb, 1, C)
    gsq = g[Bb:][:, None, :]
    gvar = jnp.maximum(gsq - gmean * gmean, 0.0)                 # cancellation guard
    scale = lax.rsqrt(gvar + EPS) * gamma                        # fold affine scale (EUP)
    y = (h - gmean) * scale + beta
    return y * jax.nn.sigmoid(y)                                 # SiLU


def _conv3x3(buf_ref, h, w3_ref, bias, wcol, W, PAD):
    """3x3 'same' conv of a stacked image block via 3 K=3*C matmuls.

    h: (Bb, HW, C) f32 activations.  w3_ref: (3, 3*C, Cout) bf16, rows ordered
    (kw, cin) within each kh group.  buf_ref: (Bb, HW+2*PAD, 3*C) bf16 scratch.
    wcol: (1, HW, 1) int32 pixel-column index (masks the W-direction wrap).

    Lane group kw of the scratch holds the kw-masked copy of h stored shifted
    by -(kw-1) rows, so a single aligned row-window read per kh yields im2col
    patches [h[p+dh-1] | h[p+dh] | h[p+dh+1]] ready for one matmul.
    """
    Bb, HW, C = h.shape
    Cout = w3_ref.shape[-1]

    hb = h.astype(jnp.bfloat16)                                  # cast once, not per tap
    zero = jnp.zeros_like(hb)
    h_l = jnp.where(wcol == W - 1, zero, hb)                     # feeds kw=0 (left) taps
    h_r = jnp.where(wcol == 0, zero, hb)                         # feeds kw=2 (right) taps

    # Zero only the boundary strips that shifted reads can touch (H-direction
    # padding).  Re-done every step -> no persistent scratch state, safe when
    # the parallel grid axis is sharded across cores.
    strip = W + 1
    zrow = jnp.zeros((Bb, strip, 3 * C), jnp.bfloat16)
    buf_ref[:, PAD - W:PAD + 1, :] = zrow
    buf_ref[:, PAD + HW - 1:PAD + HW + W, :] = zrow

    # Staggered stores (one per kw tap column), masks already applied.
    buf_ref[:, PAD + 1:PAD + 1 + HW, 0:C] = h_l
    buf_ref[:, PAD:PAD + HW, C:2 * C] = hb
    buf_ref[:, PAD - 1:PAD - 1 + HW, 2 * C:3 * C] = h_r

    acc = jnp.zeros((Bb * HW, Cout), jnp.float32)
    for kh in range(3):                                          # 3 MXU ops, K = 3*C
        r0 = PAD + (kh - 1) * W
        patch = buf_ref[:, r0:r0 + HW, :].reshape(Bb * HW, 3 * C)
        acc += jnp.dot(patch, w3_ref[kh], preferred_element_type=jnp.float32)
    return acc.reshape(Bb, HW, Cout) + bias


def resblock_kernel(x_ref, ec_ref,
                    gmat1_ref, gamma1_ref, beta1_ref, w1_ref, b1_ref,
                    wtc_ref, btc_ref,
                    gmat2_ref, gamma2_ref, beta2_ref, w2_ref, b2_ref,
                    *rest, W, PAD, same_ch):
    if same_ch:
        out_ref, buf1_ref, buf2_ref = rest
    else:
        wr_ref, br_ref, out_ref, buf1_ref, buf2_ref = rest

    x = x_ref[...]                                               # (Bb, HW, Cin) f32
    Bb, HW, Cin = x.shape
    wcol = lax.broadcasted_iota(jnp.int32, (1, HW, 1), 1) % W    # pixel column index

    # ---- block_1: GroupNorm + SiLU + Conv2d(3x3, pad=1) ----
    h1 = _group_norm_silu(x, gmat1_ref[...], gamma1_ref[...], beta1_ref[...])
    lat = _conv3x3(buf1_ref, h1, w1_ref, b1_ref[...], wcol, W, PAD)

    # ---- temb/cemb projections (fused into one matmul), broadcast over spatial ----
    e = ec_ref[0]                                                # (Bb, tdim+cdim) f32
    e = e * jax.nn.sigmoid(e)                                    # SiLU before the Linear
    emb = jnp.dot(e.astype(jnp.bfloat16), wtc_ref[...],
                  preferred_element_type=jnp.float32) + btc_ref[...]
    lat = lat + emb[:, None, :]

    # ---- block_2: GroupNorm + SiLU + Dropout + Conv2d(3x3, pad=1) ----
    # TODO(synk): Dropout is treated as inference-mode identity (no in-kernel RNG mask).
    h2 = _group_norm_silu(lat, gmat2_ref[...], gamma2_ref[...], beta2_ref[...])
    lat = _conv3x3(buf2_ref, h2, w2_ref, b2_ref[...], wcol, W, PAD)

    # ---- residual ----
    if same_ch:
        res = x                                                  # exact identity skip
    else:
        res = (jnp.dot(x.reshape(Bb * HW, Cin).astype(jnp.bfloat16), wr_ref[...],
                       preferred_element_type=jnp.float32).reshape(Bb, HW, -1)
               + br_ref[...])
    out_ref[...] = lat + res


def resblock(x_nchw, temb, cemb, kp, same_ch):
    """x: (B, Cin, H, W) f32, temb: (B, tdim), cemb: (B, cdim) -> (B, Cout, H, W) f32."""
    B, Cin, H, W = x_nchw.shape
    HW = H * W
    assert H >= 2 and W >= 2 and HW % 8 == 0, "kernel assumes H,W >= 2 and H*W % 8 == 0"
    assert Cin % NUM_GROUPS == 0, "GroupNorm(32, C) needs C % 32 == 0"
    Cout = kp['w1'].shape[-1]
    PAD = _round_up(W + 1, 8)                                    # >= W+1, sublane aligned
    Bb = _pick_batch_block(B, HW)

    x = jnp.transpose(x_nchw, (0, 2, 3, 1)).reshape(B, HW, Cin)  # NHWC, channels on lanes
    ec = jnp.concatenate([temb, cemb], axis=-1)                  # fuse the two embed projs
    edim = ec.shape[-1]
    ec3 = ec.reshape(B // Bb, Bb, edim)                          # keep block dims == full dims

    names = ['gmat1', 'gamma1', 'beta1', 'w1', 'b1', 'wtc', 'btc',
             'gmat2', 'gamma2', 'beta2', 'w2', 'b2']
    if not same_ch:
        names += ['wr', 'br']
    params = [kp[n] for n in names]

    def full(arr):
        shape = arr.shape
        return pl.BlockSpec(shape, lambda b: (0,) * len(shape))

    grid_spec = pltpu.PrefetchScalarGridSpec(
        num_scalar_prefetch=0,
        grid=(B // Bb,),
        in_specs=[pl.BlockSpec((Bb, HW, Cin), lambda b: (b, 0, 0)),   # x block (Bb images)
                  pl.BlockSpec((1, Bb, edim), lambda b: (b, 0, 0))]   # [temb | cemb]
                 + [full(p) for p in params],
        out_specs=pl.BlockSpec((Bb, HW, Cout), lambda b: (b, 0, 0)),
        scratch_shapes=[
            pltpu.VMEM((Bb, HW + 2 * PAD, 3 * Cin), jnp.bfloat16),    # conv1 staging
            pltpu.VMEM((Bb, HW + 2 * PAD, 3 * Cout), jnp.bfloat16),   # conv2 staging
        ],
    )
    out = pl.pallas_call(
        functools.partial(resblock_kernel, W=W, PAD=PAD, same_ch=same_ch),
        out_shape=jax.ShapeDtypeStruct((B, HW, Cout), jnp.float32),
        grid_spec=grid_spec,
        compiler_params=pltpu.CompilerParams(dimension_semantics=("parallel",)),
    )(x, ec3, *params)
    return jnp.transpose(out.reshape(B, H, W, Cout), (0, 3, 1, 2))


# ---------------------------------------------------------------------------
# Parameter construction (torch-layout) and repacking into kernel layouts.
# ---------------------------------------------------------------------------

def group_average_matrix(c, num_groups=NUM_GROUPS):
    gs = c // num_groups
    g = jnp.arange(c) // gs
    return (g[:, None] == g[None, :]).astype(jnp.float32) / gs


def make_params(key, in_ch, out_ch, tdim, cdim):
    """Random parameters in PyTorch layout: conv (Co,Ci,kH,kW), linear (out,in)."""
    ks = jax.random.split(key, 14)

    def affine(k1, k2, c):
        gamma = (1.0 + 0.1 * jax.random.normal(k1, (1, c))).astype(jnp.float32)
        beta = (0.1 * jax.random.normal(k2, (1, c))).astype(jnp.float32)
        return gamma, beta

    def conv3(k1, k2, ci, co):
        w = (jax.random.normal(k1, (co, ci, 3, 3)) / jnp.sqrt(9.0 * ci)).astype(jnp.float32)
        b = (0.05 * jax.random.normal(k2, (co,))).astype(jnp.float32)
        return w, b

    def lin(k1, k2, di, do):
        w = (jax.random.normal(k1, (do, di)) / jnp.sqrt(di)).astype(jnp.float32)
        b = (0.05 * jax.random.normal(k2, (do,))).astype(jnp.float32)
        return w, b

    gamma1, beta1 = affine(ks[0], ks[1], in_ch)
    gamma2, beta2 = affine(ks[2], ks[3], out_ch)
    w1, b1 = conv3(ks[4], ks[5], in_ch, out_ch)
    w2, b2 = conv3(ks[6], ks[7], out_ch, out_ch)
    wt, bt = lin(ks[8], ks[9], tdim, out_ch)
    wc, bc = lin(ks[10], ks[11], cdim, out_ch)
    if in_ch != out_ch:
        wr = (jax.random.normal(ks[12], (out_ch, in_ch, 1, 1)) / jnp.sqrt(in_ch)).astype(jnp.float32)
        br = (0.05 * jax.random.normal(ks[13], (out_ch,))).astype(jnp.float32)
    else:  # nn.Identity() == 1x1 conv with identity weights (for the reference only)
        wr = jnp.eye(in_ch, dtype=jnp.float32).reshape(out_ch, in_ch, 1, 1)
        br = jnp.zeros((out_ch,), jnp.float32)
    return dict(gamma1=gamma1, beta1=beta1, w1=w1, b1=b1,
                gamma2=gamma2, beta2=beta2, w2=w2, b2=b2,
                wt=wt, bt=bt, wc=wc, bc=bc, wr=wr, br=br)


def pack_kernel_params(tp, in_ch, out_ch):
    """Repack torch-layout params into kernel layouts; matmul weights pre-cast to bf16."""
    same_ch = in_ch == out_ch

    def repack_conv3(w):                                   # (Co,Ci,3,3) -> (3, 3*Ci, Co)
        co, ci = w.shape[0], w.shape[1]
        return jnp.transpose(w, (2, 3, 1, 0)).reshape(3, 3 * ci, co).astype(jnp.bfloat16)

    kp = dict(
        gmat1=group_average_matrix(in_ch),
        gamma1=tp['gamma1'], beta1=tp['beta1'],
        w1=repack_conv3(tp['w1']), b1=tp['b1'].reshape(1, -1),
        wtc=jnp.concatenate([tp['wt'].T, tp['wc'].T], axis=0).astype(jnp.bfloat16),
        btc=(tp['bt'] + tp['bc']).reshape(1, -1),
        gmat2=group_average_matrix(out_ch),
        gamma2=tp['gamma2'], beta2=tp['beta2'],
        w2=repack_conv3(tp['w2']), b2=tp['b2'].reshape(1, -1),
    )
    if not same_ch:
        kp['wr'] = tp['wr'][:, :, 0, 0].T.astype(jnp.bfloat16)   # (Ci, Co)
        kp['br'] = tp['br'].reshape(1, -1)
    return kp, same_ch


# ---------------------------------------------------------------------------
# Pure-JAX f32 reference mirroring the PyTorch ResBlock.forward (eval mode).
# ---------------------------------------------------------------------------

def resblock_ref(x, temb, cemb, tp, num_groups=NUM_GROUPS):
    B, Cin, H, W = x.shape

    def group_norm(h, gamma, beta):
        c = h.shape[1]
        hg = h.reshape(B, num_groups, c // num_groups, H, W)
        m = jnp.mean(hg, axis=(2, 3, 4), keepdims=True)
        v = jnp.var(hg, axis=(2, 3, 4), keepdims=True)
        hn = ((hg - m) / jnp.sqrt(v + EPS)).reshape(B, c, H, W)
        return hn * gamma.reshape(1, c, 1, 1) + beta.reshape(1, c, 1, 1)

    def silu(z):
        return z * jax.nn.sigmoid(z)

    def conv(h, w, b, pad):
        y = lax.conv_general_dilated(h, w, window_strides=(1, 1),
                                     padding=((pad, pad), (pad, pad)),
                                     dimension_numbers=('NCHW', 'OIHW', 'NCHW'))
        return y + b.reshape(1, -1, 1, 1)

    lat = conv(silu(group_norm(x, tp['gamma1'], tp['beta1'])), tp['w1'], tp['b1'], 1)
    lat = lat + (silu(temb) @ tp['wt'].T + tp['bt'])[:, :, None, None]
    lat = lat + (silu(cemb) @ tp['wc'].T + tp['bc'])[:, :, None, None]
    lat = conv(silu(group_norm(lat, tp['gamma2'], tp['beta2'])), tp['w2'], tp['b2'], 1)
    lat = lat + conv(x, tp['wr'], tp['br'], 0)
    return lat


def _run_case(key, B, Cin, Cout, H, W, tdim, cdim):
    kx, kt, kc, kp = jax.random.split(key, 4)
    x = jax.random.normal(kx, (B, Cin, H, W), dtype=jnp.float32)
    temb = jax.random.normal(kt, (B, tdim), dtype=jnp.float32)
    cemb = jax.random.normal(kc, (B, cdim), dtype=jnp.float32)

    tp = make_params(kp, Cin, Cout, tdim, cdim)
    kparams, same_ch = pack_kernel_params(tp, Cin, Cout)

    out = resblock(x, temb, cemb, kparams, same_ch)
    out = jax.block_until_ready(out)

    ref = resblock_ref(x, temb, cemb, tp)
    assert out.shape == (B, Cout, H, W)
    err = float(jnp.max(jnp.abs(out - ref)))
    # bf16 MXU operands (f32 accumulation) -> looser tolerance than pure-f32.
    assert jnp.allclose(out, ref, atol=3e-2, rtol=3e-2), f"max err {err}"


if __name__ == "__main__":
    # GroupNorm(32, C) requires C % 32 == 0; Cout=128 keeps the output lane-dense.
    key = jax.random.PRNGKey(0)
    k1, k2 = jax.random.split(key)
    # Main case (in_ch != out_ch): B=4 -> 2 images per grid step (M=128), 2 parallel steps.
    _run_case(k1, B=4, Cin=64, Cout=128, H=8, W=8, tdim=128, cdim=64)
    # Identity-residual case (in_ch == out_ch): exercises the matmul-free skip path.
    _run_case(k2, B=2, Cin=64, Cout=64, H=8, W=8, tdim=128, cdim=64)
    print("KERNEL_OK")
</pallas_src>

<mosaic_0001>
module attributes {stable_mosaic.version = 11 : i64} {
  func.func @resblock_kernel(%arg0: i32, %arg1: memref<2x64x64xf32, #tpu.memory_space<vmem>>, %arg2: memref<1x2x192xf32, #tpu.memory_space<vmem>>, %arg3: memref<64x64xf32, #tpu.memory_space<vmem>>, %arg4: memref<1x64xf32, #tpu.memory_space<vmem>>, %arg5: memref<1x64xf32, #tpu.memory_space<vmem>>, %arg6: memref<3x192x128xbf16, #tpu.memory_space<vmem>>, %arg7: memref<1x128xf32, #tpu.memory_space<vmem>>, %arg8: memref<192x128xbf16, #tpu.memory_space<vmem>>, %arg9: memref<1x128xf32, #tpu.memory_space<vmem>>, %arg10: memref<128x128xf32, #tpu.memory_space<vmem>>, %arg11: memref<1x128xf32, #tpu.memory_space<vmem>>, %arg12: memref<1x128xf32, #tpu.memory_space<vmem>>, %arg13: memref<3x384x128xbf16, #tpu.memory_space<vmem>>, %arg14: memref<1x128xf32, #tpu.memory_space<vmem>>, %arg15: memref<64x128xbf16, #tpu.memory_space<vmem>>, %arg16: memref<1x128xf32, #tpu.memory_space<vmem>>, %arg17: memref<2x64x128xf32, #tpu.memory_space<vmem>>, %arg18: memref<2x96x192xbf16, #tpu.memory_space<vmem>>, %arg19: memref<2x96x384xbf16, #tpu.memory_space<vmem>>) attributes {dimension_semantics = [#tpu.dimension_semantics<parallel>], iteration_bounds = array<i64: 2>, scalar_prefetch = 0 : i64, scratch_operands = 2 : i64, tpu.core_type = #tpu.core_type<tc>, window_params = [{transform_indices = @transform_0, window_bounds = array<i64: 2, 64, 64>}, {transform_indices = @transform_1, window_bounds = array<i64: 1, 2, 192>}, {pipeline_mode = #tpu.pipeline_mode<synchronous>, transform_indices = @transform_2, window_bounds = array<i64: 64, 64>}, {pipeline_mode = #tpu.pipeline_mode<synchronous>, transform_indices = @transform_3, window_bounds = array<i64: 1, 64>}, {pipeline_mode = #tpu.pipeline_mode<synchronous>, transform_indices = @transform_4, window_bounds = array<i64: 1, 64>}, {pipeline_mode = #tpu.pipeline_mode<synchronous>, transform_indices = @transform_5, window_bounds = array<i64: 3, 192, 128>}, {pipeline_mode = #tpu.pipeline_mode<synchronous>, transform_indices = @transform_6, window_bounds = array<i64: 1, 128>}, {pipeline_mode = #tpu.pipeline_mode<synchronous>, transform_indices = @transform_7, window_bounds = array<i64: 192, 128>}, {pipeline_mode = #tpu.pipeline_mode<synchronous>, transform_indices = @transform_8, window_bounds = array<i64: 1, 128>}, {pipeline_mode = #tpu.pipeline_mode<synchronous>, transform_indices = @transform_9, window_bounds = array<i64: 128, 128>}, {pipeline_mode = #tpu.pipeline_mode<synchronous>, transform_indices = @transform_10, window_bounds = array<i64: 1, 128>}, {pipeline_mode = #tpu.pipeline_mode<synchronous>, transform_indices = @transform_11, window_bounds = array<i64: 1, 128>}, {pipeline_mode = #tpu.pipeline_mode<synchronous>, transform_indices = @transform_12, window_bounds = array<i64: 3, 384, 128>}, {pipeline_mode = #tpu.pipeline_mode<synchronous>, transform_indices = @transform_13, window_bounds = array<i64: 1, 128>}, {pipeline_mode = #tpu.pipeline_mode<synchronous>, transform_indices = @transform_14, window_bounds = array<i64: 64, 128>}, {pipeline_mode = #tpu.pipeline_mode<synchronous>, transform_indices = @transform_15, window_bounds = array<i64: 1, 128>}, {transform_indices = @transform_16, window_bounds = array<i64: 2, 64, 128>}]} {
    %c0 = arith.constant 0 : index
    %c0_0 = arith.constant 0 : index
    %c0_1 = arith.constant 0 : index
    %0 = vector.load %arg1[%c0, %c0_0, %c0_1] : memref<2x64x64xf32, #tpu.memory_space<vmem>>, vector<2x64x64xf32>
    %1 = tpu.iota {dimensions = array<i32: 1>} : vector<1x64x1xi32>
    %c8_i32 = arith.constant 8 : i32
    %c0_i32 = arith.constant 0 : i32
    %2 = arith.cmpi eq, %c8_i32, %c0_i32 : i32
    %c1_i32 = arith.constant 1 : i32
    %3 = arith.select %2, %c1_i32, %c8_i32 : i32
    %4 = vector.broadcast %3 : i32 to vector<1x64x1xi32>
    %5 = arith.remsi %1, %4 : vector<1x64x1xi32>
    %c0_i32_2 = arith.constant 0 : i32
    %6 = vector.broadcast %c0_i32_2 : i32 to vector<1x64x1xi32>
    %7 = arith.cmpi ne, %5, %6 : vector<1x64x1xi32>
    %c0_i32_3 = arith.constant 0 : i32
    %8 = vector.broadcast %c0_i32_3 : i32 to vector<1x64x1xi32>
    %9 = arith.cmpi slt, %5, %8 : vector<1x64x1xi32>
    %c0_i32_4 = arith.constant 0 : i32
    %10 = arith.cmpi slt, %3, %c0_i32_4 : i32
    %11 = vector.broadcast %10 : i1 to vector<1x64x1xi1>
    %12 = vector.broadcast %11 : vector<1x64x1xi1> to vector<1x64x1xi1>
    %13 = arith.xori %9, %12 : vector<1x64x1xi1>
    %14 = arith.andi %13, %7 : vector<1x64x1xi1>
    %15 = vector.broadcast %3 : i32 to vector<1x64x1xi32>
    %16 = arith.addi %5, %15 : vector<1x64x1xi32>
    %17 = arith.select %14, %16, %5 : vector<1x64x1xi1>, vector<1x64x1xi32>
    %c0_5 = arith.constant 0 : index
    %c0_6 = arith.constant 0 : index
    %18 = vector.load %arg3[%c0_5, %c0_6] : memref<64x64xf32, #tpu.memory_space<vmem>>, vector<64x64xf32>
    %c0_7 = arith.constant 0 : index
    %c0_8 = arith.constant 0 : index
    %19 = vector.load %arg4[%c0_7, %c0_8] : memref<1x64xf32, #tpu.memory_space<vmem>>, vector<1x64xf32>
    %c0_9 = arith.constant 0 : index
    %c0_10 = arith.constant 0 : index
    %20 = vector.load %arg5[%c0_9, %c0_10] : memref<1x64xf32, #tpu.memory_space<vmem>>, vector<1x64xf32>
    %cst = arith.constant dense<0.000000e+00> : vector<2x64xf32>
    %21 = vector.multi_reduction <add>, %0, %cst [1] : vector<2x64x64xf32> to vector<2x64xf32>
    %cst_11 = arith.constant 6.400000e+01 : f32
    %22 = vector.broadcast %cst_11 : f32 to vector<2x64xf32>
    %23 = arith.divf %21, %22 : vector<2x64xf32>
    %24 = arith.mulf %0, %0 : vector<2x64x64xf32>
    %cst_12 = arith.constant dense<0.000000e+00> : vector<2x64xf32>
    %25 = vector.multi_reduction <add>, %24, %cst_12 [1] : vector<2x64x64xf32> to vector<2x64xf32>
    %cst_13 = arith.constant 6.400000e+01 : f32
    %26 = vector.broadcast %cst_13 : f32 to vector<2x64xf32>
    %27 = arith.divf %25, %26 : vector<2x64xf32>
    %28 = tpu.concatenate %23, %27 in 0 : vector<2x64xf32>, vector<2x64xf32> -> vector<4x64xf32>
    %cst_14 = arith.constant dense<0.000000e+00> : vector<4x64xf32>
    %29 = tpu.matmul %28, %18, %cst_14 {dimension_numbers = #tpu.dot_dimension_numbers<[1], [0], [0], [1], [0, 0, 1, 1], [], []>} : vector<4x64xf32>, vector<64x64xf32>, vector<4x64xf32> -> vector<4x64xf32>
    %30 = vector.extract_strided_slice %29 {offsets = [0, 0], sizes = [2, 64], strides = [1, 1]} : vector<4x64xf32> to vector<2x64xf32>
    %31 = vector.shape_cast %30 : vector<2x64xf32> to vector<2x1x64xf32>
    %32 = vector.extract_strided_slice %29 {offsets = [2, 0], sizes = [2, 64], strides = [1, 1]} : vector<4x64xf32> to vector<2x64xf32>
    %33 = vector.shape_cast %32 : vector<2x64xf32> to vector<2x1x64xf32>
    %34 = arith.mulf %31, %31 : vector<2x1x64xf32>
    %35 = arith.subf %33, %34 : vector<2x1x64xf32>
    %cst_15 = arith.constant 0.000000e+00 : f32
    %36 = vector.broadcast %cst_15 : f32 to vector<2x1x64xf32>
    %37 = arith.maximumf %35, %36 : vector<2x1x64xf32>
    %cst_16 = arith.constant 9.99999974E-6 : f32
    %38 = vector.broadcast %cst_16 : f32 to vector<2x1x64xf32>
    %39 = arith.addf %37, %38 : vector<2x1x64xf32>
    %40 = math.rsqrt %39 : vector<2x1x64xf32>
    %41 = vector.shape_cast %19 : vector<1x64xf32> to vector<1x1x64xf32>
    %42 = vector.broadcast %41 : vector<1x1x64xf32> to vector<2x1x64xf32>
    %43 = arith.mulf %40, %42 : vector<2x1x64xf32>
    %44 = vector.broadcast %31 : vector<2x1x64xf32> to vector<2x64x64xf32>
    %45 = arith.subf %0, %44 : vector<2x64x64xf32>
    %46 = vector.broadcast %43 : vector<2x1x64xf32> to vector<2x64x64xf32>
    %47 = arith.mulf %45, %46 : vector<2x64x64xf32>
    %48 = vector.shape_cast %20 : vector<1x64xf32> to vector<1x1x64xf32>
    %49 = vector.broadcast %48 : vector<1x1x64xf32> to vector<2x64x64xf32>
    %50 = arith.addf %47, %49 : vector<2x64x64xf32>
    %51 = arith.negf %50 : vector<2x64x64xf32>
    %52 = math.exp %51 : vector<2x64x64xf32>
    %cst_17 = arith.constant 1.000000e+00 : f32
    %53 = vector.broadcast %cst_17 : f32 to vector<2x64x64xf32>
    %54 = arith.addf %53, %52 : vector<2x64x64xf32>
    %55 = arith.divf %53, %54 : vector<2x64x64xf32>
    %56 = arith.mulf %50, %55 : vector<2x64x64xf32>
    %c0_18 = arith.constant 0 : index
    %c0_19 = arith.constant 0 : index
    %57 = vector.load %arg7[%c0_18, %c0_19] : memref<1x128xf32, #tpu.memory_space<vmem>>, vector<1x128xf32>
    %58 = arith.truncf %56 : vector<2x64x64xf32> to vector<2x64x64xbf16>
    %cst_20 = arith.constant 0.000000e+00 : bf16
    %59 = vector.broadcast %cst_20 : bf16 to vector<2x64x64xbf16>
    %c7_i32 = arith.constant 7 : i32
    %60 = vector.broadcast %c7_i32 : i32 to vector<1x64x1xi32>
    %61 = arith.cmpi eq, %17, %60 : vector<1x64x1xi32>
    %62 = vector.shape_cast %61 : vector<1x64x1xi1> to vector<1x64x1xi1>
    %63 = vector.broadcast %62 : vector<1x64x1xi1> to vector<2x64x64xi1>
    %64 = arith.select %63, %59, %58 : vector<2x64x64xi1>, vector<2x64x64xbf16>
    %c0_i32_21 = arith.constant 0 : i32
    %65 = vector.broadcast %c0_i32_21 : i32 to vector<1x64x1xi32>
    %66 = arith.cmpi eq, %17, %65 : vector<1x64x1xi32>
    %67 = vector.shape_cast %66 : vector<1x64x1xi1> to vector<1x64x1xi1>
    %68 = vector.broadcast %67 : vector<1x64x1xi1> to vector<2x64x64xi1>
    %69 = arith.select %68, %59, %58 : vector<2x64x64xi1>, vector<2x64x64xbf16>
    %cst_22 = arith.constant 0.000000e+00 : bf16
    %70 = vector.broadcast %cst_22 : bf16 to vector<2x9x192xbf16>
    %c0_23 = arith.constant 0 : index
    %c8 = arith.constant 8 : index
    %c0_24 = arith.constant 0 : index
    %71 = vector.load %arg18[%c0_23, %c8, %c0_24] : memref<2x96x192xbf16, #tpu.memory_space<vmem>>, vector<2x9x192xbf16>
    tpu.vector_store %arg18[%c0_23, %c8, %c0_24], %70 {strides = array<i32>} : memref<2x96x192xbf16, #tpu.memory_space<vmem>>, vector<2x9x192xbf16>,
    %c0_25 = arith.constant 0 : index
    %c79 = arith.constant 79 : index
    %c0_26 = arith.constant 0 : index
    %72 = vector.load %arg18[%c0_25, %c79, %c0_26] : memref<2x96x192xbf16, #tpu.memory_space<vmem>>, vector<2x9x192xbf16>
    tpu.vector_store %arg18[%c0_25, %c79, %c0_26], %70 {strides = array<i32>} : memref<2x96x192xbf16, #tpu.memory_space<vmem>>, vector<2x9x192xbf16>,
    %c0_27 = arith.constant 0 : index
    %c17 = arith.constant 17 : index
    %c0_28 = arith.constant 0 : index
    %73 = vector.load %arg18[%c0_27, %c17, %c0_28] : memref<2x96x192xbf16, #tpu.memory_space<vmem>>, vector<2x64x64xbf16>
    tpu.vector_store %arg18[%c0_27, %c17, %c0_28], %64 {strides = array<i32>} : memref<2x96x192xbf16, #tpu.memory_space<vmem>>, vector<2x64x64xbf16>,
    %c0_29 = arith.constant 0 : index
    %c16 = arith.constant 16 : index
    %c64 = arith.constant 64 : index
    %74 = vector.load %arg18[%c0_29, %c16, %c64] : memref<2x96x192xbf16, #tpu.memory_space<vmem>>, vector<2x64x64xbf16>
    tpu.vector_store %arg18[%c0_29, %c16, %c64], %58 {strides = array<i32>} : memref<2x96x192xbf16, #tpu.memory_space<vmem>>, vector<2x64x64xbf16>,
    %c0_30 = arith.constant 0 : index
    %c15 = arith.constant 15 : index
    %c128 = arith.constant 128 : index
    %75 = vector.load %arg18[%c0_30, %c15, %c128] : memref<2x96x192xbf16, #tpu.memory_space<vmem>>, vector<2x64x64xbf16>
    tpu.vector_store %arg18[%c0_30, %c15, %c128], %69 {strides = array<i32>} : memref<2x96x192xbf16, #tpu.memory_space<vmem>>, vector<2x64x64xbf16>,
    %cst_31 = arith.constant 0.000000e+00 : f32
    %76 = vector.broadcast %cst_31 : f32 to vector<128x128xf32>
    %c0_32 = arith.constant 0 : index
    %c8_33 = arith.constant 8 : index
    %c0_34 = arith.constant 0 : index
    %77 = vector.load %arg18[%c0_32, %c8_33, %c0_34] : memref<2x96x192xbf16, #tpu.memory_space<vmem>>, vector<2x64x192xbf16>
    %78 = vector.shape_cast %77 : vector<2x64x192xbf16> to vector<128x192xbf16>
    %c0_35 = arith.constant 0 : index
    %c0_36 = arith.constant 0 : index
    %c0_37 = arith.constant 0 : index
    %79 = vector.load %arg6[%c0_35, %c0_36, %c0_37] : memref<3x192x128xbf16, #tpu.memory_space<vmem>>, vector<1x192x128xbf16>
    %80 = vector.shape_cast %79 : vector<1x192x128xbf16> to vector<192x128xbf16>
    %cst_38 = arith.constant dense<0.000000e+00> : vector<128x128xf32>
    %81 = tpu.matmul %78, %80, %cst_38 {dimension_numbers = #tpu.dot_dimension_numbers<[1], [0], [0], [1], [0, 0, 1, 1], [], []>} : vector<128x192xbf16>, vector<192x128xbf16>, vector<128x128xf32> -> vector<128x128xf32>
    %82 = arith.addf %76, %81 : vector<128x128xf32>
    %c0_39 = arith.constant 0 : index
    %c16_40 = arith.constant 16 : index
    %c0_41 = arith.constant 0 : index
    %83 = vector.load %arg18[%c0_39, %c16_40, %c0_41] : memref<2x96x192xbf16, #tpu.memory_space<vmem>>, vector<2x64x192xbf16>
    %84 = vector.shape_cast %83 : vector<2x64x192xbf16> to vector<128x192xbf16>
    %c1 = arith.constant 1 : index
    %c0_42 = arith.constant 0 : index
    %c0_43 = arith.constant 0 : index
    %85 = vector.load %arg6[%c1, %c0_42, %c0_43] : memref<3x192x128xbf16, #tpu.memory_space<vmem>>, vector<1x192x128xbf16>
    %86 = vector.shape_cast %85 : vector<1x192x128xbf16> to vector<192x128xbf16>
    %cst_44 = arith.constant dense<0.000000e+00> : vector<128x128xf32>
    %87 = tpu.matmul %84, %86, %cst_44 {dimension_numbers = #tpu.dot_dimension_numbers<[1], [0], [0], [1], [0, 0, 1, 1], [], []>} : vector<128x192xbf16>, vector<192x128xbf16>, vector<128x128xf32> -> vector<128x128xf32>
    %88 = arith.addf %82, %87 : vector<128x128xf32>
    %c0_45 = arith.constant 0 : index
    %c24 = arith.constant 24 : index
    %c0_46 = arith.constant 0 : index
    %89 = vector.load %arg18[%c0_45, %c24, %c0_46] : memref<2x96x192xbf16, #tpu.memory_space<vmem>>, vector<2x64x192xbf16>
    %90 = vector.shape_cast %89 : vector<2x64x192xbf16> to vector<128x192xbf16>
    %c2 = arith.constant 2 : index
    %c0_47 = arith.constant 0 : index
    %c0_48 = arith.constant 0 : index
    %91 = vector.load %arg6[%c2, %c0_47, %c0_48] : memref<3x192x128xbf16, #tpu.memory_space<vmem>>, vector<1x192x128xbf16>
    %92 = vector.shape_cast %91 : vector<1x192x128xbf16> to vector<192x128xbf16>
    %cst_49 = arith.constant dense<0.000000e+00> : vector<128x128xf32>
    %93 = tpu.matmul %90, %92, %cst_49 {dimension_numbers = #tpu.dot_dimension_numbers<[1], [0], [0], [1], [0, 0, 1, 1], [], []>} : vector<128x192xbf16>, vector<192x128xbf16>, vector<128x128xf32> -> vector<128x128xf32>
    %94 = arith.addf %88, %93 : vector<128x128xf32>
    %95 = vector.shape_cast %94 : vector<128x128xf32> to vector<2x64x128xf32>
    %96 = vector.shape_cast %57 : vector<1x128xf32> to vector<1x1x128xf32>
    %97 = vector.broadcast %96 : vector<1x1x128xf32> to vector<2x64x128xf32>
    %98 = arith.addf %95, %97 : vector<2x64x128xf32>
    %c0_50 = arith.constant 0 : index
    %c0_51 = arith.constant 0 : index
    %c0_52 = arith.constant 0 : index
    %99 = vector.load %arg2[%c0_50, %c0_51, %c0_52] : memref<1x2x192xf32, #tpu.memory_space<vmem>>, vector<1x2x192xf32>
    %100 = vector.shape_cast %99 : vector<1x2x192xf32> to vector<2x192xf32>
    %101 = arith.negf %100 : vector<2x192xf32>
    %102 = math.exp %101 : vector<2x192xf32>
    %cst_53 = arith.constant 1.000000e+00 : f32
    %103 = vector.broadcast %cst_53 : f32 to vector<2x192xf32>
    %104 = arith.addf %103, %102 : vector<2x192xf32>
    %105 = arith.divf %103, %104 : vector<2x192xf32>
    %106 = arith.mulf %100, %105 : vector<2x192xf32>
    %107 = arith.truncf %106 : vector<2x192xf32> to vector<2x192xbf16>
    %c0_54 = arith.constant 0 : index
    %c0_55 = arith.constant 0 : index
    %108 = vector.load %arg8[%c0_54, %c0_55] : memref<192x128xbf16, #tpu.memory_space<vmem>>, vector<192x128xbf16>
    %cst_56 = arith.constant dense<0.000000e+00> : vector<2x128xf32>
    %109 = tpu.matmul %107, %108, %cst_56 {dimension_numbers = #tpu.dot_dimension_numbers<[1], [0], [0], [1], [0, 0, 1, 1], [], []>} : vector<2x192xbf16>, vector<192x128xbf16>, vector<2x128xf32> -> vector<2x128xf32>
    %c0_57 = arith.constant 0 : index
    %c0_58 = arith.constant 0 : index
    %110 = vector.load %arg9[%c0_57, %c0_58] : memref<1x128xf32, #tpu.memory_space<vmem>>, vector<1x128xf32>
    %111 = vector.broadcast %110 : vector<1x128xf32> to vector<2x128xf32>
    %112 = arith.addf %109, %111 : vector<2x128xf32>
    %113 = vector.shape_cast %112 : vector<2x128xf32> to vector<2x1x128xf32>
    %114 = vector.broadcast %113 : vector<2x1x128xf32> to vector<2x64x128xf32>
    %115 = arith.addf %98, %114 : vector<2x64x128xf32>
    %c0_59 = arith.constant 0 : index
    %c0_60 = arith.constant 0 : index
    %116 = vector.load %arg10[%c0_59, %c0_60] : memref<128x128xf32, #tpu.memory_space<vmem>>, vector<128x128xf32>
    %c0_61 = arith.constant 0 : index
    %c0_62 = arith.constant 0 : index
    %117 = vector.load %arg11[%c0_61, %c0_62] : memref<1x128xf32, #tpu.memory_space<vmem>>, vector<1x128xf32>
    %c0_63 = arith.constant 0 : index
    %c0_64 = arith.constant 0 : index
    %118 = vector.load %arg12[%c0_63, %c0_64] : memref<1x128xf32, #tpu.memory_space<vmem>>, vector<1x128xf32>
    %cst_65 = arith.constant dense<0.000000e+00> : vector<2x128xf32>
    %119 = vector.multi_reduction <add>, %115, %cst_65 [1] : vector<2x64x128xf32> to vector<2x128xf32>
    %cst_66 = arith.constant 6.400000e+01 : f32
    %120 = vector.broadcast %cst_66 : f32 to vector<2x128xf32>
    %121 = arith.divf %119, %120 : vector<2x128xf32>
    %122 = arith.mulf %115, %115 : vector<2x64x128xf32>
    %cst_67 = arith.constant dense<0.000000e+00> : vector<2x128xf32>
    %123 = vector.multi_reduction <add>, %122, %cst_67 [1] : vector<2x64x128xf32> to vector<2x128xf32>
    %cst_68 = arith.constant 6.400000e+01 : f32
    %124 = vector.broadcast %cst_68 : f32 to vector<2x128xf32>
    %125 = arith.divf %123, %124 : vector<2x128xf32>
    %126 = tpu.concatenate %121, %125 in 0 : vector<2x128xf32>, vector<2x128xf32> -> vector<4x128xf32>
    %cst_69 = arith.constant dense<0.000000e+00> : vector<4x128xf32>
    %127 = tpu.matmul %126, %116, %cst_69 {dimension_numbers = #tpu.dot_dimension_numbers<[1], [0], [0], [1], [0, 0, 1, 1], [], []>} : vector<4x128xf32>, vector<128x128xf32>, vector<4x128xf32> -> vector<4x128xf32>
    %128 = vector.extract_strided_slice %127 {offsets = [0, 0], sizes = [2, 128], strides = [1, 1]} : vector<4x128xf32> to vector<2x128xf32>
    %129 = vector.shape_cast %128 : vector<2x128xf32> to vector<2x1x128xf32>
    %130 = vector.extract_strided_slice %127 {offsets = [2, 0], sizes = [2, 128], strides = [1, 1]} : vector<4x128xf32> to vector<2x128xf32>
    %131 = vector.shape_cast %130 : vector<2x128xf32> to vector<2x1x128xf32>
    %132 = arith.mulf %129, %129 : vector<2x1x128xf32>
    %133 = arith.subf %131, %132 : vector<2x1x128xf32>
    %cst_70 = arith.constant 0.000000e+00 : f32
    %134 = vector.broadcast %cst_70 : f32 to vector<2x1x128xf32>
    %135 = arith.maximumf %133, %134 : vector<2x1x128xf32>
    %cst_71 = arith.constant 9.99999974E-6 : f32
    %136 = vector.broadcast %cst_71 : f32 to vector<2x1x128xf32>
    %137 = arith.addf %135, %136 : vector<2x1x128xf32>
    %138 = math.rsqrt %137 : vector<2x1x128xf32>
    %139 = vector.shape_cast %117 : vector<1x128xf32> to vector<1x1x128xf32>
    %140 = vector.broadcast %139 : vector<1x1x128xf32> to vector<2x1x128xf32>
    %141 = arith.mulf %138, %140 : vector<2x1x128xf32>
    %142 = vector.broadcast %129 : vector<2x1x128xf32> to vector<2x64x128xf32>
    %143 = arith.subf %115, %142 : vector<2x64x128xf32>
    %144 = vector.broadcast %141 : vector<2x1x128xf32> to vector<2x64x128xf32>
    %145 = arith.mulf %143, %144 : vector<2x64x128xf32>
    %146 = vector.shape_cast %118 : vector<1x128xf32> to vector<1x1x128xf32>
    %147 = vector.broadcast %146 : vector<1x1x128xf32> to vector<2x64x128xf32>
    %148 = arith.addf %145, %147 : vector<2x64x128xf32>
    %149 = arith.negf %148 : vector<2x64x128xf32>
    %150 = math.exp %149 : vector<2x64x128xf32>
    %cst_72 = arith.constant 1.000000e+00 : f32
    %151 = vector.broadcast %cst_72 : f32 to vector<2x64x128xf32>
    %152 = arith.addf %151, %150 : vector<2x64x128xf32>
    %153 = arith.divf %151, %152 : vector<2x64x128xf32>
    %154 = arith.mulf %148, %153 : vector<2x64x128xf32>
    %c0_73 = arith.constant 0 : index
    %c0_74 = arith.constant 0 : index
    %155 = vector.load %arg14[%c0_73, %c0_74] : memref<1x128xf32, #tpu.memory_space<vmem>>, vector<1x128xf32>
    %156 = arith.truncf %154 : vector<2x64x128xf32> to vector<2x64x128xbf16>
    %cst_75 = arith.constant 0.000000e+00 : bf16
    %157 = vector.broadcast %cst_75 : bf16 to vector<2x64x128xbf16>
    %c7_i32_76 = arith.constant 7 : i32
    %158 = vector.broadcast %c7_i32_76 : i32 to vector<1x64x1xi32>
    %159 = arith.cmpi eq, %17, %158 : vector<1x64x1xi32>
    %160 = vector.shape_cast %159 : vector<1x64x1xi1> to vector<1x64x1xi1>
    %161 = vector.broadcast %160 : vector<1x64x1xi1> to vector<2x64x128xi1>
    %162 = arith.select %161, %157, %156 : vector<2x64x128xi1>, vector<2x64x128xbf16>
    %c0_i32_77 = arith.constant 0 : i32
    %163 = vector.broadcast %c0_i32_77 : i32 to vector<1x64x1xi32>
    %164 = arith.cmpi eq, %17, %163 : vector<1x64x1xi32>
    %165 = vector.shape_cast %164 : vector<1x64x1xi1> to vector<1x64x1xi1>
    %166 = vector.broadcast %165 : vector<1x64x1xi1> to vector<2x64x128xi1>
    %167 = arith.select %166, %157, %156 : vector<2x64x128xi1>, vector<2x64x128xbf16>
    %cst_78 = arith.constant 0.000000e+00 : bf16
    %168 = vector.broadcast %cst_78 : bf16 to vector<2x9x384xbf16>
    %c0_79 = arith.constant 0 : index
    %c8_80 = arith.constant 8 : index
    %c0_81 = arith.constant 0 : index
    %169 = vector.load %arg19[%c0_79, %c8_80, %c0_81] : memref<2x96x384xbf16, #tpu.memory_space<vmem>>, vector<2x9x384xbf16>
    tpu.vector_store %arg19[%c0_79, %c8_80, %c0_81], %168 {strides = array<i32>} : memref<2x96x384xbf16, #tpu.memory_space<vmem>>, vector<2x9x384xbf16>,
    %c0_82 = arith.constant 0 : index
    %c79_83 = arith.constant 79 : index
    %c0_84 = arith.constant 0 : index
    %170 = vector.load %arg19[%c0_82, %c79_83, %c0_84] : memref<2x96x384xbf16, #tpu.memory_space<vmem>>, vector<2x9x384xbf16>
    tpu.vector_store %arg19[%c0_82, %c79_83, %c0_84], %168 {strides = array<i32>} : memref<2x96x384xbf16, #tpu.memory_space<vmem>>, vector<2x9x384xbf16>,
    %c0_85 = arith.constant 0 : index
    %c17_86 = arith.constant 17 : index
    %c0_87 = arith.constant 0 : index
    %171 = vector.load %arg19[%c0_85, %c17_86, %c0_87] : memref<2x96x384xbf16, #tpu.memory_space<vmem>>, vector<2x64x128xbf16>
    tpu.vector_store %arg19[%c0_85, %c17_86, %c0_87], %162 {strides = array<i32>} : memref<2x96x384xbf16, #tpu.memory_space<vmem>>, vector<2x64x128xbf16>,
    %c0_88 = arith.constant 0 : index
    %c16_89 = arith.constant 16 : index
    %c128_90 = arith.constant 128 : index
    %172 = vector.load %arg19[%c0_88, %c16_89, %c128_90] : memref<2x96x384xbf16, #tpu.memory_space<vmem>>, vector<2x64x128xbf16>
    tpu.vector_store %arg19[%c0_88, %c16_89, %c128_90], %156 {strides = array<i32>} : memref<2x96x384xbf16, #tpu.memory_space<vmem>>, vector<2x64x128xbf16>,
    %c0_91 = arith.constant 0 : index
    %c15_92 = arith.constant 15 : index
    %c256 = arith.constant 256 : index
    %173 = vector.load %arg19[%c0_91, %c15_92, %c256] : memref<2x96x384xbf16, #tpu.memory_space<vmem>>, vector<2x64x128xbf16>
    tpu.vector_store %arg19[%c0_91, %c15_92, %c256], %167 {strides = array<i32>} : memref<2x96x384xbf16, #tpu.memory_space<vmem>>, vector<2x64x128xbf16>,
    %cst_93 = arith.constant 0.000000e+00 : f32
    %174 = vector.broadcast %cst_93 : f32 to vector<128x128xf32>
    %c0_94 = arith.constant 0 : index
    %c8_95 = arith.constant 8 : index
    %c0_96 = arith.constant 0 : index
    %175 = vector.load %arg19[%c0_94, %c8_95, %c0_96] : memref<2x96x384xbf16, #tpu.memory_space<vmem>>, vector<2x64x384xbf16>
    %176 = vector.shape_cast %175 : vector<2x64x384xbf16> to vector<128x384xbf16>
    %c0_97 = arith.constant 0 : index
    %c0_98 = arith.constant 0 : index
    %c0_99 = arith.constant 0 : index
    %177 = vector.load %arg13[%c0_97, %c0_98, %c0_99] : memref<3x384x128xbf16, #tpu.memory_space<vmem>>, vector<1x384x128xbf16>
    %178 = vector.shape_cast %177 : vector<1x384x128xbf16> to vector<384x128xbf16>
    %cst_100 = arith.constant dense<0.000000e+00> : vector<128x128xf32>
    %179 = tpu.matmul %176, %178, %cst_100 {dimension_numbers = #tpu.dot_dimension_numbers<[1], [0], [0], [1], [0, 0, 1, 1], [], []>} : vector<128x384xbf16>, vector<384x128xbf16>, vector<128x128xf32> -> vector<128x128xf32>
    %180 = arith.addf %174, %179 : vector<128x128xf32>
    %c0_101 = arith.constant 0 : index
    %c16_102 = arith.constant 16 : index
    %c0_103 = arith.constant 0 : index
    %181 = vector.load %arg19[%c0_101, %c16_102, %c0_103] : memref<2x96x384xbf16, #tpu.memory_space<vmem>>, vector<2x64x384xbf16>
    %182 = vector.shape_cast %181 : vector<2x64x384xbf16> to vector<128x384xbf16>
    %c1_104 = arith.constant 1 : index
    %c0_105 = arith.constant 0 : index
    %c0_106 = arith.constant 0 : index
    %183 = vector.load %arg13[%c1_104, %c0_105, %c0_106] : memref<3x384x128xbf16, #tpu.memory_space<vmem>>, vector<1x384x128xbf16>
    %184 = vector.shape_cast %183 : vector<1x384x128xbf16> to vector<384x128xbf16>
    %cst_107 = arith.constant dense<0.000000e+00> : vector<128x128xf32>
    %185 = tpu.matmul %182, %184, %cst_107 {dimension_numbers = #tpu.dot_dimension_numbers<[1], [0], [0], [1], [0, 0, 1, 1], [], []>} : vector<128x384xbf16>, vector<384x128xbf16>, vector<128x128xf32> -> vector<128x128xf32>
    %186 = arith.addf %180, %185 : vector<128x128xf32>
    %c0_108 = arith.constant 0 : index
    %c24_109 = arith.constant 24 : index
    %c0_110 = arith.constant 0 : index
    %187 = vector.load %arg19[%c0_108, %c24_109, %c0_110] : memref<2x96x384xbf16, #tpu.memory_space<vmem>>, vector<2x64x384xbf16>
    %188 = vector.shape_cast %187 : vector<2x64x384xbf16> to vector<128x384xbf16>
    %c2_111 = arith.constant 2 : index
    %c0_112 = arith.constant 0 : index
    %c0_113 = arith.constant 0 : index
    %189 = vector.load %arg13[%c2_111, %c0_112, %c0_113] : memref<3x384x128xbf16, #tpu.memory_space<vmem>>, vector<1x384x128xbf16>
    %190 = vector.shape_cast %189 : vector<1x384x128xbf16> to vector<384x128xbf16>
    %cst_114 = arith.constant dense<0.000000e+00> : vector<128x128xf32>
    %191 = tpu.matmul %188, %190, %cst_114 {dimension_numbers = #tpu.dot_dimension_numbers<[1], [0], [0], [1], [0, 0, 1, 1], [], []>} : vector<128x384xbf16>, vector<384x128xbf16>, vector<128x128xf32> -> vector<128x128xf32>
    %192 = arith.addf %186, %191 : vector<128x128xf32>
    %193 = vector.shape_cast %192 : vector<128x128xf32> to vector<2x64x128xf32>
    %194 = vector.shape_cast %155 : vector<1x128xf32> to vector<1x1x128xf32>
    %195 = vector.broadcast %194 : vector<1x1x128xf32> to vector<2x64x128xf32>
    %196 = arith.addf %193, %195 : vector<2x64x128xf32>
    %197 = vector.shape_cast %0 : vector<2x64x64xf32> to vector<128x64xf32>
    %198 = arith.truncf %197 : vector<128x64xf32> to vector<128x64xbf16>
    %c0_115 = arith.constant 0 : index
    %c0_116 = arith.constant 0 : index
    %199 = vector.load %arg15[%c0_115, %c0_116] : memref<64x128xbf16, #tpu.memory_space<vmem>>, vector<64x128xbf16>
    %cst_117 = arith.constant dense<0.000000e+00> : vector<128x128xf32>
    %200 = tpu.matmul %198, %199, %cst_117 {dimension_numbers = #tpu.dot_dimension_numbers<[1], [0], [0], [1], [0, 0, 1, 1], [], []>} : vector<128x64xbf16>, vector<64x128xbf16>, vector<128x128xf32> -> vector<128x128xf32>
    %201 = vector.shape_cast %200 : vector<128x128xf32> to vector<2x64x128xf32>
    %c0_118 = arith.constant 0 : index
    %c0_119 = arith.constant 0 : index
    %202 = vector.load %arg16[%c0_118, %c0_119] : memref<1x128xf32, #tpu.memory_space<vmem>>, vector<1x128xf32>
    %203 = vector.shape_cast %202 : vector<1x128xf32> to vector<1x1x128xf32>
    %204 = vector.broadcast %203 : vector<1x1x128xf32> to vector<2x64x128xf32>
    %205 = arith.addf %201, %204 : vector<2x64x128xf32>
    %206 = arith.addf %196, %205 : vector<2x64x128xf32>
    %c0_120 = arith.constant 0 : index
    %c0_121 = arith.constant 0 : index
    %c0_122 = arith.constant 0 : index
    %207 = vector.load %arg17[%c0_120, %c0_121, %c0_122] : memref<2x64x128xf32, #tpu.memory_space<vmem>>, vector<2x64x128xf32>
    tpu.vector_store %arg17[%c0_120, %c0_121, %c0_122], %206 {strides = array<i32>} : memref<2x64x128xf32, #tpu.memory_space<vmem>>, vector<2x64x128xf32>,
    return
  }
  func.func @transform_0(%arg0: i32) -> (i32, i32, i32) {
    %c0_i32 = arith.constant 0 : i32
    %c0_i32_0 = arith.constant 0 : i32
    %c0_i32_1 = arith.constant 0 : i32
    return %arg0, %c0_i32, %c0_i32_0 : i32, i32, i32
  }
  func.func @transform_1(%arg0: i32) -> (i32, i32, i32) {
    %c0_i32 = arith.constant 0 : i32
    %c0_i32_0 = arith.constant 0 : i32
    %c0_i32_1 = arith.constant 0 : i32
    return %arg0, %c0_i32, %c0_i32_0 : i32, i32, i32
  }
  func.func @transform_2(%arg0: i32) -> (i32, i32) {
    %c0_i32 = arith.constant 0 : i32
    %c0_i32_0 = arith.constant 0 : i32
    %c0_i32_1 = arith.constant 0 : i32
    return %c0_i32, %c0_i32_0 : i32, i32
  }
  func.func @transform_3(%arg0: i32) -> (i32, i32) {
    %c0_i32 = arith.constant 0 : i32
    %c0_i32_0 = arith.constant 0 : i32
    %c0_i32_1 = arith.constant 0 : i32
    return %c0_i32, %c0_i32_0 : i32, i32
  }
  func.func @transform_4(%arg0: i32) -> (i32, i32) {
    %c0_i32 = arith.constant 0 : i32
    %c0_i32_0 = arith.constant 0 : i32
    %c0_i32_1 = arith.constant 0 : i32
    return %c0_i32, %c0_i32_0 : i32, i32
  }
  func.func @transform_5(%arg0: i32) -> (i32, i32, i32) {
    %c0_i32 = arith.constant 0 : i32
    %c0_i32_0 = arith.constant 0 : i32
    %c0_i32_1 = arith.constant 0 : i32
    %c0_i32_2 = arith.constant 0 : i32
    return %c0_i32, %c0_i32_0, %c0_i32_1 : i32, i32, i32
  }
  func.func @transform_6(%arg0: i32) -> (i32, i32) {
    %c0_i32 = arith.constant 0 : i32
    %c0_i32_0 = arith.constant 0 : i32
    %c0_i32_1 = arith.constant 0 : i32
    return %c0_i32, %c0_i32_0 : i32, i32
  }
  func.func @transform_7(%arg0: i32) -> (i32, i32) {
    %c0_i32 = arith.constant 0 : i32
    %c0_i32_0 = arith.constant 0 : i32
    %c0_i32_1 = arith.constant 0 : i32
    return %c0_i32, %c0_i32_0 : i32, i32
  }
  func.func @transform_8(%arg0: i32) -> (i32, i32) {
    %c0_i32 = arith.constant 0 : i32
    %c0_i32_0 = arith.constant 0 : i32
    %c0_i32_1 = arith.constant 0 : i32
    return %c0_i32, %c0_i32_0 : i32, i32
  }
  func.func @transform_9(%arg0: i32) -> (i32, i32) {
    %c0_i32 = arith.constant 0 : i32
    %c0_i32_0 = arith.constant 0 : i32
    %c0_i32_1 = arith.constant 0 : i32
    return %c0_i32, %c0_i32_0 : i32, i32
  }
  func.func @transform_10(%arg0: i32) -> (i32, i32) {
    %c0_i32 = arith.constant 0 : i32
    %c0_i32_0 = arith.constant 0 : i32
    %c0_i32_1 = arith.constant 0 : i32
    return %c0_i32, %c0_i32_0 : i32, i32
  }
  func.func @transform_11(%arg0: i32) -> (i32, i32) {
    %c0_i32 = arith.constant 0 : i32
    %c0_i32_0 = arith.constant 0 : i32
    %c0_i32_1 = arith.constant 0 : i32
    return %c0_i32, %c0_i32_0 : i32, i32
  }
  func.func @transform_12(%arg0: i32) -> (i32, i32, i32) {
    %c0_i32 = arith.constant 0 : i32
    %c0_i32_0 = arith.constant 0 : i32
    %c0_i32_1 = arith.constant 0 : i32
    %c0_i32_2 = arith.constant 0 : i32
    return %c0_i32, %c0_i32_0, %c0_i32_1 : i32, i32, i32
  }
  func.func @transform_13(%arg0: i32) -> (i32, i32) {
    %c0_i32 = arith.constant 0 : i32
    %c0_i32_0 = arith.constant 0 : i32
    %c0_i32_1 = arith.constant 0 : i32
    return %c0_i32, %c0_i32_0 : i32, i32
  }
  func.func @transform_14(%arg0: i32) -> (i32, i32) {
    %c0_i32 = arith.constant 0 : i32
    %c0_i32_0 = arith.constant 0 : i32
    %c0_i32_1 = arith.constant 0 : i32
    return %c0_i32, %c0_i32_0 : i32, i32
  }
  func.func @transform_15(%arg0: i32) -> (i32, i32) {
    %c0_i32 = arith.constant 0 : i32
    %c0_i32_0 = arith.constant 0 : i32
    %c0_i32_1 = arith.constant 0 : i32
    return %c0_i32, %c0_i32_0 : i32, i32
  }
  func.func @transform_16(%arg0: i32) -> (i32, i32, i32) {
    %c0_i32 = arith.constant 0 : i32
    %c0_i32_0 = arith.constant 0 : i32
    %c0_i32_1 = arith.constant 0 : i32
    return %arg0, %c0_i32, %c0_i32_0 : i32, i32, i32
  }
}

</mosaic_0001>

<llo_original>
// kernel: tpu_custom_call.1
$region0: #{tpu_custom_call.1}
  #allocation0 [shape = 'u32[]', space=smem, size = 0x4, offset = 0x4, fixed_abs, tag = 'smem constant byte address 0x4 - core index']
  #allocation1 [shape = 'u32[144,128]{1,0:T(1,128)}', space=vmem, size = 0x12000, scoped, tag = 'internal scratch']
  #allocation2 [shape = 'bf16[2,96,192]{2,1,0:T(8,128)(2,1)}', space=vmem, size = 0x18000, scoped, tag = 'scratch operand']
  #allocation3 [shape = 'bf16[2,96,384]{2,1,0:T(8,128)(2,1)}', space=vmem, size = 0x24000, scoped, tag = 'scratch operand']
  %s0 = inlined_call_operand.hbm [shape: f32[4,64,64], index: 0, kind: input, shape index: {}]
  %s1 = inlined_call_operand.hbm [shape: f32[2,2,192], index: 1, kind: input, shape index: {}]
  %s2 = inlined_call_operand.hbm [shape: f32[64,64], index: 2, kind: input, shape index: {}]
  %s3 = inlined_call_operand.vmem [shape: f32[1,64], index: 3, kind: input, shape index: {}]
  %s4 = inlined_call_operand.vmem [shape: f32[1,64], index: 4, kind: input, shape index: {}]
  %s5 = inlined_call_operand.hbm [shape: bf16[3,192,128], index: 5, kind: input, shape index: {}]
  %s6 = inlined_call_operand.vmem [shape: f32[1,128], index: 6, kind: input, shape index: {}]
  %s7 = inlined_call_operand.hbm [shape: bf16[192,128], index: 7, kind: input, shape index: {}]
  %s8 = inlined_call_operand.vmem [shape: f32[1,128], index: 8, kind: input, shape index: {}]
  %s9 = inlined_call_operand.hbm [shape: f32[128,128], index: 9, kind: input, shape index: {}]
  %s10 = inlined_call_operand.vmem [shape: f32[1,128], index: 10, kind: input, shape index: {}]
  %s11 = inlined_call_operand.vmem [shape: f32[1,128], index: 11, kind: input, shape index: {}]
  %s12 = inlined_call_operand.hbm [shape: bf16[3,384,128], index: 12, kind: input, shape index: {}]
  %s13 = inlined_call_operand.vmem [shape: f32[1,128], index: 13, kind: input, shape index: {}]
  %s14 = inlined_call_operand.hbm [shape: bf16[64,128], index: 14, kind: input, shape index: {}]
  %s15 = inlined_call_operand.vmem [shape: f32[1,128], index: 15, kind: input, shape index: {}]
  %s16 = inlined_call_operand.hbm [shape: f32[4,64,128], index: 16, kind: output, shape index: {}]
  %s17 = sld [smem:[#allocation0]]
  $region129: #{tpu_custom_call.1} parent=0
    _
  %s19 = ssub.s32 1, %s17
  %s20 = scalar_select 0, %s19, %s17
  $region1: #{tpu_custom_call.1} parent=0
    #allocation4 [shape = 'u8[131072]{0}', space=vmem, size = 0x20000, scoped, tag = 'input window, operand 0']
    #allocation5 [shape = 's32[2]{0}', space=sflag, size = 0x8, scoped, tag = 'scoped memory for tpu_custom_call.1']
    #allocation6 [shape = 's32[2]{0}', space=sflag, size = 0x8, scoped, tag = 'scoped memory for tpu_custom_call.1']
    #allocation7 [shape = 'u8[4096]{0}', space=vmem, size = 0x1000, scoped, tag = 'input window, operand 1']
    #allocation8 [shape = 's32[2]{0}', space=sflag, size = 0x8, scoped, tag = 'scoped memory for tpu_custom_call.1']
    #allocation9 [shape = 'u8[32768]{0}', space=vmem, size = 0x8000, scoped, tag = 'input window, operand 2, single buffered']
    #allocation10 [shape = 'u8[147456]{0}', space=vmem, size = 0x24000, scoped, tag = 'input window, operand 5, single buffered']
    #allocation11 [shape = 's32[1]{0}', space=sflag, size = 0x4, scoped, tag = 'scoped memory for tpu_custom_call.1']
    #allocation12 [shape = 'u8[49152]{0}', space=vmem, size = 0xc000, scoped, tag = 'input window, operand 7, single buffered']
    #allocation13 [shape = 'u8[65536]{0}', space=vmem, size = 0x10000, scoped, tag = 'input window, operand 9, single buffered']
    #allocation14 [shape = 's32[1]{0}', space=sflag, size = 0x4, scoped, tag = 'scoped memory for tpu_custom_call.1']
    #allocation15 [shape = 'u8[294912]{0}', space=vmem, size = 0x48000, scoped, tag = 'input window, operand 12, single buffered']
    #allocation16 [shape = 'u8[16384]{0}', space=vmem, size = 0x4000, scoped, tag = 'input window, operand 14, single buffered']
    #allocation17 [shape = 's32[1]{0}', space=sflag, size = 0x4, scoped, tag = 'scoped memory for tpu_custom_call.1']
    #allocation18 [shape = 'u8[131072]{0}', space=vmem, size = 0x20000, scoped, tag = 'output window, operand 0']
    %21 = vsyncpa [#allocation5], 0
    %s22 = scalar_lea.sflag [#allocation5], 1
    %23 = vsyncpa %s22, 0
    %24 = vsyncpa [#allocation8], 0
    %s25 = scalar_lea.sflag [#allocation8], 1
    %26 = vsyncpa %s25, 0
    %27 = vsyncpa [#allocation11], 0
    %28 = vsyncpa [#allocation14], 0
    %29 = vsyncpa [#allocation17], 0
    %30 = vsyncpa [#allocation6], 0
    %s31 = scalar_lea.sflag [#allocation6], 1
    %32 = vsyncpa %s31, 0
    loop: start=0, step=1, limit=4
    $region2: #{tpu_custom_call.1} parent=1 // loop_pre_header
      _
    $region3: #{tpu_custom_call.1} parent=1 // loop_header
      %s34 = sphi 0, %s38
      %p35 = scmp.ge.s32.totalorder %s34, 4
      %s44 = sphi 0, %s46
      %s47 = sphi 0, %s44
      %s48 = sphi 0, %s47
      %s64 = sphi 0, %s48
      %s70 = sphi 0, %s72
      %s73 = sphi 0, %s70
      %s74 = sphi 0, %s73
      %s90 = sphi 0, %s74
      %s94 = sphi 0, %s94
      %s96 = sphi 0, %s94
      %s97 = sphi 0, %s96
      %s111 = sphi 0, %s97
      %s115 = sphi 0, %s115
      %s117 = sphi 0, %s115
      %s118 = sphi 0, %s117
      %s132 = sphi 0, %s118
      %s136 = sphi 0, %s136
      %s138 = sphi 0, %s136
      %s139 = sphi 0, %s138
      %s153 = sphi 0, %s139
      %s157 = sphi 0, %s157
      %s159 = sphi 0, %s157
      %s160 = sphi 0, %s159
      %s174 = sphi 0, %s160
      %s178 = sphi 0, %s178
      %s180 = sphi 0, %s178
      %s181 = sphi 0, %s180
      %s195 = sphi 0, %s181
      %s199 = sphi 0, %s199
      %s201 = sphi 0, %s199
      %s202 = sphi 0, %s201
      %s216 = sphi 0, %s202
      %s220 = sphi 0, %s220
      %s222 = sphi 0, %s220
      %s223 = sphi 0, %s222
      %s237 = sphi 0, %s223
      %s241 = sphi 0, %s241
      %s243 = sphi 0, %s241
      %s244 = sphi 0, %s243
      %s258 = sphi 0, %s244
      %s262 = sphi 0, %s262
      %s264 = sphi 0, %s262
      %s265 = sphi 0, %s264
      %s279 = sphi 0, %s265
      %s283 = sphi 0, %s283
      %s285 = sphi 0, %s283
      %s286 = sphi 0, %s285
      %s300 = sphi 0, %s286
      %s304 = sphi 0, %s304
      %s306 = sphi 0, %s304
      %s307 = sphi 0, %s306
      %s321 = sphi 0, %s307
      %s325 = sphi 0, %s325
      %s327 = sphi 0, %s325
      %s328 = sphi 0, %s327
      %s342 = sphi 0, %s328
      %s346 = sphi 0, %s346
      %s348 = sphi 0, %s346
      %s349 = sphi 0, %s348
      %s363 = sphi 0, %s349
      %s367 = sphi 0, %s367
      %s369 = sphi 0, %s367
      %s370 = sphi 0, %s369
      %s384 = sphi 0, %s370
      %s390 = sphi 0, %s392
      %s393 = sphi 0, %s390
      %s394 = sphi 0, %s393
      %s410 = sphi 0, %s394
    $region4: #{tpu_custom_call.1} parent=1 // loop_header_branch
      %37 = sbr.rel (%p35) target = $region8
    $region5: #{tpu_custom_call.1} parent=1 // loop_body
      %s39 = ssub.s32 %s34, 1
      %s40 = ssub.s32 %s34, 2
      %s41 = sadd.s32 %s34, 1
      %s42 = ssub.s32 %s34, %s41
      %p43 = scmp.eq.s32.totalorder %s42, 0
      %s45 = sadd.s32 %s44, 1
      %s46 = scalar_select %p43, %s44, %s45
      %p49 = pneg %p43
      %p50 = scmp.eq.s32.totalorder %s34, 1
      %p51 = por %p49, %p50
      %p52 = scmp.ne.s32.totalorder %s44, %s47
      %p53 = scmp.eq.s32.totalorder %s34, 0
      %p54 = por %p52, %p53
      %p55 = scmp.ne.s32.totalorder %s44, %s47
      %p56 = scmp.eq.s32.totalorder %s39, 1
      %p57 = por %p55, %p56
      %p58 = scmp.ne.s32.totalorder %s47, %s48
      %p59 = scmp.eq.s32.totalorder %s39, 0
      %p60 = por %p58, %p59
      %p61 = scmp.ne.s32.totalorder %s47, %s48
      %p62 = scmp.eq.s32.totalorder %s40, 1
      %p63 = por %p61, %p62
      %p65 = scmp.ne.s32.totalorder %s48, %s64
      %p66 = scmp.eq.s32.totalorder %s40, 0
      %p67 = por %p65, %p66
      %s68 = ssub.s32 %s34, %s41
      %p69 = scmp.eq.s32.totalorder %s68, 0
      %s71 = sadd.s32 %s70, 1
      %s72 = scalar_select %p69, %s70, %s71
      %p75 = pneg %p69
      %p76 = scmp.eq.s32.totalorder %s34, 1
      %p77 = por %p75, %p76
      %p78 = scmp.ne.s32.totalorder %s70, %s73
      %p79 = scmp.eq.s32.totalorder %s34, 0
      %p80 = por %p78, %p79
      %p81 = scmp.ne.s32.totalorder %s70, %s73
      %p82 = scmp.eq.s32.totalorder %s39, 1
      %p83 = por %p81, %p82
      %p84 = scmp.ne.s32.totalorder %s73, %s74
      %p85 = scmp.eq.s32.totalorder %s39, 0
      %p86 = por %p84, %p85
      %p87 = scmp.ne.s32.totalorder %s73, %s74
      %p88 = scmp.eq.s32.totalorder %s40, 1
      %p89 = por %p87, %p88
      %p91 = scmp.ne.s32.totalorder %s74, %s90
      %p92 = scmp.eq.s32.totalorder %s40, 0
      %p93 = por %p91, %p92
      %s95 = sadd.s32 %s94, 1
      %p98 = scmp.eq.s32.totalorder %s34, 1
      %p99 = scmp.ne.s32.totalorder %s94, %s96
      %p100 = scmp.eq.s32.totalorder %s34, 0
      %p101 = por %p99, %p100
      %p102 = scmp.ne.s32.totalorder %s94, %s96
      %p103 = scmp.eq.s32.totalorder %s39, 1
      %p104 = por %p102, %p103
      %p105 = scmp.ne.s32.totalorder %s96, %s97
      %p106 = scmp.eq.s32.totalorder %s39, 0
      %p107 = por %p105, %p106
      %p108 = scmp.ne.s32.totalorder %s96, %s97
      %p109 = scmp.eq.s32.totalorder %s40, 1
      %p110 = por %p108, %p109
      %p112 = scmp.ne.s32.totalorder %s97, %s111
      %p113 = scmp.eq.s32.totalorder %s40, 0
      %p114 = por %p112, %p113
      %s116 = sadd.s32 %s115, 1
      %p119 = scmp.eq.s32.totalorder %s34, 1
      %p120 = scmp.ne.s32.totalorder %s115, %s117
      %p121 = scmp.eq.s32.totalorder %s34, 0
      %p122 = por %p120, %p121
      %p123 = scmp.ne.s32.totalorder %s115, %s117
      %p124 = scmp.eq.s32.totalorder %s39, 1
      %p125 = por %p123, %p124
      %p126 = scmp.ne.s32.totalorder %s117, %s118
      %p127 = scmp.eq.s32.totalorder %s39, 0
      %p128 = por %p126, %p127
      %p129 = scmp.ne.s32.totalorder %s117, %s118
      %p130 = scmp.eq.s32.totalorder %s40, 1
      %p131 = por %p129, %p130
      %p133 = scmp.ne.s32.totalorder %s118, %s132
      %p134 = scmp.eq.s32.totalorder %s40, 0
      %p135 = por %p133, %p134
      %s137 = sadd.s32 %s136, 1
      %p140 = scmp.eq.s32.totalorder %s34, 1
      %p141 = scmp.ne.s32.totalorder %s136, %s138
      %p142 = scmp.eq.s32.totalorder %s34, 0
      %p143 = por %p141, %p142
      %p144 = scmp.ne.s32.totalorder %s136, %s138
      %p145 = scmp.eq.s32.totalorder %s39, 1
      %p146 = por %p144, %p145
      %p147 = scmp.ne.s32.totalorder %s138, %s139
      %p148 = scmp.eq.s32.totalorder %s39, 0
      %p149 = por %p147, %p148
      %p150 = scmp.ne.s32.totalorder %s138, %s139
      %p151 = scmp.eq.s32.totalorder %s40, 1
      %p152 = por %p150, %p151
      %p154 = scmp.ne.s32.totalorder %s139, %s153
      %p155 = scmp.eq.s32.totalorder %s40, 0
      %p156 = por %p154, %p155
      %s158 = sadd.s32 %s157, 1
      %p161 = scmp.eq.s32.totalorder %s34, 1
      %p162 = scmp.ne.s32.totalorder %s157, %s159
      %p163 = scmp.eq.s32.totalorder %s34, 0
      %p164 = por %p162, %p163
      %p165 = scmp.ne.s32.totalorder %s157, %s159
      %p166 = scmp.eq.s32.totalorder %s39, 1
      %p167 = por %p165, %p166
      %p168 = scmp.ne.s32.totalorder %s159, %s160
      %p169 = scmp.eq.s32.totalorder %s39, 0
      %p170 = por %p168, %p169
      %p171 = scmp.ne.s32.totalorder %s159, %s160
      %p172 = scmp.eq.s32.totalorder %s40, 1
      %p173 = por %p171, %p172
      %p175 = scmp.ne.s32.totalorder %s160, %s174
      %p176 = scmp.eq.s32.totalorder %s40, 0
      %p177 = por %p175, %p176
      %s179 = sadd.s32 %s178, 1
      %p182 = scmp.eq.s32.totalorder %s34, 1
      %p183 = scmp.ne.s32.totalorder %s178, %s180
      %p184 = scmp.eq.s32.totalorder %s34, 0
      %p185 = por %p183, %p184
      %p186 = scmp.ne.s32.totalorder %s178, %s180
      %p187 = scmp.eq.s32.totalorder %s39, 1
      %p188 = por %p186, %p187
      %p189 = scmp.ne.s32.totalorder %s180, %s181
      %p190 = scmp.eq.s32.totalorder %s39, 0
      %p191 = por %p189, %p190
      %p192 = scmp.ne.s32.totalorder %s180, %s181
      %p193 = scmp.eq.s32.totalorder %s40, 1
      %p194 = por %p192, %p193
      %p196 = scmp.ne.s32.totalorder %s181, %s195
      %p197 = scmp.eq.s32.totalorder %s40, 0
      %p198 = por %p196, %p197
      %s200 = sadd.s32 %s199, 1
      %p203 = scmp.eq.s32.totalorder %s34, 1
      %p204 = scmp.ne.s32.totalorder %s199, %s201
      %p205 = scmp.eq.s32.totalorder %s34, 0
      %p206 = por %p204, %p205
      %p207 = scmp.ne.s32.totalorder %s199, %s201
      %p208 = scmp.eq.s32.totalorder %s39, 1
      %p209 = por %p207, %p208
      %p210 = scmp.ne.s32.totalorder %s201, %s202
      %p211 = scmp.eq.s32.totalorder %s39, 0
      %p212 = por %p210, %p211
      %p213 = scmp.ne.s32.totalorder %s201, %s202
      %p214 = scmp.eq.s32.totalorder %s40, 1
      %p215 = por %p213, %p214
      %p217 = scmp.ne.s32.totalorder %s202, %s216
      %p218 = scmp.eq.s32.totalorder %s40, 0
      %p219 = por %p217, %p218
      %s221 = sadd.s32 %s220, 1
      %p224 = scmp.eq.s32.totalorder %s34, 1
      %p225 = scmp.ne.s32.totalorder %s220, %s222
      %p226 = scmp.eq.s32.totalorder %s34, 0
      %p227 = por %p225, %p226
      %p228 = scmp.ne.s32.totalorder %s220, %s222
      %p229 = scmp.eq.s32.totalorder %s39, 1
      %p230 = por %p228, %p229
      %p231 = scmp.ne.s32.totalorder %s222, %s223
      %p232 = scmp.eq.s32.totalorder %s39, 0
      %p233 = por %p231, %p232
      %p234 = scmp.ne.s32.totalorder %s222, %s223
      %p235 = scmp.eq.s32.totalorder %s40, 1
      %p236 = por %p234, %p235
      %p238 = scmp.ne.s32.totalorder %s223, %s237
      %p239 = scmp.eq.s32.totalorder %s40, 0
      %p240 = por %p238, %p239
      %s242 = sadd.s32 %s241, 1
      %p245 = scmp.eq.s32.totalorder %s34, 1
      %p246 = scmp.ne.s32.totalorder %s241, %s243
      %p247 = scmp.eq.s32.totalorder %s34, 0
      %p248 = por %p246, %p247
      %p249 = scmp.ne.s32.totalorder %s241, %s243
      %p250 = scmp.eq.s32.totalorder %s39, 1
      %p251 = por %p249, %p250
      %p252 = scmp.ne.s32.totalorder %s243, %s244
      %p253 = scmp.eq.s32.totalorder %s39, 0
      %p254 = por %p252, %p253
      %p255 = scmp.ne.s32.totalorder %s243, %s244
      %p256 = scmp.eq.s32.totalorder %s40, 1
      %p257 = por %p255, %p256
      %p259 = scmp.ne.s32.totalorder %s244, %s258
      %p260 = scmp.eq.s32.totalorder %s40, 0
      %p261 = por %p259, %p260
      %s263 = sadd.s32 %s262, 1
      %p266 = scmp.eq.s32.totalorder %s34, 1
      %p267 = scmp.ne.s32.totalorder %s262, %s264
      %p268 = scmp.eq.s32.totalorder %s34, 0
      %p269 = por %p267, %p268
      %p270 = scmp.ne.s32.totalorder %s262, %s264
      %p271 = scmp.eq.s32.totalorder %s39, 1
      %p272 = por %p270, %p271
      %p273 = scmp.ne.s32.totalorder %s264, %s265
      %p274 = scmp.eq.s32.totalorder %s39, 0
      %p275 = por %p273, %p274
      %p276 = scmp.ne.s32.totalorder %s264, %s265
      %p277 = scmp.eq.s32.totalorder %s40, 1
      %p278 = por %p276, %p277
      %p280 = scmp.ne.s32.totalorder %s265, %s279
      %p281 = scmp.eq.s32.totalorder %s40, 0
      %p282 = por %p280, %p281
      %s284 = sadd.s32 %s283, 1
      %p287 = scmp.eq.s32.totalorder %s34, 1
      %p288 = scmp.ne.s32.totalorder %s283, %s285
      %p289 = scmp.eq.s32.totalorder %s34, 0
      %p290 = por %p288, %p289
      %p291 = scmp.ne.s32.totalorder %s283, %s285
      %p292 = scmp.eq.s32.totalorder %s39, 1
      %p293 = por %p291, %p292
      %p294 = scmp.ne.s32.totalorder %s285, %s286
      %p295 = scmp.eq.s32.totalorder %s39, 0
      %p296 = por %p294, %p295
      %p297 = scmp.ne.s32.totalorder %s285, %s286
      %p298 = scmp.eq.s32.totalorder %s40, 1
      %p299 = por %p297, %p298
      %p301 = scmp.ne.s32.totalorder %s286, %s300
      %p302 = scmp.eq.s32.totalorder %s40, 0
      %p303 = por %p301, %p302
      %s305 = sadd.s32 %s304, 1
      %p308 = scmp.eq.s32.totalorder %s34, 1
      %p309 = scmp.ne.s32.totalorder %s304, %s306
      %p310 = scmp.eq.s32.totalorder %s34, 0
      %p311 = por %p309, %p310
      %p312 = scmp.ne.s32.totalorder %s304, %s306
      %p313 = scmp.eq.s32.totalorder %s39, 1
      %p314 = por %p312, %p313
      %p315 = scmp.ne.s32.totalorder %s306, %s307
      %p316 = scmp.eq.s32.totalorder %s39, 0
      %p317 = por %p315, %p316
      %p318 = scmp.ne.s32.totalorder %s306, %s307
      %p319 = scmp.eq.s32.totalorder %s40, 1
      %p320 = por %p318, %p319
      %p322 = scmp.ne.s32.totalorder %s307, %s321
      %p323 = scmp.eq.s32.totalorder %s40, 0
      %p324 = por %p322, %p323
      %s326 = sadd.s32 %s325, 1
      %p329 = scmp.eq.s32.totalorder %s34, 1
      %p330 = scmp.ne.s32.totalorder %s325, %s327
      %p331 = scmp.eq.s32.totalorder %s34, 0
      %p332 = por %p330, %p331
      %p333 = scmp.ne.s32.totalorder %s325, %s327
      %p334 = scmp.eq.s32.totalorder %s39, 1
      %p335 = por %p333, %p334
      %p336 = scmp.ne.s32.totalorder %s327, %s328
      %p337 = scmp.eq.s32.totalorder %s39, 0
      %p338 = por %p336, %p337
      %p339 = scmp.ne.s32.totalorder %s327, %s328
      %p340 = scmp.eq.s32.totalorder %s40, 1
      %p341 = por %p339, %p340
      %p343 = scmp.ne.s32.totalorder %s328, %s342
      %p344 = scmp.eq.s32.totalorder %s40, 0
      %p345 = por %p343, %p344
      %s347 = sadd.s32 %s346, 1
      %p350 = scmp.eq.s32.totalorder %s34, 1
      %p351 = scmp.ne.s32.totalorder %s346, %s348
      %p352 = scmp.eq.s32.totalorder %s34, 0
      %p353 = por %p351, %p352
      %p354 = scmp.ne.s32.totalorder %s346, %s348
      %p355 = scmp.eq.s32.totalorder %s39, 1
      %p356 = por %p354, %p355
      %p357 = scmp.ne.s32.totalorder %s348, %s349
      %p358 = scmp.eq.s32.totalorder %s39, 0
      %p359 = por %p357, %p358
      %p360 = scmp.ne.s32.totalorder %s348, %s349
      %p361 = scmp.eq.s32.totalorder %s40, 1
      %p362 = por %p360, %p361
      %p364 = scmp.ne.s32.totalorder %s349, %s363
      %p365 = scmp.eq.s32.totalorder %s40, 0
      %p366 = por %p364, %p365
      %s368 = sadd.s32 %s367, 1
      %p371 = scmp.eq.s32.totalorder %s34, 1
      %p372 = scmp.ne.s32.totalorder %s367, %s369
      %p373 = scmp.eq.s32.totalorder %s34, 0
      %p374 = por %p372, %p373
      %p375 = scmp.ne.s32.totalorder %s367, %s369
      %p376 = scmp.eq.s32.totalorder %s39, 1
      %p377 = por %p375, %p376
      %p378 = scmp.ne.s32.totalorder %s369, %s370
      %p379 = scmp.eq.s32.totalorder %s39, 0
      %p380 = por %p378, %p379
      %p381 = scmp.ne.s32.totalorder %s369, %s370
      %p382 = scmp.eq.s32.totalorder %s40, 1
      %p383 = por %p381, %p382
      %p385 = scmp.ne.s32.totalorder %s370, %s384
      %p386 = scmp.eq.s32.totalorder %s40, 0
      %p387 = por %p385, %p386
      %s388 = ssub.s32 %s34, %s41
      %p389 = scmp.eq.s32.totalorder %s388, 0
      %s391 = sadd.s32 %s390, 1
      %s392 = scalar_select %p389, %s390, %s391
      %p395 = pneg %p389
      %p396 = scmp.eq.s32.totalorder %s34, 1
      %p397 = por %p395, %p396
      %p398 = scmp.ne.s32.totalorder %s390, %s393
      %p399 = scmp.eq.s32.totalorder %s34, 0
      %p400 = por %p398, %p399
      %p401 = scmp.ne.s32.totalorder %s390, %s393
      %p402 = scmp.eq.s32.totalorder %s39, 1
      %p403 = por %p401, %p402
      %p404 = scmp.ne.s32.totalorder %s393, %s394
      %p405 = scmp.eq.s32.totalorder %s39, 0
      %p406 = por %p404, %p405
      %p407 = scmp.ne.s32.totalorder %s393, %s394
      %p408 = scmp.eq.s32.totalorder %s40, 1
      %p409 = por %p407, %p408
      %p411 = scmp.ne.s32.totalorder %s394, %s410
      %p412 = scmp.eq.s32.totalorder %s40, 0
      %p413 = por %p411, %p412
      %p414 = scmp.le.s32.totalorder 1, %s34
      %p415 = scmp.lt.s32.totalorder %s34, 3
      %p416 = pnand %p414, %p415
      %p417 = pneg %p416
      // Predicated region
      $region9: #{tpu_custom_call.1} parent=5 // pred_check
        _
      $region10: #{tpu_custom_call.1} parent=5 // pred_check_branch
        %419 = sbr.rel (%p416) target = $region12
      $region11: #{tpu_custom_call.1} parent=5 // pred_region
        %s420 = ssub.s32 %s34, 1
        // Predicated region
        $region13: #{tpu_custom_call.1} parent=11 // pred_check
          %p421 = pneg %p107
        $region14: #{tpu_custom_call.1} parent=11 // pred_check_branch
          %423 = sbr.rel (%p421) target = $region16
        $region15: #{tpu_custom_call.1} parent=11 // pred_region
          %s425 = ssub.s32 1024, 1024
          %426 = vsyncadd [#allocation8], %s425
          %s427 = sshll.u32 [#allocation9], 4
          %s428 = int_to_ptr.vmem [resolvable:$true] %s427
          %433 = dma.hbm_to_vmem [thread:$0]  %s2, 1024, %s428, [#allocation8], 128, 128, 8
        $region16: #{tpu_custom_call.1} parent=11 // pred_fallthru
          _
        // Predicated region
        $region17: #{tpu_custom_call.1} parent=11 // pred_check
          %p434 = pneg %p128
        $region18: #{tpu_custom_call.1} parent=11 // pred_check_branch
          %436 = sbr.rel (%p434) target = $region20
        $region19: #{tpu_custom_call.1} parent=11 // pred_region
          _
        $region20: #{tpu_custom_call.1} parent=11 // pred_fallthru
          _
        // Predicated region
        $region21: #{tpu_custom_call.1} parent=11 // pred_check
          %p437 = pneg %p149
        $region22: #{tpu_custom_call.1} parent=11 // pred_check_branch
          %439 = sbr.rel (%p437) target = $region24
        $region23: #{tpu_custom_call.1} parent=11 // pred_region
          _
        $region24: #{tpu_custom_call.1} parent=11 // pred_fallthru
          _
        // Predicated region
        $region25: #{tpu_custom_call.1} parent=11 // pred_check
          %p440 = pneg %p170
        $region26: #{tpu_custom_call.1} parent=11 // pred_check_branch
          %442 = sbr.rel (%p440) target = $region28
        $region27: #{tpu_custom_call.1} parent=11 // pred_region
          %s444 = ssub.s32 4608, 4608
          %445 = vsyncadd [#allocation11], %s444
          %s446 = sshll.u32 [#allocation10], 4
          %s447 = int_to_ptr.vmem [resolvable:$true] %s446
          %452 = dma.hbm_to_vmem [thread:$0]  %s5, 4608, %s447, [#allocation11], 64, 64, 4
        $region28: #{tpu_custom_call.1} parent=11 // pred_fallthru
          _
        // Predicated region
        $region29: #{tpu_custom_call.1} parent=11 // pred_check
          %p453 = pneg %p191
        $region30: #{tpu_custom_call.1} parent=11 // pred_check_branch
          %455 = sbr.rel (%p453) target = $region32
        $region31: #{tpu_custom_call.1} parent=11 // pred_region
          _
        $region32: #{tpu_custom_call.1} parent=11 // pred_fallthru
          _
        // Predicated region
        $region33: #{tpu_custom_call.1} parent=11 // pred_check
          %p456 = pneg %p212
        $region34: #{tpu_custom_call.1} parent=11 // pred_check_branch
          %458 = sbr.rel (%p456) target = $region36
        $region35: #{tpu_custom_call.1} parent=11 // pred_region
          %s460 = ssub.s32 1536, 1536
          %461 = vsyncadd [#allocation11], %s460
          %s462 = sshll.u32 [#allocation12], 4
          %s463 = int_to_ptr.vmem [resolvable:$true] %s462
          %468 = dma.hbm_to_vmem [thread:$0]  %s7, 1536, %s463, [#allocation11], 64, 64, 4
        $region36: #{tpu_custom_call.1} parent=11 // pred_fallthru
          _
        // Predicated region
        $region37: #{tpu_custom_call.1} parent=11 // pred_check
          %p469 = pneg %p233
        $region38: #{tpu_custom_call.1} parent=11 // pred_check_branch
          %471 = sbr.rel (%p469) target = $region40
        $region39: #{tpu_custom_call.1} parent=11 // pred_region
          _
        $region40: #{tpu_custom_call.1} parent=11 // pred_fallthru
          _
        // Predicated region
        $region41: #{tpu_custom_call.1} parent=11 // pred_check
          %p472 = pneg %p254
        $region42: #{tpu_custom_call.1} parent=11 // pred_check_branch
          %474 = sbr.rel (%p472) target = $region44
        $region43: #{tpu_custom_call.1} parent=11 // pred_region
          %s476 = ssub.s32 2048, 2048
          %477 = vsyncadd [#allocation14], %s476
          %s478 = sshll.u32 [#allocation13], 4
          %s479 = int_to_ptr.vmem [resolvable:$true] %s478
          %484 = dma.hbm_to_vmem [thread:$0]  %s9, 2048, %s479, [#allocation14], 128, 128, 8
        $region44: #{tpu_custom_call.1} parent=11 // pred_fallthru
          _
        // Predicated region
        $region45: #{tpu_custom_call.1} parent=11 // pred_check
          %p485 = pneg %p275
        $region46: #{tpu_custom_call.1} parent=11 // pred_check_branch
          %487 = sbr.rel (%p485) target = $region48
        $region47: #{tpu_custom_call.1} parent=11 // pred_region
          _
        $region48: #{tpu_custom_call.1} parent=11 // pred_fallthru
          _
        // Predicated region
        $region49: #{tpu_custom_call.1} parent=11 // pred_check
          %p488 = pneg %p296
        $region50: #{tpu_custom_call.1} parent=11 // pred_check_branch
          %490 = sbr.rel (%p488) target = $region52
        $region51: #{tpu_custom_call.1} parent=11 // pred_region
          _
        $region52: #{tpu_custom_call.1} parent=11 // pred_fallthru
          _
        // Predicated region
        $region53: #{tpu_custom_call.1} parent=11 // pred_check
          %p491 = pneg %p317
        $region54: #{tpu_custom_call.1} parent=11 // pred_check_branch
          %493 = sbr.rel (%p491) target = $region56
        $region55: #{tpu_custom_call.1} parent=11 // pred_region
          %s495 = ssub.s32 9216, 9216
          %496 = vsyncadd [#allocation14], %s495
          %s497 = sshll.u32 [#allocation15], 4
          %s498 = int_to_ptr.vmem [resolvable:$true] %s497
          %503 = dma.hbm_to_vmem [thread:$0]  %s12, 9216, %s498, [#allocation14], 64, 64, 4
        $region56: #{tpu_custom_call.1} parent=11 // pred_fallthru
          _
        // Predicated region
        $region57: #{tpu_custom_call.1} parent=11 // pred_check
          %p504 = pneg %p338
        $region58: #{tpu_custom_call.1} parent=11 // pred_check_branch
          %506 = sbr.rel (%p504) target = $region60
        $region59: #{tpu_custom_call.1} parent=11 // pred_region
          _
        $region60: #{tpu_custom_call.1} parent=11 // pred_fallthru
          _
        // Predicated region
        $region61: #{tpu_custom_call.1} parent=11 // pred_check
          %p507 = pneg %p359
        $region62: #{tpu_custom_call.1} parent=11 // pred_check_branch
          %509 = sbr.rel (%p507) target = $region64
        $region63: #{tpu_custom_call.1} parent=11 // pred_region
          %s511 = ssub.s32 512, 512
          %512 = vsyncadd [#allocation17], %s511
          %s513 = sshll.u32 [#allocation16], 4
          %s514 = int_to_ptr.vmem [resolvable:$true] %s513
          %519 = dma.hbm_to_vmem [thread:$0]  %s14, 512, %s514, [#allocation17], 64, 64, 4
        $region64: #{tpu_custom_call.1} parent=11 // pred_fallthru
          _
        // Predicated region
        $region65: #{tpu_custom_call.1} parent=11 // pred_check
          %p520 = pneg %p380
        $region66: #{tpu_custom_call.1} parent=11 // pred_check_branch
          %522 = sbr.rel (%p520) target = $region68
        $region67: #{tpu_custom_call.1} parent=11 // pred_region
          _
        $region68: #{tpu_custom_call.1} parent=11 // pred_fallthru
          _
      $region12: #{tpu_custom_call.1} parent=5 // pred_fallthru
        _
      %p523 = scmp.lt.s32.totalorder %s34, 2
      // Predicated region
      $region69: #{tpu_custom_call.1} parent=5 // pred_check
        %p524 = pneg %p523
      $region70: #{tpu_custom_call.1} parent=5 // pred_check_branch
        %526 = sbr.rel (%p524) target = $region72
      $region71: #{tpu_custom_call.1} parent=5 // pred_region
        // Predicated region
        $region73: #{tpu_custom_call.1} parent=71 // pred_check
          %p527 = pneg %p54
        $region74: #{tpu_custom_call.1} parent=71 // pred_check_branch
          %529 = sbr.rel (%p527) target = $region76
        $region75: #{tpu_custom_call.1} parent=71 // pred_region
          %s530 = sand.u32 %s44, 1
          %s531 = scalar_lea.sflag [#allocation5], %s530
          %s532 = sand.u32 %s44, 1
          %s533 = smul.addr %s532, 128
          %s534 = scalar_lea.vmem [#allocation4], %s533
          %s535 = smul.u32 2, %s34
          %s537 = ssub.s32 2048, 2048
          %538 = vsyncadd %s531, %s537
          %s539 = smul.addr %s535, 8
          %s540 = smul.addr %s539, 128
          %s541 = scalar_lea.hbm %s0, %s540
          %s542 = sshll.u32 %s534, 4
          %s543 = int_to_ptr.vmem [resolvable:$true] %s542
          %548 = dma.hbm_to_vmem [thread:$0]  %s541, 2048, %s543, %s531, 128, 128, 8
        $region76: #{tpu_custom_call.1} parent=71 // pred_fallthru
          _
        // Predicated region
        $region77: #{tpu_custom_call.1} parent=71 // pred_check
          %p549 = pneg %p80
        $region78: #{tpu_custom_call.1} parent=71 // pred_check_branch
          %551 = sbr.rel (%p549) target = $region80
        $region79: #{tpu_custom_call.1} parent=71 // pred_region
          %s552 = sand.u32 %s34, 1
          %s553 = scalar_lea.sflag [#allocation8], %s552
          %s554 = sand.u32 %s70, 1
          %s555 = smul.addr %s554, 4
          %s556 = scalar_lea.vmem [#allocation7], %s555
          %s558 = ssub.s32 64, 64
          %559 = vsyncadd %s553, %s558
          %s560 = smul.addr %s34, 2
          %s561 = smul.addr %s560, 32
          %s562 = scalar_lea.hbm %s1, %s561
          %s564 = sshll.u32 %s556, 4
          %s565 = int_to_ptr.vmem [resolvable:$true] %s564
          %567 = dma.hbm_to_vmem [thread:$0]  %s562, 64, %s565, %s553
        $region80: #{tpu_custom_call.1} parent=71 // pred_fallthru
          _
      $region72: #{tpu_custom_call.1} parent=5 // pred_fallthru
        _
      %p568 = scmp.le.s32.totalorder 1, %s34
      %p569 = scmp.lt.s32.totalorder %s34, 3
      %p570 = pnand %p568, %p569
      %p571 = pneg %p570
      // Predicated region
      $region81: #{tpu_custom_call.1} parent=5 // pred_check
        _
      $region82: #{tpu_custom_call.1} parent=5 // pred_check_branch
        %573 = sbr.rel (%p570) target = $region84
      $region83: #{tpu_custom_call.1} parent=5 // pred_region
        %s574 = ssub.s32 %s34, 1
        %s575 = sand.u32 %s47, 1
        %s576 = scalar_lea.sflag [#allocation5], %s575
        %s577 = sand.u32 %s47, 1
        %s578 = smul.addr %s577, 128
        %s579 = scalar_lea.vmem [#allocation4], %s578
        // Predicated region
        $region85: #{tpu_custom_call.1} parent=83 // pred_check
          %p580 = pneg %p60
        $region86: #{tpu_custom_call.1} parent=83 // pred_check_branch
          %582 = sbr.rel (%p580) target = $region88
        $region87: #{tpu_custom_call.1} parent=83 // pred_region
          %583 = dma.done %s576, 2048
        $region88: #{tpu_custom_call.1} parent=83 // pred_fallthru
          _
        %s584 = sand.u32 %s39, 1
        %s585 = scalar_lea.sflag [#allocation8], %s584
        %s586 = sand.u32 %s73, 1
        %s587 = smul.addr %s586, 4
        %s588 = scalar_lea.vmem [#allocation7], %s587
        // Predicated region
        $region89: #{tpu_custom_call.1} parent=83 // pred_check
          %p589 = pneg %p86
        $region90: #{tpu_custom_call.1} parent=83 // pred_check_branch
          %591 = sbr.rel (%p589) target = $region92
        $region91: #{tpu_custom_call.1} parent=83 // pred_region
          %592 = dma.done %s585, 64
        $region92: #{tpu_custom_call.1} parent=83 // pred_fallthru
          _
        // Predicated region
        $region93: #{tpu_custom_call.1} parent=83 // pred_check
          %p593 = pneg %p107
        $region94: #{tpu_custom_call.1} parent=83 // pred_check_branch
          %595 = sbr.rel (%p593) target = $region96
        $region95: #{tpu_custom_call.1} parent=83 // pred_region
          %596 = dma.done [#allocation8], 1024
        $region96: #{tpu_custom_call.1} parent=83 // pred_fallthru
          _
        // Predicated region
        $region97: #{tpu_custom_call.1} parent=83 // pred_check
          %p597 = pneg %p170
        $region98: #{tpu_custom_call.1} parent=83 // pred_check_branch
          %599 = sbr.rel (%p597) target = $region100
        $region99: #{tpu_custom_call.1} parent=83 // pred_region
          %600 = dma.done [#allocation11], 4608
        $region100: #{tpu_custom_call.1} parent=83 // pred_fallthru
          _
        // Predicated region
        $region101: #{tpu_custom_call.1} parent=83 // pred_check
          %p601 = pneg %p212
        $region102: #{tpu_custom_call.1} parent=83 // pred_check_branch
          %603 = sbr.rel (%p601) target = $region104
        $region103: #{tpu_custom_call.1} parent=83 // pred_region
          %604 = dma.done [#allocation11], 1536
        $region104: #{tpu_custom_call.1} parent=83 // pred_fallthru
          _
        // Predicated region
        $region105: #{tpu_custom_call.1} parent=83 // pred_check
          %p605 = pneg %p254
        $region106: #{tpu_custom_call.1} parent=83 // pred_check_branch
          %607 = sbr.rel (%p605) target = $region108
        $region107: #{tpu_custom_call.1} parent=83 // pred_region
          %608 = dma.done [#allocation14], 2048
        $region108: #{tpu_custom_call.1} parent=83 // pred_fallthru
          _
        // Predicated region
        $region109: #{tpu_custom_call.1} parent=83 // pred_check
          %p609 = pneg %p317
        $region110: #{tpu_custom_call.1} parent=83 // pred_check_branch
          %611 = sbr.rel (%p609) target = $region112
        $region111: #{tpu_custom_call.1} parent=83 // pred_region
          %612 = dma.done [#allocation14], 9216
        $region112: #{tpu_custom_call.1} parent=83 // pred_fallthru
          _
        // Predicated region
        $region113: #{tpu_custom_call.1} parent=83 // pred_check
          %p613 = pneg %p359
        $region114: #{tpu_custom_call.1} parent=83 // pred_check_branch
          %615 = sbr.rel (%p613) target = $region116
        $region115: #{tpu_custom_call.1} parent=83 // pred_region
          %616 = dma.done [#allocation17], 512
        $region116: #{tpu_custom_call.1} parent=83 // pred_fallthru
          _
        %s617 = sand.u32 %s47, 1
        %s618 = scalar_lea.sflag [#allocation5], %s617
        %s619 = sand.u32 %s47, 1
        %s620 = smul.addr %s619, 128
        %s621 = scalar_lea.vmem [#allocation4], %s620
        %p622 = pneg %p60
        %p623 = pneg %p57
        %s624 = sand.u32 %s39, 1
        %s625 = scalar_lea.sflag [#allocation8], %s624
        %s626 = sand.u32 %s73, 1
        %s627 = smul.addr %s626, 4
        %s628 = scalar_lea.vmem [#allocation7], %s627
        %p629 = pneg %p86
        %p630 = pneg %p83
        %p631 = pneg %p107
        %p632 = pneg %p104
        %p633 = pneg %p128
        %p634 = pneg %p125
        %p635 = pneg %p149
        %p636 = pneg %p146
        %p637 = pneg %p170
        %p638 = pneg %p167
        %p639 = pneg %p191
        %p640 = pneg %p188
        %p641 = pneg %p212
        %p642 = pneg %p209
        %p643 = pneg %p233
        %p644 = pneg %p230
        %p645 = pneg %p254
        %p646 = pneg %p251
        %p647 = pneg %p275
        %p648 = pneg %p272
        %p649 = pneg %p296
        %p650 = pneg %p293
        %p651 = pneg %p317
        %p652 = pneg %p314
        %p653 = pneg %p338
        %p654 = pneg %p335
        %p655 = pneg %p359
        %p656 = pneg %p356
        %p657 = pneg %p380
        %p658 = pneg %p377
        %p659 = pneg %p406
        %p660 = pneg %p403
        %s661 = sand.u32 %s393, 1
        %s662 = scalar_lea.sflag [#allocation6], %s661
        %s663 = sand.u32 %s393, 1
        %s664 = smul.addr %s663, 128
        %s665 = scalar_lea.vmem [#allocation18], %s664
        %s666 = smul.u32 2, %s39
        %s667 = smul.u32 2, %s39
        %v671 = vld [vmem:[%s579] sm:$0xff]
        %v672 = vld [vmem:[%s579 + $0x8] sm:$0xff]
        %v673 = vld [vmem:[%s579 + $0x10] sm:$0xff]
        %v674 = vld [vmem:[%s579 + $0x18] sm:$0xff]
        %v675 = vld [vmem:[%s579 + $0x20] sm:$0xff]
        %v676 = vld [vmem:[%s579 + $0x28] sm:$0xff]
        %v677 = vld [vmem:[%s579 + $0x30] sm:$0xff]
        %v678 = vld [vmem:[%s579 + $0x38] sm:$0xff]
        %v679 = vld [vmem:[%s579 + $0x40] sm:$0xff]
        %v680 = vld [vmem:[%s579 + $0x48] sm:$0xff]
        %v681 = vld [vmem:[%s579 + $0x50] sm:$0xff]
        %v682 = vld [vmem:[%s579 + $0x58] sm:$0xff]
        %v683 = vld [vmem:[%s579 + $0x60] sm:$0xff]
        %v684 = vld [vmem:[%s579 + $0x68] sm:$0xff]
        %v685 = vld [vmem:[%s579 + $0x70] sm:$0xff]
        %v686 = vld [vmem:[%s579 + $0x78] sm:$0xff]
        %v687 = vlaneseq
        %v688 = vshrl.u32 %v687, 7
        %v689 = vadd.s32 %v688, 8
        %v690 = vadd.s32 %v688, 16
        %v691 = vadd.s32 %v688, 24
        %v692 = vadd.s32 %v688, 32
        %v693 = vadd.s32 %v688, 40
        %v694 = vadd.s32 %v688, 48
        %v695 = vadd.s32 %v688, 56
        %vm696 = vcmp.lt.s32.totalorder %v688, 0
        %v697 = vsub.s32 0, %v688
        %v698 = vsel %vm696, %v697, %v688
        %v699 = vshrl.u32 %v698, 3
        %v700 = vand.u32 %v698, 7
        %v701 = vsub.s32 0, %v700
        %v702 = vsel %vm696, %v701, %v700
        %vm703 = vcmp.lt.s32.totalorder %v689, 0
        %v704 = vsub.s32 0, %v689
        %v705 = vsel %vm703, %v704, %v689
        %v706 = vshrl.u32 %v705, 3
        %v707 = vand.u32 %v705, 7
        %v708 = vsub.s32 0, %v707
        %v709 = vsel %vm703, %v708, %v707
        %vm710 = vcmp.lt.s32.totalorder %v690, 0
        %v711 = vsub.s32 0, %v690
        %v712 = vsel %vm710, %v711, %v690
        %v713 = vshrl.u32 %v712, 3
        %v714 = vand.u32 %v712, 7
        %v715 = vsub.s32 0, %v714
        %v716 = vsel %vm710, %v715, %v714
        %vm717 = vcmp.lt.s32.totalorder %v691, 0
        %v718 = vsub.s32 0, %v691
        %v719 = vsel %vm717, %v718, %v691
        %v720 = vshrl.u32 %v719, 3
        %v721 = vand.u32 %v719, 7
        %v722 = vsub.s32 0, %v721
        %v723 = vsel %vm717, %v722, %v721
        %vm724 = vcmp.lt.s32.totalorder %v692, 0
        %v725 = vsub.s32 0, %v692
        %v726 = vsel %vm724, %v725, %v692
        %v727 = vshrl.u32 %v726, 3
        %v728 = vand.u32 %v726, 7
        %v729 = vsub.s32 0, %v728
        %v730 = vsel %vm724, %v729, %v728
        %vm731 = vcmp.lt.s32.totalorder %v693, 0
        %v732 = vsub.s32 0, %v693
        %v733 = vsel %vm731, %v732, %v693
        %v734 = vshrl.u32 %v733, 3
        %v735 = vand.u32 %v733, 7
        %v736 = vsub.s32 0, %v735
        %v737 = vsel %vm731, %v736, %v735
        %vm738 = vcmp.lt.s32.totalorder %v694, 0
        %v739 = vsub.s32 0, %v694
        %v740 = vsel %vm738, %v739, %v694
        %v741 = vshrl.u32 %v740, 3
        %v742 = vand.u32 %v740, 7
        %v743 = vsub.s32 0, %v742
        %v744 = vsel %vm738, %v743, %v742
        %vm745 = vcmp.lt.s32.totalorder %v695, 0
        %v746 = vsub.s32 0, %v695
        %v747 = vsel %vm745, %v746, %v695
        %v748 = vshrl.u32 %v747, 3
        %v749 = vand.u32 %v747, 7
        %v750 = vsub.s32 0, %v749
        %v751 = vsel %vm745, %v750, %v749
        %vm752 = vcmp.ne.s32.totalorder %v702, 0
        %vm753 = vcmp.ne.s32.totalorder %v709, 0
        %vm754 = vcmp.ne.s32.totalorder %v716, 0
        %vm755 = vcmp.ne.s32.totalorder %v723, 0
        %vm756 = vcmp.ne.s32.totalorder %v730, 0
        %vm757 = vcmp.ne.s32.totalorder %v737, 0
        %vm758 = vcmp.ne.s32.totalorder %v744, 0
        %vm759 = vcmp.ne.s32.totalorder %v751, 0
        %vm760 = vcmp.lt.s32.totalorder %v702, 0
        %vm761 = vcmp.lt.s32.totalorder %v709, 0
        %vm762 = vcmp.lt.s32.totalorder %v716, 0
        %vm763 = vcmp.lt.s32.totalorder %v723, 0
        %vm764 = vcmp.lt.s32.totalorder %v730, 0
        %vm765 = vcmp.lt.s32.totalorder %v737, 0
        %vm766 = vcmp.lt.s32.totalorder %v744, 0
        %vm767 = vcmp.lt.s32.totalorder %v751, 0
        %vm768 = vmand %vm760, %vm752
        %vm769 = vmand %vm761, %vm753
        %vm770 = vmand %vm762, %vm754
        %vm771 = vmand %vm763, %vm755
        %vm772 = vmand %vm764, %vm756
        %vm773 = vmand %vm765, %vm757
        %vm774 = vmand %vm766, %vm758
        %vm775 = vmand %vm767, %vm759
        %v776 = vadd.s32 %v702, 8
        %v777 = vadd.s32 %v709, 8
        %v778 = vadd.s32 %v716, 8
        %v779 = vadd.s32 %v723, 8
        %v780 = vadd.s32 %v730, 8
        %v781 = vadd.s32 %v737, 8
        %v782 = vadd.s32 %v744, 8
        %v783 = vadd.s32 %v751, 8
        %v784 = vsel %vm768, %v776, %v702
        %v785 = vsel %vm769, %v777, %v709
        %v786 = vsel %vm770, %v778, %v716
        %v787 = vsel %vm771, %v779, %v723
        %v788 = vsel %vm772, %v780, %v730
        %v789 = vsel %vm773, %v781, %v737
        %v790 = vsel %vm774, %v782, %v744
        %v791 = vsel %vm775, %v783, %v751
        %v792 = vld [vmem:[#allocation9] sm:$0xff]
        %v793 = vld [vmem:[#allocation9 + $0x8] sm:$0xff]
        %v794 = vld [vmem:[#allocation9 + $0x10] sm:$0xff]
        %v795 = vld [vmem:[#allocation9 + $0x18] sm:$0xff]
        %v796 = vld [vmem:[#allocation9 + $0x20] sm:$0xff]
        %v797 = vld [vmem:[#allocation9 + $0x28] sm:$0xff]
        %v798 = vld [vmem:[#allocation9 + $0x30] sm:$0xff]
        %v799 = vld [vmem:[#allocation9 + $0x38] sm:$0xff]
        %v800 = vld [vmem:[%s3] sm:$0x1]
        %v801 = vld [vmem:[%s4] sm:$0x1]
        %vm802 = vcmask 523264
        %v803 = vsel %vm802, %v671, 0.0
        %v804 = vsel %vm802, %v672, 0.0
        %v805 = vadd.f32 %v803, %v804
        %v806 = vsel %vm802, %v673, 0.0
        %v807 = vadd.f32 %v805, %v806
        %v808 = vsel %vm802, %v674, 0.0
        %v809 = vadd.f32 %v807, %v808
        %v810 = vsel %vm802, %v675, 0.0
        %v811 = vadd.f32 %v809, %v810
        %v812 = vsel %vm802, %v676, 0.0
        %v813 = vadd.f32 %v811, %v812
        %v814 = vsel %vm802, %v677, 0.0
        %v815 = vadd.f32 %v813, %v814
        %v816 = vsel %vm802, %v678, 0.0
        %v817 = vadd.f32 %v815, %v816
        %v818 = vrot.slane %v817, 4
        %v819 = vadd.f32 %v817, %v818
        %v820 = vrot.slane %v819, 2
        %v821 = vadd.f32 %v819, %v820
        %v822 = vrot.slane %v821, 1
        %v823 = vadd.f32 %v821, %v822
        %v824 = vsel %vm802, %v679, 0.0
        %v825 = vsel %vm802, %v680, 0.0
        %v826 = vadd.f32 %v824, %v825
        %v827 = vsel %vm802, %v681, 0.0
        %v828 = vadd.f32 %v826, %v827
        %v829 = vsel %vm802, %v682, 0.0
        %v830 = vadd.f32 %v828, %v829
        %v831 = vsel %vm802, %v683, 0.0
        %v832 = vadd.f32 %v830, %v831
        %v833 = vsel %vm802, %v684, 0.0
        %v834 = vadd.f32 %v832, %v833
        %v835 = vsel %vm802, %v685, 0.0
        %v836 = vadd.f32 %v834, %v835
        %v837 = vsel %vm802, %v686, 0.0
        %v838 = vadd.f32 %v836, %v837
        %v839 = vrot.slane %v838, 4
        %v840 = vadd.f32 %v838, %v839
        %v841 = vrot.slane %v840, 2
        %v842 = vadd.f32 %v840, %v841
        %v843 = vrot.slane %v842, 1
        %v844 = vadd.f32 %v842, %v843
        %v845 = vrcp.pop 64.0
        %v846 = vmul.f32 %v823, %v845
        %v847 = vmul.f32 %v844, %v845
        %v848 = vmul.f32 %v671, %v671
        %v849 = vmul.f32 %v672, %v672
        %v850 = vmul.f32 %v673, %v673
        %v851 = vmul.f32 %v674, %v674
        %v852 = vmul.f32 %v675, %v675
        %v853 = vmul.f32 %v676, %v676
        %v854 = vmul.f32 %v677, %v677
        %v855 = vmul.f32 %v678, %v678
        %v856 = vmul.f32 %v679, %v679
        %v857 = vmul.f32 %v680, %v680
        %v858 = vmul.f32 %v681, %v681
        %v859 = vmul.f32 %v682, %v682
        %v860 = vmul.f32 %v683, %v683
        %v861 = vmul.f32 %v684, %v684
        %v862 = vmul.f32 %v685, %v685
        %v863 = vmul.f32 %v686, %v686
        %v864 = vsel %vm802, %v848, 0.0
        %v865 = vsel %vm802, %v849, 0.0
        %v866 = vadd.f32 %v864, %v865
        %v867 = vsel %vm802, %v850, 0.0
        %v868 = vadd.f32 %v866, %v867
        %v869 = vsel %vm802, %v851, 0.0
        %v870 = vadd.f32 %v868, %v869
        %v871 = vsel %vm802, %v852, 0.0
        %v872 = vadd.f32 %v870, %v871
        %v873 = vsel %vm802, %v853, 0.0
        %v874 = vadd.f32 %v872, %v873
        %v875 = vsel %vm802, %v854, 0.0
        %v876 = vadd.f32 %v874, %v875
        %v877 = vsel %vm802, %v855, 0.0
        %v878 = vadd.f32 %v876, %v877
        %v879 = vrot.slane %v878, 4
        %v880 = vadd.f32 %v878, %v879
        %v881 = vrot.slane %v880, 2
        %v882 = vadd.f32 %v880, %v881
        %v883 = vrot.slane %v882, 1
        %v884 = vadd.f32 %v882, %v883
        %v885 = vsel %vm802, %v856, 0.0
        %v886 = vsel %vm802, %v857, 0.0
        %v887 = vadd.f32 %v885, %v886
        %v888 = vsel %vm802, %v858, 0.0
        %v889 = vadd.f32 %v887, %v888
        %v890 = vsel %vm802, %v859, 0.0
        %v891 = vadd.f32 %v889, %v890
        %v892 = vsel %vm802, %v860, 0.0
        %v893 = vadd.f32 %v891, %v892
        %v894 = vsel %vm802, %v861, 0.0
        %v895 = vadd.f32 %v893, %v894
        %v896 = vsel %vm802, %v862, 0.0
        %v897 = vadd.f32 %v895, %v896
        %v898 = vsel %vm802, %v863, 0.0
        %v899 = vadd.f32 %v897, %v898
        %v900 = vrot.slane %v899, 4
        %v901 = vadd.f32 %v899, %v900
        %v902 = vrot.slane %v901, 2
        %v903 = vadd.f32 %v901, %v902
        %v904 = vrot.slane %v903, 1
        %v905 = vadd.f32 %v903, %v904
        %v906 = vmul.f32 %v884, %v845
        %v907 = vmul.f32 %v905, %v845
        %vm910 = vcmask 1041409
        %v911 = vsel %vm910, %v847, %v846
        %vm915 = vcmask 1043459
        %v916 = vsel %vm915, %v907, %v906
        %vm918 = vcmask 1041408
        %v919 = vsel %vm918, %v911, %v916
        %v921 = vsel %vm802, %v919, 0
        %923 = vmatprep.subr.mxu0 0.0
        %924 = vmatpush1.msra.mxu0 0.0
        %925 = vmatprep.subr.mxu0 0.0
        %926 = vmatpush1.msra.mxu0 0.0
        %927 = vmatprep.subr.mxu0 0.0
        %928 = vmatpush1.msra.mxu0 0.0
        %929 = vmatprep.subr.mxu0 0.0
        %930 = vmatpush1.msra.mxu0 0.0
        %931 = vmatprep.subr.mxu0 0.0
        %932 = vmatpush1.msra.mxu0 0.0
        %933 = vmatprep.subr.mxu0 0.0
        %934 = vmatpush1.msra.mxu0 0.0
        %935 = vmatprep.subr.mxu0 0.0
        %936 = vmatpush1.msra.mxu0 0.0
        %937 = vmatprep.subr.mxu0 0.0
        %938 = vmatpush1.msra.mxu0 0.0
        %939 = vmatprep.subr.mxu0 0.0
        %940 = vmatpush1.msra.mxu0 %v799
        %941 = vmatprep.subr.mxu0 0.0
        %942 = vmatpush1.msra.mxu0 %v798
        %943 = vmatprep.subr.mxu0 0.0
        %944 = vmatpush1.msra.mxu0 %v797
        %945 = vmatprep.subr.mxu0 0.0
        %946 = vmatpush1.msra.mxu0 %v796
        %947 = vmatprep.subr.mxu0 0.0
        %948 = vmatpush1.msra.mxu0 %v795
        %949 = vmatprep.subr.mxu0 0.0
        %950 = vmatpush1.msra.mxu0 %v794
        %951 = vmatprep.subr.mxu0 0.0
        %952 = vmatpush1.msra.mxu0 %v793
        %953 = vmatprep.subr.mxu0 0.0
        %954 = vmatpush1.msra.mxu0 %v792
        %955 = vmatprep.subr.mxu0 0.0
        %956 = vmatpush2.msra.mxu0 0.0
        %957 = vmatprep.subr.mxu0 0.0
        %958 = vmatpush2.msra.mxu0 0.0
        %959 = vmatprep.subr.mxu0 0.0
        %960 = vmatpush2.msra.mxu0 0.0
        %961 = vmatprep.subr.mxu0 0.0
        %962 = vmatpush2.msra.mxu0 0.0
        %963 = vmatprep.subr.mxu0 0.0
        %964 = vmatpush2.msra.mxu0 0.0
        %965 = vmatprep.subr.mxu0 0.0
        %966 = vmatpush2.msra.mxu0 0.0
        %967 = vmatprep.subr.mxu0 0.0
        %968 = vmatpush2.msra.mxu0 0.0
        %969 = vmatprep.subr.mxu0 0.0
        %970 = vmatpush2.msra.mxu0 0.0
        %971 = vmatprep.subr.mxu0 0.0
        %972 = vmatpush2.msra.mxu0 0.0
        %973 = vmatprep.subr.mxu0 0.0
        %974 = vmatpush2.msra.mxu0 0.0
        %975 = vmatprep.subr.mxu0 0.0
        %976 = vmatpush2.msra.mxu0 0.0
        %977 = vmatprep.subr.mxu0 0.0
        %978 = vmatpush2.msra.mxu0 0.0
        %979 = vmatprep.subr.mxu0 0.0
        %980 = vmatpush2.msra.mxu0 0.0
        %981 = vmatprep.subr.mxu0 0.0
        %982 = vmatpush2.msra.mxu0 0.0
        %983 = vmatprep.subr.mxu0 0.0
        %984 = vmatpush2.msra.mxu0 0.0
        %985 = vmatprep.subr.mxu0 0.0
        %986 = vmatpush2.msra.mxu0 0.0
        %987 = vmatprep.mubr.f32.mxu0 0.0
        %988 = vmatmul.mubr.f32.gmra.mxu0 %v921
        %v989 = vpop.f32.mrf.mxu0
        %v990 = vadd.f32 0.0, %v989
        %v991 = vpop.f32.mrf.mxu0
        %992 = vdwg.mxu0
        %v995 = vunpack.c.l.s4 1966171168
        %v996 = vunpack.c.0.s8 %v995
        %v997 = vlaneseq
        %v998 = vshrl.u32 %v997, 7
        %v999 = vsub.s32 %v996, %v998
        %v1000 = vrot.slane %v990, %v999
        %v1001 = vcombine.high %v1000, %v1000
        %v1003 = vunpack.c.l.s4 1966171168
        %v1004 = vunpack.c.0.s8 %v1003
        %v1005 = vlaneseq
        %v1006 = vshrl.u32 %v1005, 7
        %v1007 = vsub.s32 %v1004, %v1006
        %v1008 = vrot.slane %v1000, %v1007
        %v1010 = vunpack.c.l.s4 1966171168
        %v1011 = vunpack.c.0.s8 %v1010
        %v1012 = vlaneseq
        %v1013 = vshrl.u32 %v1012, 7
        %v1014 = vsub.s32 %v1011, %v1013
        %v1015 = vrot.slane %v1001, %v1014
        %v1018 = vcombine.high %v1008, %v1008
        %v1019 = vcombine.high %v1015, %v1015
        %v1022 = vmul.f32 %v1008, %v1008
        %v1023 = vmul.f32 %v1015, %v1015
        %v1024 = vsub.f32 %v1018, %v1022
        %v1025 = vsub.f32 %v1019, %v1023
        %v1026 = vmax.f32 %v1024, 0.0
        %v1027 = vmax.f32 %v1025, 0.0
        %v1028 = vadd.f32 %v1026, 1e-05
        %v1029 = vadd.f32 %v1027, 1e-05
        %v1030 = vrsqrt.pop %v1028
        %v1031 = vrsqrt.pop %v1029
        %v1032 = vmul.f32 %v1030, %v800
        %v1033 = vmul.f32 %v1031, %v800
        %v1034 = vlaneseq
        %v1035 = vshrl.u32 %v1034, 7
        %v1036 = vsub.s32 0, %v1035
        %v1037 = vrot.slane %v1008, %v1036
        %v1038 = vlaneseq
        %v1039 = vshrl.u32 %v1038, 7
        %v1040 = vsub.s32 0, %v1039
        %v1041 = vrot.slane %v1015, %v1040
        %v1044 = vsub.f32 %v671, %v1037
        %v1045 = vsub.f32 %v672, %v1037
        %v1046 = vsub.f32 %v673, %v1037
        %v1047 = vsub.f32 %v674, %v1037
        %v1048 = vsub.f32 %v675, %v1037
        %v1049 = vsub.f32 %v676, %v1037
        %v1050 = vsub.f32 %v677, %v1037
        %v1051 = vsub.f32 %v678, %v1037
        %v1052 = vsub.f32 %v679, %v1041
        %v1053 = vsub.f32 %v680, %v1041
        %v1054 = vsub.f32 %v681, %v1041
        %v1055 = vsub.f32 %v682, %v1041
        %v1056 = vsub.f32 %v683, %v1041
        %v1057 = vsub.f32 %v684, %v1041
        %v1058 = vsub.f32 %v685, %v1041
        %v1059 = vsub.f32 %v686, %v1041
        %v1062 = vlaneseq
        %v1063 = vshrl.u32 %v1062, 7
        %v1064 = vsub.s32 0, %v1063
        %v1065 = vrot.slane %v1032, %v1064
        %v1066 = vlaneseq
        %v1067 = vshrl.u32 %v1066, 7
        %v1068 = vsub.s32 0, %v1067
        %v1069 = vrot.slane %v1033, %v1068
        %v1072 = vmul.f32 %v1044, %v1065
        %v1073 = vmul.f32 %v1045, %v1065
        %v1074 = vmul.f32 %v1046, %v1065
        %v1075 = vmul.f32 %v1047, %v1065
        %v1076 = vmul.f32 %v1048, %v1065
        %v1077 = vmul.f32 %v1049, %v1065
        %v1078 = vmul.f32 %v1050, %v1065
        %v1079 = vmul.f32 %v1051, %v1065
        %v1080 = vmul.f32 %v1052, %v1069
        %v1081 = vmul.f32 %v1053, %v1069
        %v1082 = vmul.f32 %v1054, %v1069
        %v1083 = vmul.f32 %v1055, %v1069
        %v1084 = vmul.f32 %v1056, %v1069
        %v1085 = vmul.f32 %v1057, %v1069
        %v1086 = vmul.f32 %v1058, %v1069
        %v1087 = vmul.f32 %v1059, %v1069
        %v1089 = vlaneseq
        %v1090 = vshrl.u32 %v1089, 7
        %v1091 = vsub.s32 0, %v1090
        %v1092 = vrot.slane %v801, %v1091
        %v1094 = vadd.f32 %v1072, %v1092
        %v1095 = vadd.f32 %v1073, %v1092
        %v1096 = vadd.f32 %v1074, %v1092
        %v1097 = vadd.f32 %v1075, %v1092
        %v1098 = vadd.f32 %v1076, %v1092
        %v1099 = vadd.f32 %v1077, %v1092
        %v1100 = vadd.f32 %v1078, %v1092
        %v1101 = vadd.f32 %v1079, %v1092
        %v1102 = vadd.f32 %v1080, %v1092
        %v1103 = vadd.f32 %v1081, %v1092
        %v1104 = vadd.f32 %v1082, %v1092
        %v1105 = vadd.f32 %v1083, %v1092
        %v1106 = vadd.f32 %v1084, %v1092
        %v1107 = vadd.f32 %v1085, %v1092
        %v1108 = vadd.f32 %v1086, %v1092
        %v1109 = vadd.f32 %v1087, %v1092
        %v1110 = vxor.u32 %v1094, 2147483648
        %v1111 = vxor.u32 %v1095, 2147483648
        %v1112 = vxor.u32 %v1096, 2147483648
        %v1113 = vxor.u32 %v1097, 2147483648
        %v1114 = vxor.u32 %v1098, 2147483648
        %v1115 = vxor.u32 %v1099, 2147483648
        %v1116 = vxor.u32 %v1100, 2147483648
        %v1117 = vxor.u32 %v1101, 2147483648
        %v1118 = vxor.u32 %v1102, 2147483648
        %v1119 = vxor.u32 %v1103, 2147483648
        %v1120 = vxor.u32 %v1104, 2147483648
        %v1121 = vxor.u32 %v1105, 2147483648
        %v1122 = vxor.u32 %v1106, 2147483648
        %v1123 = vxor.u32 %v1107, 2147483648
        %v1124 = vxor.u32 %v1108, 2147483648
        %v1125 = vxor.u32 %v1109, 2147483648
        %v1126 = vmul.f32 %v1110, 1.442695
        %v1127 = vpow.pop %v1126
        %v1128 = vmul.f32 %v1111, 1.442695
        %v1129 = vpow.pop %v1128
        %v1130 = vmul.f32 %v1112, 1.442695
        %v1131 = vpow.pop %v1130
        %v1132 = vmul.f32 %v1113, 1.442695
        %v1133 = vpow.pop %v1132
        %v1134 = vmul.f32 %v1114, 1.442695
        %v1135 = vpow.pop %v1134
        %v1136 = vmul.f32 %v1115, 1.442695
        %v1137 = vpow.pop %v1136
        %v1138 = vmul.f32 %v1116, 1.442695
        %v1139 = vpow.pop %v1138
        %v1140 = vmul.f32 %v1117, 1.442695
        %v1141 = vpow.pop %v1140
        %v1142 = vmul.f32 %v1118, 1.442695
        %v1143 = vpow.pop %v1142
        %v1144 = vmul.f32 %v1119, 1.442695
        %v1145 = vpow.pop %v1144
        %v1146 = vmul.f32 %v1120, 1.442695
        %v1147 = vpow.pop %v1146
        %v1148 = vmul.f32 %v1121, 1.442695
        %v1149 = vpow.pop %v1148
        %v1150 = vmul.f32 %v1122, 1.442695
        %v1151 = vpow.pop %v1150
        %v1152 = vmul.f32 %v1123, 1.442695
        %v1153 = vpow.pop %v1152
        %v1154 = vmul.f32 %v1124, 1.442695
        %v1155 = vpow.pop %v1154
        %v1156 = vmul.f32 %v1125, 1.442695
        %v1157 = vpow.pop %v1156
        %v1158 = vadd.f32 %v1127, 1.0
        %v1159 = vadd.f32 %v1129, 1.0
        %v1160 = vadd.f32 %v1131, 1.0
        %v1161 = vadd.f32 %v1133, 1.0
        %v1162 = vadd.f32 %v1135, 1.0
        %v1163 = vadd.f32 %v1137, 1.0
        %v1164 = vadd.f32 %v1139, 1.0
        %v1165 = vadd.f32 %v1141, 1.0
        %v1166 = vadd.f32 %v1143, 1.0
        %v1167 = vadd.f32 %v1145, 1.0
        %v1168 = vadd.f32 %v1147, 1.0
        %v1169 = vadd.f32 %v1149, 1.0
        %v1170 = vadd.f32 %v1151, 1.0
        %v1171 = vadd.f32 %v1153, 1.0
        %v1172 = vadd.f32 %v1155, 1.0
        %v1173 = vadd.f32 %v1157, 1.0
        %v1174 = vrcp.pop %v1158
        %v1175 = vmul.f32 1.0, %v1174
        %v1176 = vrcp.pop %v1159
        %v1177 = vmul.f32 1.0, %v1176
        %v1178 = vrcp.pop %v1160
        %v1179 = vmul.f32 1.0, %v1178
        %v1180 = vrcp.pop %v1161
        %v1181 = vmul.f32 1.0, %v1180
        %v1182 = vrcp.pop %v1162
        %v1183 = vmul.f32 1.0, %v1182
        %v1184 = vrcp.pop %v1163
        %v1185 = vmul.f32 1.0, %v1184
        %v1186 = vrcp.pop %v1164
        %v1187 = vmul.f32 1.0, %v1186
        %v1188 = vrcp.pop %v1165
        %v1189 = vmul.f32 1.0, %v1188
        %v1190 = vrcp.pop %v1166
        %v1191 = vmul.f32 1.0, %v1190
        %v1192 = vrcp.pop %v1167
        %v1193 = vmul.f32 1.0, %v1192
        %v1194 = vrcp.pop %v1168
        %v1195 = vmul.f32 1.0, %v1194
        %v1196 = vrcp.pop %v1169
        %v1197 = vmul.f32 1.0, %v1196
        %v1198 = vrcp.pop %v1170
        %v1199 = vmul.f32 1.0, %v1198
        %v1200 = vrcp.pop %v1171
        %v1201 = vmul.f32 1.0, %v1200
        %v1202 = vrcp.pop %v1172
        %v1203 = vmul.f32 1.0, %v1202
        %v1204 = vrcp.pop %v1173
        %v1205 = vmul.f32 1.0, %v1204
        %v1206 = vmul.f32 %v1094, %v1175
        %v1207 = vmul.f32 %v1095, %v1177
        %v1208 = vmul.f32 %v1096, %v1179
        %v1209 = vmul.f32 %v1097, %v1181
        %v1210 = vmul.f32 %v1098, %v1183
        %v1211 = vmul.f32 %v1099, %v1185
        %v1212 = vmul.f32 %v1100, %v1187
        %v1213 = vmul.f32 %v1101, %v1189
        %v1214 = vmul.f32 %v1102, %v1191
        %v1215 = vmul.f32 %v1103, %v1193
        %v1216 = vmul.f32 %v1104, %v1195
        %v1217 = vmul.f32 %v1105, %v1197
        %v1218 = vmul.f32 %v1106, %v1199
        %v1219 = vmul.f32 %v1107, %v1201
        %v1220 = vmul.f32 %v1108, %v1203
        %v1221 = vmul.f32 %v1109, %v1205
        %v1222 = vld [vmem:[%s6] sm:$0x1]
        %v1223 = vpack.c.bf16 %v1207, %v1206
        %v1224 = vpack.c.bf16 %v1209, %v1208
        %v1225 = vpack.c.bf16 %v1211, %v1210
        %v1226 = vpack.c.bf16 %v1213, %v1212
        %v1227 = vpack.c.bf16 %v1215, %v1214
        %v1228 = vpack.c.bf16 %v1217, %v1216
        %v1229 = vpack.c.bf16 %v1219, %v1218
        %v1230 = vpack.c.bf16 %v1221, %v1220
        %vm1231 = vcmp.eq.s32.totalorder %v784, 7
        %vm1232 = vcmp.eq.s32.totalorder %v785, 7
        %vm1233 = vcmp.eq.s32.totalorder %v786, 7
        %vm1234 = vcmp.eq.s32.totalorder %v787, 7
        %vm1235 = vcmp.eq.s32.totalorder %v788, 7
        %vm1236 = vcmp.eq.s32.totalorder %v789, 7
        %vm1237 = vcmp.eq.s32.totalorder %v790, 7
        %vm1238 = vcmp.eq.s32.totalorder %v791, 7
        %v1239 = vsel %vm1231, 1, 0
        %v1240 = vsel %vm1232, 1, 0
        %v1241 = vsel %vm1233, 1, 0
        %v1242 = vsel %vm1234, 1, 0
        %v1243 = vsel %vm1235, 1, 0
        %v1244 = vsel %vm1236, 1, 0
        %v1245 = vsel %vm1237, 1, 0
        %v1246 = vsel %vm1238, 1, 0
        %vm1247 = vcmp.eq.s32.totalorder %v1239, 1
        %vm1248 = vcmp.eq.s32.totalorder %v1240, 1
        %vm1249 = vcmp.eq.s32.totalorder %v1241, 1
        %vm1250 = vcmp.eq.s32.totalorder %v1242, 1
        %vm1251 = vcmp.eq.s32.totalorder %v1243, 1
        %vm1252 = vcmp.eq.s32.totalorder %v1244, 1
        %vm1253 = vcmp.eq.s32.totalorder %v1245, 1
        %vm1254 = vcmp.eq.s32.totalorder %v1246, 1
        %vm1255 = vmpackc.low %vm1247, %vm1247
        %vm1256 = vmpackc.low %vm1248, %vm1248
        %vm1257 = vmpackc.low %vm1249, %vm1249
        %vm1258 = vmpackc.low %vm1250, %vm1250
        %vm1259 = vmpackc.low %vm1251, %vm1251
        %vm1260 = vmpackc.low %vm1252, %vm1252
        %vm1261 = vmpackc.low %vm1253, %vm1253
        %vm1262 = vmpackc.low %vm1254, %vm1254
        %v1263 = vsel %vm1255, 65537, 0
        %v1264 = vsel %vm1256, 65537, 0
        %v1265 = vsel %vm1257, 65537, 0
        %v1266 = vsel %vm1258, 65537, 0
        %v1267 = vsel %vm1259, 65537, 0
        %v1268 = vsel %vm1260, 65537, 0
        %v1269 = vsel %vm1261, 65537, 0
        %v1270 = vsel %vm1262, 65537, 0
        %v1271 = vunpack.c.l.b16 %v1263
        %v1272 = vunpack.c.l.b16 %v1264
        %v1273 = vunpack.c.l.b16 %v1265
        %v1274 = vunpack.c.l.b16 %v1266
        %v1275 = vunpack.c.l.b16 %v1267
        %v1276 = vunpack.c.l.b16 %v1268
        %v1277 = vunpack.c.l.b16 %v1269
        %v1278 = vunpack.c.l.b16 %v1270
        %v1279 = vpack.c.b16 %v1272, %v1271
        %v1280 = vpack.c.b16 %v1274, %v1273
        %v1281 = vpack.c.b16 %v1276, %v1275
        %v1282 = vpack.c.b16 %v1278, %v1277
        %vm1283 = vcmp.ne.s16.totalorder %v1279, 0
        %vm1284 = vcmp.ne.s16.totalorder %v1280, 0
        %vm1285 = vcmp.ne.s16.totalorder %v1281, 0
        %vm1286 = vcmp.ne.s16.totalorder %v1282, 0
        %v1287 = vsel %vm1283, 0, %v1223
        %v1288 = vsel %vm1284, 0, %v1224
        %v1289 = vsel %vm1285, 0, %v1225
        %v1290 = vsel %vm1286, 0, %v1226
        %v1291 = vsel %vm1283, 0, %v1227
        %v1292 = vsel %vm1284, 0, %v1228
        %v1293 = vsel %vm1285, 0, %v1229
        %v1294 = vsel %vm1286, 0, %v1230
        %vm1295 = vcmp.eq.s32.totalorder %v784, 0
        %vm1296 = vcmp.eq.s32.totalorder %v785, 0
        %vm1297 = vcmp.eq.s32.totalorder %v786, 0
        %vm1298 = vcmp.eq.s32.totalorder %v787, 0
        %vm1299 = vcmp.eq.s32.totalorder %v788, 0
        %vm1300 = vcmp.eq.s32.totalorder %v789, 0
        %vm1301 = vcmp.eq.s32.totalorder %v790, 0
        %vm1302 = vcmp.eq.s32.totalorder %v791, 0
        %v1303 = vsel %vm1295, 1, 0
        %v1304 = vsel %vm1296, 1, 0
        %v1305 = vsel %vm1297, 1, 0
        %v1306 = vsel %vm1298, 1, 0
        %v1307 = vsel %vm1299, 1, 0
        %v1308 = vsel %vm1300, 1, 0
        %v1309 = vsel %vm1301, 1, 0
        %v1310 = vsel %vm1302, 1, 0
        %vm1311 = vcmp.eq.s32.totalorder %v1303, 1
        %vm1312 = vcmp.eq.s32.totalorder %v1304, 1
        %vm1313 = vcmp.eq.s32.totalorder %v1305, 1
        %vm1314 = vcmp.eq.s32.totalorder %v1306, 1
        %vm1315 = vcmp.eq.s32.totalorder %v1307, 1
        %vm1316 = vcmp.eq.s32.totalorder %v1308, 1
        %vm1317 = vcmp.eq.s32.totalorder %v1309, 1
        %vm1318 = vcmp.eq.s32.totalorder %v1310, 1
        %vm1319 = vmpackc.low %vm1311, %vm1311
        %vm1320 = vmpackc.low %vm1312, %vm1312
        %vm1321 = vmpackc.low %vm1313, %vm1313
        %vm1322 = vmpackc.low %vm1314, %vm1314
        %vm1323 = vmpackc.low %vm1315, %vm1315
        %vm1324 = vmpackc.low %vm1316, %vm1316
        %vm1325 = vmpackc.low %vm1317, %vm1317
        %vm1326 = vmpackc.low %vm1318, %vm1318
        %v1327 = vsel %vm1319, 65537, 0
        %v1328 = vsel %vm1320, 65537, 0
        %v1329 = vsel %vm1321, 65537, 0
        %v1330 = vsel %vm1322, 65537, 0
        %v1331 = vsel %vm1323, 65537, 0
        %v1332 = vsel %vm1324, 65537, 0
        %v1333 = vsel %vm1325, 65537, 0
        %v1334 = vsel %vm1326, 65537, 0
        %v1335 = vunpack.c.l.b16 %v1327
        %v1336 = vunpack.c.l.b16 %v1328
        %v1337 = vunpack.c.l.b16 %v1329
        %v1338 = vunpack.c.l.b16 %v1330
        %v1339 = vunpack.c.l.b16 %v1331
        %v1340 = vunpack.c.l.b16 %v1332
        %v1341 = vunpack.c.l.b16 %v1333
        %v1342 = vunpack.c.l.b16 %v1334
        %v1343 = vpack.c.b16 %v1336, %v1335
        %v1344 = vpack.c.b16 %v1338, %v1337
        %v1345 = vpack.c.b16 %v1340, %v1339
        %v1346 = vpack.c.b16 %v1342, %v1341
        %vm1347 = vcmp.ne.s16.totalorder %v1343, 0
        %vm1348 = vcmp.ne.s16.totalorder %v1344, 0
        %vm1349 = vcmp.ne.s16.totalorder %v1345, 0
        %vm1350 = vcmp.ne.s16.totalorder %v1346, 0
        %v1351 = vsel %vm1347, 0, %v1223
        %v1352 = vsel %vm1348, 0, %v1224
        %v1353 = vsel %vm1349, 0, %v1225
        %v1354 = vsel %vm1350, 0, %v1226
        %v1355 = vsel %vm1347, 0, %v1227
        %v1356 = vsel %vm1348, 0, %v1228
        %v1357 = vsel %vm1349, 0, %v1229
        %v1358 = vsel %vm1350, 0, %v1230
        %vm1359 = vcmask 1043456
        %vm1360 = vcmask 523268
        %vm1361 = vmor %vm1360, %vm1359
        %1362 = vst.msk [vmem:[#allocation2 + $0x8] sm:$0xff] %vm1361, 0
        %vm1363 = vcmask 1040384
        %vm1364 = vsmask.f32 256
        %vm1365 = vmand %vm1363, %vm1364
        %vm1366 = vcmask 520196
        %vm1367 = vsmask.f32 4352
        %vm1368 = vmand %vm1366, %vm1367
        %vm1369 = vmor %vm1368, %vm1365
        %v1370 = vld [vmem:[#allocation2 + $0x10] sm:$0x11]
        %v1371 = vsel %vm1369, 0, %v1370
        %1372 = vst [vmem:[#allocation2 + $0x10] sm:$0x11] %v1371
        %1373 = vst.msk [vmem:[#allocation2 + $0x68] sm:$0xff] %vm1361, 0
        %v1374 = vld [vmem:[#allocation2 + $0x70] sm:$0x11]
        %v1375 = vsel %vm1369, 0, %v1374
        %1376 = vst [vmem:[#allocation2 + $0x70] sm:$0x11] %v1375
        %vm1377 = vcmask 1043459
        %vm1378 = vsmask.f32 7950
        %vm1379 = vmand %vm1377, %vm1378
        %vm1380 = vcmask 523271
        %vm1381 = vsmask.f32 7966
        %vm1382 = vmand %vm1380, %vm1381
        %vm1383 = vmor %vm1382, %vm1379
        %v1384 = vld [vmem:[#allocation2 + $0x48] sm:$0x88]
        %v1385 = vsel %vm1383, 0, %v1384
        %1386 = vst [vmem:[#allocation2 + $0x48] sm:$0x88] %v1385
        %1387 = vst.msk [vmem:[#allocation2 + $0x50] sm:$0xff] %vm1361, 0
        %v1388 = vld [vmem:[#allocation2 + $0xa8] sm:$0x88]
        %v1389 = vsel %vm1383, 0, %v1388
        %1390 = vst [vmem:[#allocation2 + $0xa8] sm:$0x88] %v1389
        %1391 = vst.msk [vmem:[#allocation2 + $0xb0] sm:$0xff] %vm1361, 0
        %v1400 = vunpack.c.l.b16 %v1287
        %v1401 = vunpack.c.h.b16 %v1287
        %v1402 = vunpack.c.l.b16 %v1288
        %v1403 = vunpack.c.h.b16 %v1288
        %v1404 = vunpack.c.l.b16 %v1289
        %v1405 = vunpack.c.h.b16 %v1289
        %v1406 = vunpack.c.l.b16 %v1290
        %v1407 = vunpack.c.h.b16 %v1290
        %v1408 = vunpack.c.l.b16 %v1291
        %v1409 = vunpack.c.h.b16 %v1291
        %v1410 = vunpack.c.l.b16 %v1292
        %v1411 = vunpack.c.h.b16 %v1292
        %v1412 = vunpack.c.l.b16 %v1293
        %v1413 = vunpack.c.h.b16 %v1293
        %v1414 = vunpack.c.l.b16 %v1294
        %v1415 = vunpack.c.h.b16 %v1294
        %v1416 = vpack.c.b16 %v1400, %v1400
        %v1417 = vpack.c.b16 %v1401, %v1401
        %v1418 = vpack.c.b16 %v1402, %v1402
        %v1419 = vpack.c.b16 %v1403, %v1403
        %v1420 = vpack.c.b16 %v1404, %v1404
        %v1421 = vpack.c.b16 %v1405, %v1405
        %v1422 = vpack.c.b16 %v1406, %v1406
        %v1423 = vpack.c.b16 %v1407, %v1407
        %v1424 = vpack.c.b16 %v1408, %v1408
        %v1425 = vpack.c.b16 %v1409, %v1409
        %v1426 = vpack.c.b16 %v1410, %v1410
        %v1427 = vpack.c.b16 %v1411, %v1411
        %v1428 = vpack.c.b16 %v1412, %v1412
        %v1429 = vpack.c.b16 %v1413, %v1413
        %v1430 = vpack.c.b16 %v1414, %v1414
        %v1431 = vpack.c.b16 %v1415, %v1415
        %vm1432 = vsmask.f32 4368
        %vm1433 = vmor %vm1364, %vm1432
        %v1435 = vshrl.u32 %v1416, 16
        %v1437 = vrot.slane %v1435, 7
        %v1438 = vshll.u32 %v1416, 16
        %v1440 = vor.u32 %v1437, %v1438
        %v1441 = vrot.slane %v1437, 4
        %v1443 = vshrl.u32 %v1417, 16
        %v1445 = vrot.slane %v1443, 7
        %v1446 = vshll.u32 %v1417, 16
        %v1448 = vor.u32 %v1445, %v1446
        %v1449 = vsel %vm1433, %v1441, %v1448
        %v1450 = vrot.slane %v1445, 4
        %v1452 = vshrl.u32 %v1418, 16
        %v1454 = vrot.slane %v1452, 7
        %v1455 = vshll.u32 %v1418, 16
        %v1457 = vor.u32 %v1454, %v1455
        %v1458 = vsel %vm1433, %v1450, %v1457
        %v1459 = vrot.slane %v1454, 4
        %v1461 = vshrl.u32 %v1419, 16
        %v1463 = vrot.slane %v1461, 7
        %v1464 = vshll.u32 %v1419, 16
        %v1466 = vor.u32 %v1463, %v1464
        %v1467 = vsel %vm1433, %v1459, %v1466
        %v1468 = vrot.slane %v1463, 4
        %v1470 = vshrl.u32 %v1420, 16
        %v1472 = vrot.slane %v1470, 7
        %v1473 = vshll.u32 %v1420, 16
        %v1475 = vor.u32 %v1472, %v1473
        %v1476 = vsel %vm1433, %v1468, %v1475
        %v1477 = vrot.slane %v1472, 4
        %v1479 = vshrl.u32 %v1421, 16
        %v1481 = vrot.slane %v1479, 7
        %v1482 = vshll.u32 %v1421, 16
        %v1484 = vor.u32 %v1481, %v1482
        %v1485 = vsel %vm1433, %v1477, %v1484
        %v1486 = vrot.slane %v1481, 4
        %v1488 = vshrl.u32 %v1422, 16
        %v1490 = vrot.slane %v1488, 7
        %v1491 = vshll.u32 %v1422, 16
        %v1493 = vor.u32 %v1490, %v1491
        %v1494 = vsel %vm1433, %v1486, %v1493
        %v1495 = vrot.slane %v1490, 4
        %v1497 = vshrl.u32 %v1423, 16
        %v1499 = vrot.slane %v1497, 7
        %v1500 = vshll.u32 %v1423, 16
        %v1502 = vor.u32 %v1499, %v1500
        %v1503 = vsel %vm1433, %v1495, %v1502
        %v1504 = vrot.slane %v1499, 4
        %v1506 = vshrl.u32 %v1424, 16
        %v1508 = vrot.slane %v1506, 7
        %v1509 = vshll.u32 %v1424, 16
        %v1511 = vor.u32 %v1508, %v1509
        %v1512 = vrot.slane %v1508, 4
        %v1514 = vshrl.u32 %v1425, 16
        %v1516 = vrot.slane %v1514, 7
        %v1517 = vshll.u32 %v1425, 16
        %v1519 = vor.u32 %v1516, %v1517
        %v1520 = vsel %vm1433, %v1512, %v1519
        %v1521 = vrot.slane %v1516, 4
        %v1523 = vshrl.u32 %v1426, 16
        %v1525 = vrot.slane %v1523, 7
        %v1526 = vshll.u32 %v1426, 16
        %v1528 = vor.u32 %v1525, %v1526
        %v1529 = vsel %vm1433, %v1521, %v1528
        %v1530 = vrot.slane %v1525, 4
        %v1532 = vshrl.u32 %v1427, 16
        %v1534 = vrot.slane %v1532, 7
        %v1535 = vshll.u32 %v1427, 16
        %v1537 = vor.u32 %v1534, %v1535
        %v1538 = vsel %vm1433, %v1530, %v1537
        %v1539 = vrot.slane %v1534, 4
        %v1541 = vshrl.u32 %v1428, 16
        %v1543 = vrot.slane %v1541, 7
        %v1544 = vshll.u32 %v1428, 16
        %v1546 = vor.u32 %v1543, %v1544
        %v1547 = vsel %vm1433, %v1539, %v1546
        %v1548 = vrot.slane %v1543, 4
        %v1550 = vshrl.u32 %v1429, 16
        %v1552 = vrot.slane %v1550, 7
        %v1553 = vshll.u32 %v1429, 16
        %v1555 = vor.u32 %v1552, %v1553
        %v1556 = vsel %vm1433, %v1548, %v1555
        %v1557 = vrot.slane %v1552, 4
        %v1559 = vshrl.u32 %v1430, 16
        %v1561 = vrot.slane %v1559, 7
        %v1562 = vshll.u32 %v1430, 16
        %v1564 = vor.u32 %v1561, %v1562
        %v1565 = vsel %vm1433, %v1557, %v1564
        %v1566 = vrot.slane %v1561, 4
        %v1568 = vshrl.u32 %v1431, 16
        %v1570 = vrot.slane %v1568, 7
        %v1571 = vshll.u32 %v1431, 16
        %v1573 = vor.u32 %v1570, %v1571
        %v1574 = vsel %vm1433, %v1566, %v1573
        %v1575 = vrot.slane %v1570, 4
        %vm1594 = vcmask 519168
        %vm1595 = vsmask.f32 7938
        %vm1596 = vmand %vm1594, %vm1595
        %v1597 = vld [vmem:[#allocation2 + $0x10] sm:$0xf]
        %v1598 = vsel %vm1596, %v1440, %v1597
        %1599 = vst [vmem:[#allocation2 + $0x10] sm:$0xf] %v1598
        %vm1600 = vcmask 519168
        %1601 = vst.msk [vmem:[#allocation2 + $0x18] sm:$0xf] %vm1600, %v1449
        %1602 = vst.msk [vmem:[#allocation2 + $0x20] sm:$0xf] %vm1600, %v1458
        %1603 = vst.msk [vmem:[#allocation2 + $0x28] sm:$0xf] %vm1600, %v1467
        %1604 = vst.msk [vmem:[#allocation2 + $0x30] sm:$0xf] %vm1600, %v1476
        %1605 = vst.msk [vmem:[#allocation2 + $0x38] sm:$0xf] %vm1600, %v1485
        %1606 = vst.msk [vmem:[#allocation2 + $0x40] sm:$0xf] %vm1600, %v1494
        %1607 = vst.msk [vmem:[#allocation2 + $0x48] sm:$0xf] %vm1600, %v1503
        %vm1608 = vcmask 516096
        %vm1609 = vmand %vm1608, %vm1364
        %v1610 = vld [vmem:[#allocation2 + $0x50] sm:$0x1]
        %v1611 = vsel %vm1609, %v1504, %v1610
        %1612 = vst [vmem:[#allocation2 + $0x50] sm:$0x1] %v1611
        %v1613 = vld [vmem:[#allocation2 + $0x70] sm:$0xf]
        %v1614 = vsel %vm1596, %v1511, %v1613
        %1615 = vst [vmem:[#allocation2 + $0x70] sm:$0xf] %v1614
        %1616 = vst.msk [vmem:[#allocation2 + $0x78] sm:$0xf] %vm1600, %v1520
        %1617 = vst.msk [vmem:[#allocation2 + $0x80] sm:$0xf] %vm1600, %v1529
        %1618 = vst.msk [vmem:[#allocation2 + $0x88] sm:$0xf] %vm1600, %v1538
        %1619 = vst.msk [vmem:[#allocation2 + $0x90] sm:$0xf] %vm1600, %v1547
        %1620 = vst.msk [vmem:[#allocation2 + $0x98] sm:$0xf] %vm1600, %v1556
        %1621 = vst.msk [vmem:[#allocation2 + $0xa0] sm:$0xf] %vm1600, %v1565
        %1622 = vst.msk [vmem:[#allocation2 + $0xa8] sm:$0xf] %vm1600, %v1574
        %v1623 = vld [vmem:[#allocation2 + $0xb0] sm:$0x1]
        %v1624 = vsel %vm1609, %v1575, %v1623
        %1625 = vst [vmem:[#allocation2 + $0xb0] sm:$0x1] %v1624
        %v1634 = vunpack.c.l.b16 %v1223
        %v1635 = vunpack.c.h.b16 %v1223
        %v1636 = vunpack.c.l.b16 %v1224
        %v1637 = vunpack.c.h.b16 %v1224
        %v1638 = vunpack.c.l.b16 %v1225
        %v1639 = vunpack.c.h.b16 %v1225
        %v1640 = vunpack.c.l.b16 %v1226
        %v1641 = vunpack.c.h.b16 %v1226
        %v1642 = vunpack.c.l.b16 %v1227
        %v1643 = vunpack.c.h.b16 %v1227
        %v1644 = vunpack.c.l.b16 %v1228
        %v1645 = vunpack.c.h.b16 %v1228
        %v1646 = vunpack.c.l.b16 %v1229
        %v1647 = vunpack.c.h.b16 %v1229
        %v1648 = vunpack.c.l.b16 %v1230
        %v1649 = vunpack.c.h.b16 %v1230
        %v1650 = vpack.c.b16 %v1634, %v1634
        %v1651 = vpack.c.b16 %v1635, %v1635
        %v1652 = vpack.c.b16 %v1636, %v1636
        %v1653 = vpack.c.b16 %v1637, %v1637
        %v1654 = vpack.c.b16 %v1638, %v1638
        %v1655 = vpack.c.b16 %v1639, %v1639
        %v1656 = vpack.c.b16 %v1640, %v1640
        %v1657 = vpack.c.b16 %v1641, %v1641
        %v1658 = vpack.c.b16 %v1642, %v1642
        %v1659 = vpack.c.b16 %v1643, %v1643
        %v1660 = vpack.c.b16 %v1644, %v1644
        %v1661 = vpack.c.b16 %v1645, %v1645
        %v1662 = vpack.c.b16 %v1646, %v1646
        %v1663 = vpack.c.b16 %v1647, %v1647
        %v1664 = vpack.c.b16 %v1648, %v1648
        %v1665 = vpack.c.b16 %v1649, %v1649
        %1666 = vrot.lane.b32.xlu0 %v1650, 64
        %v1667 = vpop.permute.xlu0 %1666
        %1668 = vrot.lane.b32.xlu0 %v1651, 64
        %v1669 = vpop.permute.xlu0 %1668
        %1670 = vrot.lane.b32.xlu0 %v1652, 64
        %v1671 = vpop.permute.xlu0 %1670
        %1672 = vrot.lane.b32.xlu0 %v1653, 64
        %v1673 = vpop.permute.xlu0 %1672
        %1674 = vrot.lane.b32.xlu0 %v1654, 64
        %v1675 = vpop.permute.xlu0 %1674
        %1676 = vrot.lane.b32.xlu0 %v1655, 64
        %v1677 = vpop.permute.xlu0 %1676
        %1678 = vrot.lane.b32.xlu0 %v1656, 64
        %v1679 = vpop.permute.xlu0 %1678
        %1680 = vrot.lane.b32.xlu0 %v1657, 64
        %v1681 = vpop.permute.xlu0 %1680
        %1682 = vrot.lane.b32.xlu0 %v1658, 64
        %v1683 = vpop.permute.xlu0 %1682
        %1684 = vrot.lane.b32.xlu0 %v1659, 64
        %v1685 = vpop.permute.xlu0 %1684
        %1686 = vrot.lane.b32.xlu0 %v1660, 64
        %v1687 = vpop.permute.xlu0 %1686
        %1688 = vrot.lane.b32.xlu0 %v1661, 64
        %v1689 = vpop.permute.xlu0 %1688
        %1690 = vrot.lane.b32.xlu0 %v1662, 64
        %v1691 = vpop.permute.xlu0 %1690
        %1692 = vrot.lane.b32.xlu0 %v1663, 64
        %v1693 = vpop.permute.xlu0 %1692
        %1694 = vrot.lane.b32.xlu0 %v1664, 64
        %v1695 = vpop.permute.xlu0 %1694
        %1696 = vrot.lane.b32.xlu0 %v1665, 64
        %v1697 = vpop.permute.xlu0 %1696
        %vm1714 = vcmask 1043968
        %1715 = vst.msk [vmem:[#allocation2 + $0x10] sm:$0xf] %vm1714, %v1667
        %1716 = vst.msk [vmem:[#allocation2 + $0x18] sm:$0xf] %vm1714, %v1669
        %1717 = vst.msk [vmem:[#allocation2 + $0x20] sm:$0xf] %vm1714, %v1671
        %1718 = vst.msk [vmem:[#allocation2 + $0x28] sm:$0xf] %vm1714, %v1673
        %1719 = vst.msk [vmem:[#allocation2 + $0x30] sm:$0xf] %vm1714, %v1675
        %1720 = vst.msk [vmem:[#allocation2 + $0x38] sm:$0xf] %vm1714, %v1677
        %1721 = vst.msk [vmem:[#allocation2 + $0x40] sm:$0xf] %vm1714, %v1679
        %1722 = vst.msk [vmem:[#allocation2 + $0x48] sm:$0xf] %vm1714, %v1681
        %1723 = vst.msk [vmem:[#allocation2 + $0x70] sm:$0xf] %vm1714, %v1683
        %1724 = vst.msk [vmem:[#allocation2 + $0x78] sm:$0xf] %vm1714, %v1685
        %1725 = vst.msk [vmem:[#allocation2 + $0x80] sm:$0xf] %vm1714, %v1687
        %1726 = vst.msk [vmem:[#allocation2 + $0x88] sm:$0xf] %vm1714, %v1689
        %1727 = vst.msk [vmem:[#allocation2 + $0x90] sm:$0xf] %vm1714, %v1691
        %1728 = vst.msk [vmem:[#allocation2 + $0x98] sm:$0xf] %vm1714, %v1693
        %1729 = vst.msk [vmem:[#allocation2 + $0xa0] sm:$0xf] %vm1714, %v1695
        %1730 = vst.msk [vmem:[#allocation2 + $0xa8] sm:$0xf] %vm1714, %v1697
        %v1739 = vunpack.c.l.b16 %v1351
        %v1740 = vunpack.c.h.b16 %v1351
        %v1741 = vunpack.c.l.b16 %v1352
        %v1742 = vunpack.c.h.b16 %v1352
        %v1743 = vunpack.c.l.b16 %v1353
        %v1744 = vunpack.c.h.b16 %v1353
        %v1745 = vunpack.c.l.b16 %v1354
        %v1746 = vunpack.c.h.b16 %v1354
        %v1747 = vunpack.c.l.b16 %v1355
        %v1748 = vunpack.c.h.b16 %v1355
        %v1749 = vunpack.c.l.b16 %v1356
        %v1750 = vunpack.c.h.b16 %v1356
        %v1751 = vunpack.c.l.b16 %v1357
        %v1752 = vunpack.c.h.b16 %v1357
        %v1753 = vunpack.c.l.b16 %v1358
        %v1754 = vunpack.c.h.b16 %v1358
        %v1755 = vpack.c.b16 %v1739, %v1739
        %v1756 = vpack.c.b16 %v1740, %v1740
        %v1757 = vpack.c.b16 %v1741, %v1741
        %v1758 = vpack.c.b16 %v1742, %v1742
        %v1759 = vpack.c.b16 %v1743, %v1743
        %v1760 = vpack.c.b16 %v1744, %v1744
        %v1761 = vpack.c.b16 %v1745, %v1745
        %v1762 = vpack.c.b16 %v1746, %v1746
        %v1763 = vpack.c.b16 %v1747, %v1747
        %v1764 = vpack.c.b16 %v1748, %v1748
        %v1765 = vpack.c.b16 %v1749, %v1749
        %v1766 = vpack.c.b16 %v1750, %v1750
        %v1767 = vpack.c.b16 %v1751, %v1751
        %v1768 = vpack.c.b16 %v1752, %v1752
        %v1769 = vpack.c.b16 %v1753, %v1753
        %v1770 = vpack.c.b16 %v1754, %v1754
        %vm1771 = vsmask.f32 3328
        %vm1772 = vsmask.f32 7440
        %vm1773 = vmor %vm1771, %vm1772
        %v1775 = vshll.u32 %v1755, 16
        %v1777 = vrot.slane %v1775, 5
        %v1778 = vshrl.u32 %v1755, 16
        %v1780 = vrot.slane %v1778, 4
        %v1781 = vor.u32 %v1780, %v1777
        %v1782 = vrot.slane %v1781, 4
        %v1784 = vshll.u32 %v1756, 16
        %v1786 = vrot.slane %v1784, 5
        %v1787 = vsel %vm1773, %v1782, %v1786
        %v1788 = vshrl.u32 %v1756, 16
        %v1790 = vrot.slane %v1788, 4
        %v1791 = vor.u32 %v1790, %v1786
        %v1792 = vrot.slane %v1791, 4
        %v1794 = vshll.u32 %v1757, 16
        %v1796 = vrot.slane %v1794, 5
        %v1797 = vsel %vm1773, %v1792, %v1796
        %v1798 = vshrl.u32 %v1757, 16
        %v1800 = vrot.slane %v1798, 4
        %v1801 = vor.u32 %v1800, %v1796
        %v1802 = vrot.slane %v1801, 4
        %v1804 = vshll.u32 %v1758, 16
        %v1806 = vrot.slane %v1804, 5
        %v1807 = vsel %vm1773, %v1802, %v1806
        %v1808 = vshrl.u32 %v1758, 16
        %v1810 = vrot.slane %v1808, 4
        %v1811 = vor.u32 %v1810, %v1806
        %v1812 = vrot.slane %v1811, 4
        %v1814 = vshll.u32 %v1759, 16
        %v1816 = vrot.slane %v1814, 5
        %v1817 = vsel %vm1773, %v1812, %v1816
        %v1818 = vshrl.u32 %v1759, 16
        %v1820 = vrot.slane %v1818, 4
        %v1821 = vor.u32 %v1820, %v1816
        %v1822 = vrot.slane %v1821, 4
        %v1824 = vshll.u32 %v1760, 16
        %v1826 = vrot.slane %v1824, 5
        %v1827 = vsel %vm1773, %v1822, %v1826
        %v1828 = vshrl.u32 %v1760, 16
        %v1830 = vrot.slane %v1828, 4
        %v1831 = vor.u32 %v1830, %v1826
        %v1832 = vrot.slane %v1831, 4
        %v1834 = vshll.u32 %v1761, 16
        %v1836 = vrot.slane %v1834, 5
        %v1837 = vsel %vm1773, %v1832, %v1836
        %v1838 = vshrl.u32 %v1761, 16
        %v1840 = vrot.slane %v1838, 4
        %v1841 = vor.u32 %v1840, %v1836
        %v1842 = vrot.slane %v1841, 4
        %v1844 = vshll.u32 %v1762, 16
        %v1846 = vrot.slane %v1844, 5
        %v1847 = vsel %vm1773, %v1842, %v1846
        %v1848 = vshrl.u32 %v1762, 16
        %v1850 = vrot.slane %v1848, 4
        %v1851 = vor.u32 %v1850, %v1846
        %v1852 = vrot.slane %v1851, 4
        %v1854 = vshll.u32 %v1763, 16
        %v1856 = vrot.slane %v1854, 5
        %v1857 = vshrl.u32 %v1763, 16
        %v1859 = vrot.slane %v1857, 4
        %v1860 = vor.u32 %v1859, %v1856
        %v1861 = vrot.slane %v1860, 4
        %v1863 = vshll.u32 %v1764, 16
        %v1865 = vrot.slane %v1863, 5
        %v1866 = vsel %vm1773, %v1861, %v1865
        %v1867 = vshrl.u32 %v1764, 16
        %v1869 = vrot.slane %v1867, 4
        %v1870 = vor.u32 %v1869, %v1865
        %v1871 = vrot.slane %v1870, 4
        %v1873 = vshll.u32 %v1765, 16
        %v1875 = vrot.slane %v1873, 5
        %v1876 = vsel %vm1773, %v1871, %v1875
        %v1877 = vshrl.u32 %v1765, 16
        %v1879 = vrot.slane %v1877, 4
        %v1880 = vor.u32 %v1879, %v1875
        %v1881 = vrot.slane %v1880, 4
        %v1883 = vshll.u32 %v1766, 16
        %v1885 = vrot.slane %v1883, 5
        %v1886 = vsel %vm1773, %v1881, %v1885
        %v1887 = vshrl.u32 %v1766, 16
        %v1889 = vrot.slane %v1887, 4
        %v1890 = vor.u32 %v1889, %v1885
        %v1891 = vrot.slane %v1890, 4
        %v1893 = vshll.u32 %v1767, 16
        %v1895 = vrot.slane %v1893, 5
        %v1896 = vsel %vm1773, %v1891, %v1895
        %v1897 = vshrl.u32 %v1767, 16
        %v1899 = vrot.slane %v1897, 4
        %v1900 = vor.u32 %v1899, %v1895
        %v1901 = vrot.slane %v1900, 4
        %v1903 = vshll.u32 %v1768, 16
        %v1905 = vrot.slane %v1903, 5
        %v1906 = vsel %vm1773, %v1901, %v1905
        %v1907 = vshrl.u32 %v1768, 16
        %v1909 = vrot.slane %v1907, 4
        %v1910 = vor.u32 %v1909, %v1905
        %v1911 = vrot.slane %v1910, 4
        %v1913 = vshll.u32 %v1769, 16
        %v1915 = vrot.slane %v1913, 5
        %v1916 = vsel %vm1773, %v1911, %v1915
        %v1917 = vshrl.u32 %v1769, 16
        %v1919 = vrot.slane %v1917, 4
        %v1920 = vor.u32 %v1919, %v1915
        %v1921 = vrot.slane %v1920, 4
        %v1923 = vshll.u32 %v1770, 16
        %v1925 = vrot.slane %v1923, 5
        %v1926 = vsel %vm1773, %v1921, %v1925
        %v1927 = vshrl.u32 %v1770, 16
        %v1929 = vrot.slane %v1927, 4
        %v1930 = vor.u32 %v1929, %v1925
        %v1931 = vrot.slane %v1930, 4
        %vm1950 = vcmask 519171
        %vm1951 = vmand %vm1950, %vm1378
        %v1952 = vld [vmem:[#allocation2 + $0xc] sm:$0x8]
        %v1953 = vsel %vm1951, %v1777, %v1952
        %1954 = vst [vmem:[#allocation2 + $0xc] sm:$0x8] %v1953
        %1955 = vst.msk [vmem:[#allocation2 + $0x14] sm:$0xf] %vm1600, %v1787
        %1956 = vst.msk [vmem:[#allocation2 + $0x1c] sm:$0xf] %vm1600, %v1797
        %1957 = vst.msk [vmem:[#allocation2 + $0x24] sm:$0xf] %vm1600, %v1807
        %1958 = vst.msk [vmem:[#allocation2 + $0x2c] sm:$0xf] %vm1600, %v1817
        %1959 = vst.msk [vmem:[#allocation2 + $0x34] sm:$0xf] %vm1600, %v1827
        %1960 = vst.msk [vmem:[#allocation2 + $0x3c] sm:$0xf] %vm1600, %v1837
        %1961 = vst.msk [vmem:[#allocation2 + $0x44] sm:$0xf] %vm1600, %v1847
        %vm1962 = vmand %vm1594, %vm1771
        %v1963 = vld [vmem:[#allocation2 + $0x4c] sm:$0xf]
        %v1964 = vsel %vm1962, %v1852, %v1963
        %1965 = vst [vmem:[#allocation2 + $0x4c] sm:$0xf] %v1964
        %v1966 = vld [vmem:[#allocation2 + $0x6c] sm:$0x8]
        %v1967 = vsel %vm1951, %v1856, %v1966
        %1968 = vst [vmem:[#allocation2 + $0x6c] sm:$0x8] %v1967
        %1969 = vst.msk [vmem:[#allocation2 + $0x74] sm:$0xf] %vm1600, %v1866
        %1970 = vst.msk [vmem:[#allocation2 + $0x7c] sm:$0xf] %vm1600, %v1876
        %1971 = vst.msk [vmem:[#allocation2 + $0x84] sm:$0xf] %vm1600, %v1886
        %1972 = vst.msk [vmem:[#allocation2 + $0x8c] sm:$0xf] %vm1600, %v1896
        %1973 = vst.msk [vmem:[#allocation2 + $0x94] sm:$0xf] %vm1600, %v1906
        %1974 = vst.msk [vmem:[#allocation2 + $0x9c] sm:$0xf] %vm1600, %v1916
        %1975 = vst.msk [vmem:[#allocation2 + $0xa4] sm:$0xf] %vm1600, %v1926
        %v1976 = vld [vmem:[#allocation2 + $0xac] sm:$0xf]
        %v1977 = vsel %vm1962, %v1931, %v1976
        %1978 = vst [vmem:[#allocation2 + $0xac] sm:$0xf] %v1977
        %v1979 = vld [vmem:[#allocation2 + $0x8] sm:$0xff]
        %v1980 = vld [vmem:[#allocation2 + $0x10] sm:$0xff]
        %v1981 = vld [vmem:[#allocation2 + $0x18] sm:$0xff]
        %v1982 = vld [vmem:[#allocation2 + $0x20] sm:$0xff]
        %v1983 = vld [vmem:[#allocation2 + $0x28] sm:$0xff]
        %v1984 = vld [vmem:[#allocation2 + $0x30] sm:$0xff]
        %v1985 = vld [vmem:[#allocation2 + $0x38] sm:$0xff]
        %v1986 = vld [vmem:[#allocation2 + $0x40] sm:$0xff]
        %v1987 = vld [vmem:[#allocation2 + $0x68] sm:$0xff]
        %v1988 = vld [vmem:[#allocation2 + $0x70] sm:$0xff]
        %v1989 = vld [vmem:[#allocation2 + $0x78] sm:$0xff]
        %v1990 = vld [vmem:[#allocation2 + $0x80] sm:$0xff]
        %v1991 = vld [vmem:[#allocation2 + $0x88] sm:$0xff]
        %v1992 = vld [vmem:[#allocation2 + $0x90] sm:$0xff]
        %v1993 = vld [vmem:[#allocation2 + $0x98] sm:$0xff]
        %v1994 = vld [vmem:[#allocation2 + $0xa0] sm:$0xff]
        %v1995 = vld [vmem:[#allocation10] sm:$0xf]
        %v1996 = vld [vmem:[#allocation10 + $0x4] sm:$0xf]
        %v1997 = vld [vmem:[#allocation10 + $0x8] sm:$0xf]
        %v1998 = vld [vmem:[#allocation10 + $0xc] sm:$0xf]
        %v1999 = vld [vmem:[#allocation10 + $0x10] sm:$0xf]
        %v2000 = vld [vmem:[#allocation10 + $0x14] sm:$0xf]
        %v2001 = vld [vmem:[#allocation10 + $0x18] sm:$0xf]
        %v2002 = vld [vmem:[#allocation10 + $0x1c] sm:$0xf]
        %v2003 = vld [vmem:[#allocation10 + $0x20] sm:$0xf]
        %v2004 = vld [vmem:[#allocation10 + $0x24] sm:$0xf]
        %v2005 = vld [vmem:[#allocation10 + $0x28] sm:$0xf]
        %v2006 = vld [vmem:[#allocation10 + $0x2c] sm:$0xf]
        %v2007 = vld [vmem:[#allocation10 + $0x30] sm:$0xf]
        %v2008 = vld [vmem:[#allocation10 + $0x34] sm:$0xf]
        %v2009 = vld [vmem:[#allocation10 + $0x38] sm:$0xf]
        %v2010 = vld [vmem:[#allocation10 + $0x3c] sm:$0xf]
        %v2011 = vld [vmem:[#allocation10 + $0x40] sm:$0xf]
        %v2012 = vld [vmem:[#allocation10 + $0x44] sm:$0xf]
        %v2013 = vld [vmem:[#allocation10 + $0x48] sm:$0xf]
        %v2014 = vld [vmem:[#allocation10 + $0x4c] sm:$0xf]
        %v2015 = vld [vmem:[#allocation10 + $0x50] sm:$0xf]
        %v2016 = vld [vmem:[#allocation10 + $0x54] sm:$0xf]
        %v2017 = vld [vmem:[#allocation10 + $0x58] sm:$0xf]
        %v2018 = vld [vmem:[#allocation10 + $0x5c] sm:$0xf]
        %v2019 = vld [vmem:[#allocation2 + $0x48] sm:$0xff]
        %v2020 = vld [vmem:[#allocation2 + $0xa8] sm:$0xff]
        %s2021 = scalar_lea.vmem [#allocation10], 96
        %v2022 = vld [vmem:[%s2021] sm:$0xf]
        %v2023 = vld [vmem:[%s2021 + $0x4] sm:$0xf]
        %v2024 = vld [vmem:[%s2021 + $0x8] sm:$0xf]
        %v2025 = vld [vmem:[%s2021 + $0xc] sm:$0xf]
        %v2026 = vld [vmem:[%s2021 + $0x10] sm:$0xf]
        %v2027 = vld [vmem:[%s2021 + $0x14] sm:$0xf]
        %v2028 = vld [vmem:[%s2021 + $0x18] sm:$0xf]
        %v2029 = vld [vmem:[%s2021 + $0x1c] sm:$0xf]
        %v2030 = vld [vmem:[%s2021 + $0x20] sm:$0xf]
        %v2031 = vld [vmem:[%s2021 + $0x24] sm:$0xf]
        %v2032 = vld [vmem:[%s2021 + $0x28] sm:$0xf]
        %v2033 = vld [vmem:[%s2021 + $0x2c] sm:$0xf]
        %v2034 = vld [vmem:[%s2021 + $0x30] sm:$0xf]
        %v2035 = vld [vmem:[%s2021 + $0x34] sm:$0xf]
        %v2036 = vld [vmem:[%s2021 + $0x38] sm:$0xf]
        %v2037 = vld [vmem:[%s2021 + $0x3c] sm:$0xf]
        %v2038 = vld [vmem:[%s2021 + $0x40] sm:$0xf]
        %v2039 = vld [vmem:[%s2021 + $0x44] sm:$0xf]
        %v2040 = vld [vmem:[%s2021 + $0x48] sm:$0xf]
        %v2041 = vld [vmem:[%s2021 + $0x4c] sm:$0xf]
        %v2042 = vld [vmem:[%s2021 + $0x50] sm:$0xf]
        %v2043 = vld [vmem:[%s2021 + $0x54] sm:$0xf]
        %v2044 = vld [vmem:[%s2021 + $0x58] sm:$0xf]
        %v2045 = vld [vmem:[%s2021 + $0x5c] sm:$0xf]
        %v2062 = vunpack.c.l.b16 %v1980
        %v2063 = vunpack.c.h.b16 %v1980
        %v2064 = vunpack.c.l.b16 %v1981
        %v2065 = vunpack.c.h.b16 %v1981
        %v2066 = vunpack.c.l.b16 %v1982
        %v2067 = vunpack.c.h.b16 %v1982
        %v2068 = vunpack.c.l.b16 %v1983
        %v2069 = vunpack.c.h.b16 %v1983
        %v2070 = vunpack.c.l.b16 %v1984
        %v2071 = vunpack.c.h.b16 %v1984
        %v2072 = vunpack.c.l.b16 %v1985
        %v2073 = vunpack.c.h.b16 %v1985
        %v2074 = vunpack.c.l.b16 %v1986
        %v2075 = vunpack.c.h.b16 %v1986
        %v2076 = vunpack.c.l.b16 %v2019
        %v2077 = vunpack.c.h.b16 %v2019
        %v2078 = vunpack.c.l.b16 %v1988
        %v2079 = vunpack.c.h.b16 %v1988
        %v2080 = vunpack.c.l.b16 %v1989
        %v2081 = vunpack.c.h.b16 %v1989
        %v2082 = vunpack.c.l.b16 %v1990
        %v2083 = vunpack.c.h.b16 %v1990
        %v2084 = vunpack.c.l.b16 %v1991
        %v2085 = vunpack.c.h.b16 %v1991
        %v2086 = vunpack.c.l.b16 %v1992
        %v2087 = vunpack.c.h.b16 %v1992
        %v2088 = vunpack.c.l.b16 %v1993
        %v2089 = vunpack.c.h.b16 %v1993
        %v2090 = vunpack.c.l.b16 %v1994
        %v2091 = vunpack.c.h.b16 %v1994
        %v2092 = vunpack.c.l.b16 %v2020
        %v2093 = vunpack.c.h.b16 %v2020
        %v2094 = vpack.c.b16 %v2064, %v2062
        %v2095 = vpack.c.b16 %v2065, %v2063
        %v2096 = vpack.c.b16 %v2068, %v2066
        %v2097 = vpack.c.b16 %v2069, %v2067
        %v2098 = vpack.c.b16 %v2072, %v2070
        %v2099 = vpack.c.b16 %v2073, %v2071
        %v2100 = vpack.c.b16 %v2076, %v2074
        %v2101 = vpack.c.b16 %v2077, %v2075
        %v2102 = vpack.c.b16 %v2080, %v2078
        %v2103 = vpack.c.b16 %v2081, %v2079
        %v2104 = vpack.c.b16 %v2084, %v2082
        %v2105 = vpack.c.b16 %v2085, %v2083
        %v2106 = vpack.c.b16 %v2088, %v2086
        %v2107 = vpack.c.b16 %v2089, %v2087
        %v2108 = vpack.c.b16 %v2092, %v2090
        %v2109 = vpack.c.b16 %v2093, %v2091
        %v2142 = vunpack.c.l.b16 %v2022
        %v2143 = vunpack.c.l.b16 %v2023
        %v2144 = vunpack.c.l.b16 %v2024
        %v2145 = vunpack.c.l.b16 %v2025
        %v2146 = vunpack.c.l.b16 %v2026
        %v2147 = vunpack.c.l.b16 %v2027
        %v2148 = vunpack.c.l.b16 %v2028
        %v2149 = vunpack.c.l.b16 %v2029
        %v2150 = vunpack.c.l.b16 %v2030
        %v2151 = vunpack.c.l.b16 %v2031
        %v2152 = vunpack.c.l.b16 %v2032
        %v2153 = vunpack.c.l.b16 %v2033
        %v2154 = vunpack.c.l.b16 %v2034
        %v2155 = vunpack.c.l.b16 %v2035
        %v2156 = vunpack.c.l.b16 %v2036
        %v2157 = vunpack.c.l.b16 %v2037
        %v2158 = vunpack.c.l.b16 %v2038
        %v2159 = vunpack.c.l.b16 %v2039
        %v2160 = vunpack.c.l.b16 %v2040
        %v2161 = vunpack.c.l.b16 %v2041
        %v2162 = vunpack.c.l.b16 %v2042
        %v2163 = vunpack.c.l.b16 %v2043
        %v2164 = vunpack.c.l.b16 %v2044
        %v2165 = vunpack.c.l.b16 %v2045
        %v2166 = vpack.c.b16 %v2143, %v2142
        %v2167 = vpack.c.b16 %v2145, %v2144
        %v2168 = vpack.c.b16 %v2147, %v2146
        %v2169 = vpack.c.b16 %v2149, %v2148
        %v2170 = vpack.c.b16 %v2151, %v2150
        %v2171 = vpack.c.b16 %v2153, %v2152
        %v2172 = vpack.c.b16 %v2155, %v2154
        %v2173 = vpack.c.b16 %v2157, %v2156
        %v2174 = vpack.c.b16 %v2159, %v2158
        %v2175 = vpack.c.b16 %v2161, %v2160
        %v2176 = vpack.c.b16 %v2163, %v2162
        %v2177 = vpack.c.b16 %v2165, %v2164
        %v2191 = vsel %vm802, %v2095, 0
        %v2194 = vsel %vm802, %v2097, 0
        %v2197 = vsel %vm802, %v2099, 0
        %v2200 = vsel %vm802, %v2101, 0
        %v2203 = vsel %vm802, %v2103, 0
        %v2206 = vsel %vm802, %v2105, 0
        %v2209 = vsel %vm802, %v2107, 0
        %v2212 = vsel %vm802, %v2109, 0
        %2214 = vmatprep.subr.bf16.mxu0 0
        %2215 = vmatpush1.bf16.msra.mxu0 %v2173
        %2216 = vmatprep.subr.bf16.mxu0 0
        %2217 = vmatpush1.bf16.msra.mxu0 %v2172
        %2218 = vmatprep.subr.bf16.mxu0 0
        %2219 = vmatpush1.bf16.msra.mxu0 %v2171
        %2220 = vmatprep.subr.bf16.mxu0 0
        %2221 = vmatpush1.bf16.msra.mxu0 %v2170
        %2222 = vmatprep.subr.bf16.mxu0 0
        %2223 = vmatpush1.bf16.msra.mxu0 %v2169
        %2224 = vmatprep.subr.bf16.mxu0 0
        %2225 = vmatpush1.bf16.msra.mxu0 %v2168
        %2226 = vmatprep.subr.bf16.mxu0 0
        %2227 = vmatpush1.bf16.msra.mxu0 %v2167
        %2228 = vmatprep.subr.bf16.mxu0 0
        %2229 = vmatpush1.bf16.msra.mxu0 %v2166
        %2230 = vmatprep.subr.bf16.mxu0 0
        %2231 = vmatpush2.bf16.msra.mxu0 0
        %2232 = vmatprep.subr.bf16.mxu0 0
        %2233 = vmatpush2.bf16.msra.mxu0 0
        %2234 = vmatprep.subr.bf16.mxu0 0
        %2235 = vmatpush2.bf16.msra.mxu0 0
        %2236 = vmatprep.subr.bf16.mxu0 0
        %2237 = vmatpush2.bf16.msra.mxu0 0
        %2238 = vmatprep.subr.bf16.mxu0 0
        %2239 = vmatpush2.bf16.msra.mxu0 %v2177
        %2240 = vmatprep.subr.bf16.mxu0 0
        %2241 = vmatpush2.bf16.msra.mxu0 %v2176
        %2242 = vmatprep.subr.bf16.mxu0 0
        %2243 = vmatpush2.bf16.msra.mxu0 %v2175
        %2244 = vmatprep.subr.bf16.mxu0 0
        %2245 = vmatpush2.bf16.msra.mxu0 %v2174
        %2246 = vmatprep.mubr.bf16.mxu0 %v2191
        %2247 = vmatmul.mubr.bf16.gmra.mxu0 %v2094
        %v2248 = vpop.f32.mrf.mxu0
        %v2249 = vadd.f32 0.0, %v2248
        %v2250 = vpop.f32.mrf.mxu0
        %v2251 = vpop.f32.mrf.mxu0
        %v2252 = vadd.f32 0.0, %v2251
        %v2253 = vpop.f32.mrf.mxu0
        %2254 = vmatprep.mubr.bf16.mxu0 %v2194
        %2255 = vmatmul.mubr.bf16.gmra.mxu0 %v2096
        %v2256 = vpop.f32.mrf.mxu0
        %v2257 = vadd.f32 0.0, %v2256
        %v2258 = vpop.f32.mrf.mxu0
        %v2259 = vpop.f32.mrf.mxu0
        %v2260 = vadd.f32 0.0, %v2259
        %v2261 = vpop.f32.mrf.mxu0
        %2262 = vmatprep.mubr.bf16.mxu0 %v2197
        %2263 = vmatmul.mubr.bf16.gmra.mxu0 %v2098
        %v2264 = vpop.f32.mrf.mxu0
        %v2265 = vadd.f32 0.0, %v2264
        %v2266 = vpop.f32.mrf.mxu0
        %v2267 = vpop.f32.mrf.mxu0
        %v2268 = vadd.f32 0.0, %v2267
        %v2269 = vpop.f32.mrf.mxu0
        %2270 = vmatprep.mubr.bf16.mxu0 %v2200
        %2271 = vmatmul.mubr.bf16.gmra.mxu0 %v2100
        %v2272 = vpop.f32.mrf.mxu0
        %v2273 = vadd.f32 0.0, %v2272
        %v2274 = vpop.f32.mrf.mxu0
        %v2275 = vpop.f32.mrf.mxu0
        %v2276 = vadd.f32 0.0, %v2275
        %v2277 = vpop.f32.mrf.mxu0
        %2278 = vmatprep.mubr.bf16.mxu0 %v2203
        %2279 = vmatmul.mubr.bf16.gmra.mxu0 %v2102
        %v2280 = vpop.f32.mrf.mxu0
        %v2281 = vadd.f32 0.0, %v2280
        %v2282 = vpop.f32.mrf.mxu0
        %v2283 = vpop.f32.mrf.mxu0
        %v2284 = vadd.f32 0.0, %v2283
        %v2285 = vpop.f32.mrf.mxu0
        %2286 = vmatprep.mubr.bf16.mxu0 %v2206
        %2287 = vmatmul.mubr.bf16.gmra.mxu0 %v2104
        %v2288 = vpop.f32.mrf.mxu0
        %v2289 = vadd.f32 0.0, %v2288
        %v2290 = vpop.f32.mrf.mxu0
        %v2291 = vpop.f32.mrf.mxu0
        %v2292 = vadd.f32 0.0, %v2291
        %v2293 = vpop.f32.mrf.mxu0
        %2294 = vmatprep.mubr.bf16.mxu0 %v2209
        %2295 = vmatmul.mubr.bf16.gmra.mxu0 %v2106
        %v2296 = vpop.f32.mrf.mxu0
        %v2297 = vadd.f32 0.0, %v2296
        %v2298 = vpop.f32.mrf.mxu0
        %v2299 = vpop.f32.mrf.mxu0
        %v2300 = vadd.f32 0.0, %v2299
        %v2301 = vpop.f32.mrf.mxu0
        %2302 = vmatprep.mubr.bf16.mxu0 %v2212
        %2303 = vmatmul.mubr.bf16.gmra.mxu0 %v2108
        %v2304 = vpop.f32.mrf.mxu0
        %v2305 = vadd.f32 0.0, %v2304
        %v2306 = vpop.f32.mrf.mxu0
        %v2307 = vpop.f32.mrf.mxu0
        %v2308 = vadd.f32 0.0, %v2307
        %v2309 = vpop.f32.mrf.mxu0
        %2310 = vdwg.mxu0
        %v2313 = vunpack.c.l.b16 %v1979
        %v2314 = vunpack.c.h.b16 %v1979
        %v2315 = vunpack.c.l.b16 %v1987
        %v2316 = vunpack.c.h.b16 %v1987
        %v2317 = vpack.c.b16 %v2062, %v2313
        %v2318 = vpack.c.b16 %v2063, %v2314
        %v2319 = vpack.c.b16 %v2066, %v2064
        %v2320 = vpack.c.b16 %v2067, %v2065
        %v2321 = vpack.c.b16 %v2070, %v2068
        %v2322 = vpack.c.b16 %v2071, %v2069
        %v2323 = vpack.c.b16 %v2074, %v2072
        %v2324 = vpack.c.b16 %v2075, %v2073
        %v2325 = vpack.c.b16 %v2078, %v2315
        %v2326 = vpack.c.b16 %v2079, %v2316
        %v2327 = vpack.c.b16 %v2082, %v2080
        %v2328 = vpack.c.b16 %v2083, %v2081
        %v2329 = vpack.c.b16 %v2086, %v2084
        %v2330 = vpack.c.b16 %v2087, %v2085
        %v2331 = vpack.c.b16 %v2090, %v2088
        %v2332 = vpack.c.b16 %v2091, %v2089
        %v2365 = vunpack.c.l.b16 %v1995
        %v2366 = vunpack.c.l.b16 %v1996
        %v2367 = vunpack.c.l.b16 %v1997
        %v2368 = vunpack.c.l.b16 %v1998
        %v2369 = vunpack.c.l.b16 %v1999
        %v2370 = vunpack.c.l.b16 %v2000
        %v2371 = vunpack.c.l.b16 %v2001
        %v2372 = vunpack.c.l.b16 %v2002
        %v2373 = vunpack.c.l.b16 %v2003
        %v2374 = vunpack.c.l.b16 %v2004
        %v2375 = vunpack.c.l.b16 %v2005
        %v2376 = vunpack.c.l.b16 %v2006
        %v2377 = vunpack.c.l.b16 %v2007
        %v2378 = vunpack.c.l.b16 %v2008
        %v2379 = vunpack.c.l.b16 %v2009
        %v2380 = vunpack.c.l.b16 %v2010
        %v2381 = vunpack.c.l.b16 %v2011
        %v2382 = vunpack.c.l.b16 %v2012
        %v2383 = vunpack.c.l.b16 %v2013
        %v2384 = vunpack.c.l.b16 %v2014
        %v2385 = vunpack.c.l.b16 %v2015
        %v2386 = vunpack.c.l.b16 %v2016
        %v2387 = vunpack.c.l.b16 %v2017
        %v2388 = vunpack.c.l.b16 %v2018
        %v2389 = vpack.c.b16 %v2366, %v2365
        %v2390 = vpack.c.b16 %v2368, %v2367
        %v2391 = vpack.c.b16 %v2370, %v2369
        %v2392 = vpack.c.b16 %v2372, %v2371
        %v2393 = vpack.c.b16 %v2374, %v2373
        %v2394 = vpack.c.b16 %v2376, %v2375
        %v2395 = vpack.c.b16 %v2378, %v2377
        %v2396 = vpack.c.b16 %v2380, %v2379
        %v2397 = vpack.c.b16 %v2382, %v2381
        %v2398 = vpack.c.b16 %v2384, %v2383
        %v2399 = vpack.c.b16 %v2386, %v2385
        %v2400 = vpack.c.b16 %v2388, %v2387
        %v2414 = vsel %vm802, %v2318, 0
        %v2417 = vsel %vm802, %v2320, 0
        %v2420 = vsel %vm802, %v2322, 0
        %v2423 = vsel %vm802, %v2324, 0
        %v2426 = vsel %vm802, %v2326, 0
        %v2429 = vsel %vm802, %v2328, 0
        %v2432 = vsel %vm802, %v2330, 0
        %v2435 = vsel %vm802, %v2332, 0
        %2437 = vmatprep.subr.bf16.mxu0 0
        %2438 = vmatpush1.bf16.msra.mxu0 %v2396
        %2439 = vmatprep.subr.bf16.mxu0 0
        %2440 = vmatpush1.bf16.msra.mxu0 %v2395
        %2441 = vmatprep.subr.bf16.mxu0 0
        %2442 = vmatpush1.bf16.msra.mxu0 %v2394
        %2443 = vmatprep.subr.bf16.mxu0 0
        %2444 = vmatpush1.bf16.msra.mxu0 %v2393
        %2445 = vmatprep.subr.bf16.mxu0 0
        %2446 = vmatpush1.bf16.msra.mxu0 %v2392
        %2447 = vmatprep.subr.bf16.mxu0 0
        %2448 = vmatpush1.bf16.msra.mxu0 %v2391
        %2449 = vmatprep.subr.bf16.mxu0 0
        %2450 = vmatpush1.bf16.msra.mxu0 %v2390
        %2451 = vmatprep.subr.bf16.mxu0 0
        %2452 = vmatpush1.bf16.msra.mxu0 %v2389
        %2453 = vmatprep.subr.bf16.mxu0 0
        %2454 = vmatpush2.bf16.msra.mxu0 0
        %2455 = vmatprep.subr.bf16.mxu0 0
        %2456 = vmatpush2.bf16.msra.mxu0 0
        %2457 = vmatprep.subr.bf16.mxu0 0
        %2458 = vmatpush2.bf16.msra.mxu0 0
        %2459 = vmatprep.subr.bf16.mxu0 0
        %2460 = vmatpush2.bf16.msra.mxu0 0
        %2461 = vmatprep.subr.bf16.mxu0 0
        %2462 = vmatpush2.bf16.msra.mxu0 %v2400
        %2463 = vmatprep.subr.bf16.mxu0 0
        %2464 = vmatpush2.bf16.msra.mxu0 %v2399
        %2465 = vmatprep.subr.bf16.mxu0 0
        %2466 = vmatpush2.bf16.msra.mxu0 %v2398
        %2467 = vmatprep.subr.bf16.mxu0 0
        %2468 = vmatpush2.bf16.msra.mxu0 %v2397
        %2469 = vmatprep.mubr.bf16.mxu0 %v2414
        %2470 = vmatmul.mubr.bf16.gmra.mxu0 %v2317
        %v2471 = vpop.f32.mrf.mxu0
        %v2472 = vadd.f32 %v2249, %v2471
        %v2473 = vpop.f32.mrf.mxu0
        %v2474 = vpop.f32.mrf.mxu0
        %v2475 = vadd.f32 %v2252, %v2474
        %v2476 = vpop.f32.mrf.mxu0
        %2477 = vmatprep.mubr.bf16.mxu0 %v2417
        %2478 = vmatmul.mubr.bf16.gmra.mxu0 %v2319
        %v2479 = vpop.f32.mrf.mxu0
        %v2480 = vadd.f32 %v2257, %v2479
        %v2481 = vpop.f32.mrf.mxu0
        %v2482 = vpop.f32.mrf.mxu0
        %v2483 = vadd.f32 %v2260, %v2482
        %v2484 = vpop.f32.mrf.mxu0
        %2485 = vmatprep.mubr.bf16.mxu0 %v2420
        %2486 = vmatmul.mubr.bf16.gmra.mxu0 %v2321
        %v2487 = vpop.f32.mrf.mxu0
        %v2488 = vadd.f32 %v2265, %v2487
        %v2489 = vpop.f32.mrf.mxu0
        %v2490 = vpop.f32.mrf.mxu0
        %v2491 = vadd.f32 %v2268, %v2490
        %v2492 = vpop.f32.mrf.mxu0
        %2493 = vmatprep.mubr.bf16.mxu0 %v2423
        %2494 = vmatmul.mubr.bf16.gmra.mxu0 %v2323
        %v2495 = vpop.f32.mrf.mxu0
        %v2496 = vadd.f32 %v2273, %v2495
        %v2497 = vpop.f32.mrf.mxu0
        %v2498 = vpop.f32.mrf.mxu0
        %v2499 = vadd.f32 %v2276, %v2498
        %v2500 = vpop.f32.mrf.mxu0
        %2501 = vmatprep.mubr.bf16.mxu0 %v2426
        %2502 = vmatmul.mubr.bf16.gmra.mxu0 %v2325
        %v2503 = vpop.f32.mrf.mxu0
        %v2504 = vadd.f32 %v2281, %v2503
        %v2505 = vpop.f32.mrf.mxu0
        %v2506 = vpop.f32.mrf.mxu0
        %v2507 = vadd.f32 %v2284, %v2506
        %v2508 = vpop.f32.mrf.mxu0
        %2509 = vmatprep.mubr.bf16.mxu0 %v2429
        %2510 = vmatmul.mubr.bf16.gmra.mxu0 %v2327
        %v2511 = vpop.f32.mrf.mxu0
        %v2512 = vadd.f32 %v2289, %v2511
        %v2513 = vpop.f32.mrf.mxu0
        %v2514 = vpop.f32.mrf.mxu0
        %v2515 = vadd.f32 %v2292, %v2514
        %v2516 = vpop.f32.mrf.mxu0
        %2517 = vmatprep.mubr.bf16.mxu0 %v2432
        %2518 = vmatmul.mubr.bf16.gmra.mxu0 %v2329
        %v2519 = vpop.f32.mrf.mxu0
        %v2520 = vadd.f32 %v2297, %v2519
        %v2521 = vpop.f32.mrf.mxu0
        %v2522 = vpop.f32.mrf.mxu0
        %v2523 = vadd.f32 %v2300, %v2522
        %v2524 = vpop.f32.mrf.mxu0
        %2525 = vmatprep.mubr.bf16.mxu0 %v2435
        %2526 = vmatmul.mubr.bf16.gmra.mxu0 %v2331
        %v2527 = vpop.f32.mrf.mxu0
        %v2528 = vadd.f32 %v2305, %v2527
        %v2529 = vpop.f32.mrf.mxu0
        %v2530 = vpop.f32.mrf.mxu0
        %v2531 = vadd.f32 %v2308, %v2530
        %v2532 = vpop.f32.mrf.mxu0
        %2533 = vdwg.mxu0
        %v2534 = vld [vmem:[#allocation2 + $0x18] sm:$0xff]
        %v2535 = vld [vmem:[#allocation2 + $0x20] sm:$0xff]
        %v2536 = vld [vmem:[#allocation2 + $0x28] sm:$0xff]
        %v2537 = vld [vmem:[#allocation2 + $0x30] sm:$0xff]
        %v2538 = vld [vmem:[#allocation2 + $0x38] sm:$0xff]
        %v2539 = vld [vmem:[#allocation2 + $0x40] sm:$0xff]
        %v2540 = vld [vmem:[#allocation2 + $0x48] sm:$0xff]
        %v2541 = vld [vmem:[#allocation2 + $0x50] sm:$0xff]
        %v2542 = vld [vmem:[#allocation2 + $0x78] sm:$0xff]
        %v2543 = vld [vmem:[#allocation2 + $0x80] sm:$0xff]
        %v2544 = vld [vmem:[#allocation2 + $0x88] sm:$0xff]
        %v2545 = vld [vmem:[#allocation2 + $0x90] sm:$0xff]
        %v2546 = vld [vmem:[#allocation2 + $0x98] sm:$0xff]
        %v2547 = vld [vmem:[#allocation2 + $0xa0] sm:$0xff]
        %v2548 = vld [vmem:[#allocation2 + $0xa8] sm:$0xff]
        %v2549 = vld [vmem:[#allocation2 + $0xb0] sm:$0xff]
        %s2550 = scalar_lea.vmem [#allocation10], 192
        %v2551 = vld [vmem:[%s2550] sm:$0xf]
        %v2552 = vld [vmem:[%s2550 + $0x4] sm:$0xf]
        %v2553 = vld [vmem:[%s2550 + $0x8] sm:$0xf]
        %v2554 = vld [vmem:[%s2550 + $0xc] sm:$0xf]
        %v2555 = vld [vmem:[%s2550 + $0x10] sm:$0xf]
        %v2556 = vld [vmem:[%s2550 + $0x14] sm:$0xf]
        %v2557 = vld [vmem:[%s2550 + $0x18] sm:$0xf]
        %v2558 = vld [vmem:[%s2550 + $0x1c] sm:$0xf]
        %v2559 = vld [vmem:[%s2550 + $0x20] sm:$0xf]
        %v2560 = vld [vmem:[%s2550 + $0x24] sm:$0xf]
        %v2561 = vld [vmem:[%s2550 + $0x28] sm:$0xf]
        %v2562 = vld [vmem:[%s2550 + $0x2c] sm:$0xf]
        %v2563 = vld [vmem:[%s2550 + $0x30] sm:$0xf]
        %v2564 = vld [vmem:[%s2550 + $0x34] sm:$0xf]
        %v2565 = vld [vmem:[%s2550 + $0x38] sm:$0xf]
        %v2566 = vld [vmem:[%s2550 + $0x3c] sm:$0xf]
        %v2567 = vld [vmem:[%s2550 + $0x40] sm:$0xf]
        %v2568 = vld [vmem:[%s2550 + $0x44] sm:$0xf]
        %v2569 = vld [vmem:[%s2550 + $0x48] sm:$0xf]
        %v2570 = vld [vmem:[%s2550 + $0x4c] sm:$0xf]
        %v2571 = vld [vmem:[%s2550 + $0x50] sm:$0xf]
        %v2572 = vld [vmem:[%s2550 + $0x54] sm:$0xf]
        %v2573 = vld [vmem:[%s2550 + $0x58] sm:$0xf]
        %v2574 = vld [vmem:[%s2550 + $0x5c] sm:$0xf]
        %v2591 = vunpack.c.l.b16 %v2534
        %v2592 = vunpack.c.h.b16 %v2534
        %v2593 = vunpack.c.l.b16 %v2535
        %v2594 = vunpack.c.h.b16 %v2535
        %v2595 = vunpack.c.l.b16 %v2536
        %v2596 = vunpack.c.h.b16 %v2536
        %v2597 = vunpack.c.l.b16 %v2537
        %v2598 = vunpack.c.h.b16 %v2537
        %v2599 = vunpack.c.l.b16 %v2538
        %v2600 = vunpack.c.h.b16 %v2538
        %v2601 = vunpack.c.l.b16 %v2539
        %v2602 = vunpack.c.h.b16 %v2539
        %v2603 = vunpack.c.l.b16 %v2540
        %v2604 = vunpack.c.h.b16 %v2540
        %v2605 = vunpack.c.l.b16 %v2541
        %v2606 = vunpack.c.h.b16 %v2541
        %v2607 = vunpack.c.l.b16 %v2542
        %v2608 = vunpack.c.h.b16 %v2542
        %v2609 = vunpack.c.l.b16 %v2543
        %v2610 = vunpack.c.h.b16 %v2543
        %v2611 = vunpack.c.l.b16 %v2544
        %v2612 = vunpack.c.h.b16 %v2544
        %v2613 = vunpack.c.l.b16 %v2545
        %v2614 = vunpack.c.h.b16 %v2545
        %v2615 = vunpack.c.l.b16 %v2546
        %v2616 = vunpack.c.h.b16 %v2546
        %v2617 = vunpack.c.l.b16 %v2547
        %v2618 = vunpack.c.h.b16 %v2547
        %v2619 = vunpack.c.l.b16 %v2548
        %v2620 = vunpack.c.h.b16 %v2548
        %v2621 = vunpack.c.l.b16 %v2549
        %v2622 = vunpack.c.h.b16 %v2549
        %v2623 = vpack.c.b16 %v2593, %v2591
        %v2624 = vpack.c.b16 %v2594, %v2592
        %v2625 = vpack.c.b16 %v2597, %v2595
        %v2626 = vpack.c.b16 %v2598, %v2596
        %v2627 = vpack.c.b16 %v2601, %v2599
        %v2628 = vpack.c.b16 %v2602, %v2600
        %v2629 = vpack.c.b16 %v2605, %v2603
        %v2630 = vpack.c.b16 %v2606, %v2604
        %v2631 = vpack.c.b16 %v2609, %v2607
        %v2632 = vpack.c.b16 %v2610, %v2608
        %v2633 = vpack.c.b16 %v2613, %v2611
        %v2634 = vpack.c.b16 %v2614, %v2612
        %v2635 = vpack.c.b16 %v2617, %v2615
        %v2636 = vpack.c.b16 %v2618, %v2616
        %v2637 = vpack.c.b16 %v2621, %v2619
        %v2638 = vpack.c.b16 %v2622, %v2620
        %v2671 = vunpack.c.l.b16 %v2551
        %v2672 = vunpack.c.l.b16 %v2552
        %v2673 = vunpack.c.l.b16 %v2553
        %v2674 = vunpack.c.l.b16 %v2554
        %v2675 = vunpack.c.l.b16 %v2555
        %v2676 = vunpack.c.l.b16 %v2556
        %v2677 = vunpack.c.l.b16 %v2557
        %v2678 = vunpack.c.l.b16 %v2558
        %v2679 = vunpack.c.l.b16 %v2559
        %v2680 = vunpack.c.l.b16 %v2560
        %v2681 = vunpack.c.l.b16 %v2561
        %v2682 = vunpack.c.l.b16 %v2562
        %v2683 = vunpack.c.l.b16 %v2563
        %v2684 = vunpack.c.l.b16 %v2564
        %v2685 = vunpack.c.l.b16 %v2565
        %v2686 = vunpack.c.l.b16 %v2566
        %v2687 = vunpack.c.l.b16 %v2567
        %v2688 = vunpack.c.l.b16 %v2568
        %v2689 = vunpack.c.l.b16 %v2569
        %v2690 = vunpack.c.l.b16 %v2570
        %v2691 = vunpack.c.l.b16 %v2571
        %v2692 = vunpack.c.l.b16 %v2572
        %v2693 = vunpack.c.l.b16 %v2573
        %v2694 = vunpack.c.l.b16 %v2574
        %v2695 = vpack.c.b16 %v2672, %v2671
        %v2696 = vpack.c.b16 %v2674, %v2673
        %v2697 = vpack.c.b16 %v2676, %v2675
        %v2698 = vpack.c.b16 %v2678, %v2677
        %v2699 = vpack.c.b16 %v2680, %v2679
        %v2700 = vpack.c.b16 %v2682, %v2681
        %v2701 = vpack.c.b16 %v2684, %v2683
        %v2702 = vpack.c.b16 %v2686, %v2685
        %v2703 = vpack.c.b16 %v2688, %v2687
        %v2704 = vpack.c.b16 %v2690, %v2689
        %v2705 = vpack.c.b16 %v2692, %v2691
        %v2706 = vpack.c.b16 %v2694, %v2693
        %v2720 = vsel %vm802, %v2624, 0
        %v2723 = vsel %vm802, %v2626, 0
        %v2726 = vsel %vm802, %v2628, 0
        %v2729 = vsel %vm802, %v2630, 0
        %v2732 = vsel %vm802, %v2632, 0
        %v2735 = vsel %vm802, %v2634, 0
        %v2738 = vsel %vm802, %v2636, 0
        %v2741 = vsel %vm802, %v2638, 0
        %2743 = vmatprep.subr.bf16.mxu0 0
        %2744 = vmatpush1.bf16.msra.mxu0 %v2702
        %2745 = vmatprep.subr.bf16.mxu0 0
        %2746 = vmatpush1.bf16.msra.mxu0 %v2701
        %2747 = vmatprep.subr.bf16.mxu0 0
        %2748 = vmatpush1.bf16.msra.mxu0 %v2700
        %2749 = vmatprep.subr.bf16.mxu0 0
        %2750 = vmatpush1.bf16.msra.mxu0 %v2699
        %2751 = vmatprep.subr.bf16.mxu0 0
        %2752 = vmatpush1.bf16.msra.mxu0 %v2698
        %2753 = vmatprep.subr.bf16.mxu0 0
        %2754 = vmatpush1.bf16.msra.mxu0 %v2697
        %2755 = vmatprep.subr.bf16.mxu0 0
        %2756 = vmatpush1.bf16.msra.mxu0 %v2696
        %2757 = vmatprep.subr.bf16.mxu0 0
        %2758 = vmatpush1.bf16.msra.mxu0 %v2695
        %2759 = vmatprep.subr.bf16.mxu0 0
        %2760 = vmatpush2.bf16.msra.mxu0 0
        %2761 = vmatprep.subr.bf16.mxu0 0
        %2762 = vmatpush2.bf16.msra.mxu0 0
        %2763 = vmatprep.subr.bf16.mxu0 0
        %2764 = vmatpush2.bf16.msra.mxu0 0
        %2765 = vmatprep.subr.bf16.mxu0 0
        %2766 = vmatpush2.bf16.msra.mxu0 0
        %2767 = vmatprep.subr.bf16.mxu0 0
        %2768 = vmatpush2.bf16.msra.mxu0 %v2706
        %2769 = vmatprep.subr.bf16.mxu0 0
        %2770 = vmatpush2.bf16.msra.mxu0 %v2705
        %2771 = vmatprep.subr.bf16.mxu0 0
        %2772 = vmatpush2.bf16.msra.mxu0 %v2704
        %2773 = vmatprep.subr.bf16.mxu0 0
        %2774 = vmatpush2.bf16.msra.mxu0 %v2703
        %2775 = vmatprep.mubr.bf16.mxu0 %v2720
        %2776 = vmatmul.mubr.bf16.gmra.mxu0 %v2623
        %v2777 = vpop.f32.mrf.mxu0
        %v2778 = vadd.f32 0.0, %v2777
        %v2779 = vpop.f32.mrf.mxu0
        %v2780 = vpop.f32.mrf.mxu0
        %v2781 = vadd.f32 0.0, %v2780
        %v2782 = vpop.f32.mrf.mxu0
        %2783 = vmatprep.mubr.bf16.mxu0 %v2723
        %2784 = vmatmul.mubr.bf16.gmra.mxu0 %v2625
        %v2785 = vpop.f32.mrf.mxu0
        %v2786 = vadd.f32 0.0, %v2785
        %v2787 = vpop.f32.mrf.mxu0
        %v2788 = vpop.f32.mrf.mxu0
        %v2789 = vadd.f32 0.0, %v2788
        %v2790 = vpop.f32.mrf.mxu0
        %2791 = vmatprep.mubr.bf16.mxu0 %v2726
        %2792 = vmatmul.mubr.bf16.gmra.mxu0 %v2627
        %v2793 = vpop.f32.mrf.mxu0
        %v2794 = vadd.f32 0.0, %v2793
        %v2795 = vpop.f32.mrf.mxu0
        %v2796 = vpop.f32.mrf.mxu0
        %v2797 = vadd.f32 0.0, %v2796
        %v2798 = vpop.f32.mrf.mxu0
        %2799 = vmatprep.mubr.bf16.mxu0 %v2729
        %2800 = vmatmul.mubr.bf16.gmra.mxu0 %v2629
        %v2801 = vpop.f32.mrf.mxu0
        %v2802 = vadd.f32 0.0, %v2801
        %v2803 = vpop.f32.mrf.mxu0
        %v2804 = vpop.f32.mrf.mxu0
        %v2805 = vadd.f32 0.0, %v2804
        %v2806 = vpop.f32.mrf.mxu0
        %2807 = vmatprep.mubr.bf16.mxu0 %v2732
        %2808 = vmatmul.mubr.bf16.gmra.mxu0 %v2631
        %v2809 = vpop.f32.mrf.mxu0
        %v2810 = vadd.f32 0.0, %v2809
        %v2811 = vpop.f32.mrf.mxu0
        %v2812 = vpop.f32.mrf.mxu0
        %v2813 = vadd.f32 0.0, %v2812
        %v2814 = vpop.f32.mrf.mxu0
        %2815 = vmatprep.mubr.bf16.mxu0 %v2735
        %2816 = vmatmul.mubr.bf16.gmra.mxu0 %v2633
        %v2817 = vpop.f32.mrf.mxu0
        %v2818 = vadd.f32 0.0, %v2817
        %v2819 = vpop.f32.mrf.mxu0
        %v2820 = vpop.f32.mrf.mxu0
        %v2821 = vadd.f32 0.0, %v2820
        %v2822 = vpop.f32.mrf.mxu0
        %2823 = vmatprep.mubr.bf16.mxu0 %v2738
        %2824 = vmatmul.mubr.bf16.gmra.mxu0 %v2635
        %v2825 = vpop.f32.mrf.mxu0
        %v2826 = vadd.f32 0.0, %v2825
        %v2827 = vpop.f32.mrf.mxu0
        %v2828 = vpop.f32.mrf.mxu0
        %v2829 = vadd.f32 0.0, %v2828
        %v2830 = vpop.f32.mrf.mxu0
        %2831 = vmatprep.mubr.bf16.mxu0 %v2741
        %2832 = vmatmul.mubr.bf16.gmra.mxu0 %v2637
        %v2833 = vpop.f32.mrf.mxu0
        %v2834 = vadd.f32 0.0, %v2833
        %v2835 = vpop.f32.mrf.mxu0
        %v2836 = vpop.f32.mrf.mxu0
        %v2837 = vadd.f32 0.0, %v2836
        %v2838 = vpop.f32.mrf.mxu0
        %2839 = vdwg.mxu0
        %v2840 = vadd.f32 %v2472, %v2778
        %v2841 = vadd.f32 %v2475, %v2781
        %v2842 = vadd.f32 %v2480, %v2786
        %v2843 = vadd.f32 %v2483, %v2789
        %v2844 = vadd.f32 %v2488, %v2794
        %v2845 = vadd.f32 %v2491, %v2797
        %v2846 = vadd.f32 %v2496, %v2802
        %v2847 = vadd.f32 %v2499, %v2805
        %v2848 = vadd.f32 %v2504, %v2810
        %v2849 = vadd.f32 %v2507, %v2813
        %v2850 = vadd.f32 %v2512, %v2818
        %v2851 = vadd.f32 %v2515, %v2821
        %v2852 = vadd.f32 %v2520, %v2826
        %v2853 = vadd.f32 %v2523, %v2829
        %v2854 = vadd.f32 %v2528, %v2834
        %v2855 = vadd.f32 %v2531, %v2837
        %v2857 = vlaneseq
        %v2858 = vshrl.u32 %v2857, 7
        %v2859 = vsub.s32 0, %v2858
        %v2860 = vrot.slane %v1222, %v2859
        %v2862 = vadd.f32 %v2840, %v2860
        %v2863 = vadd.f32 %v2841, %v2860
        %v2864 = vadd.f32 %v2842, %v2860
        %v2865 = vadd.f32 %v2843, %v2860
        %v2866 = vadd.f32 %v2844, %v2860
        %v2867 = vadd.f32 %v2845, %v2860
        %v2868 = vadd.f32 %v2846, %v2860
        %v2869 = vadd.f32 %v2847, %v2860
        %v2870 = vadd.f32 %v2848, %v2860
        %v2871 = vadd.f32 %v2849, %v2860
        %v2872 = vadd.f32 %v2850, %v2860
        %v2873 = vadd.f32 %v2851, %v2860
        %v2874 = vadd.f32 %v2852, %v2860
        %v2875 = vadd.f32 %v2853, %v2860
        %v2876 = vadd.f32 %v2854, %v2860
        %v2877 = vadd.f32 %v2855, %v2860
        %v2878 = vld [vmem:[%s588] sm:$0xf]
        %v2879 = vxor.u32 %v2878, 2147483648
        %v2880 = vmul.f32 %v2879, 1.442695
        %v2881 = vpow.pop %v2880
        %v2882 = vadd.f32 %v2881, 1.0
        %v2883 = vrcp.pop %v2882
        %v2884 = vmul.f32 1.0, %v2883
        %v2885 = vmul.f32 %v2878, %v2884
        %v2888 = vunpack.c.l.s4 1983009808
        %v2889 = vunpack.c.0.s8 %v2888
        %v2890 = vlaneseq
        %v2891 = vshrl.u32 %v2890, 7
        %v2892 = vsub.s32 %v2889, %v2891
        %v2893 = vrot.slane %v2885, %v2892
        %v2894 = vcombine.high %v2893, %v2893
        %v2897 = vpack.c.bf16 %v2893, %v2893
        %v2898 = vpack.c.bf16 %v2894, %v2894
        %v2899 = vld [vmem:[#allocation12] sm:$0xf]
        %v2900 = vld [vmem:[#allocation12 + $0x4] sm:$0xf]
        %v2901 = vld [vmem:[#allocation12 + $0x8] sm:$0xf]
        %v2902 = vld [vmem:[#allocation12 + $0xc] sm:$0xf]
        %v2903 = vld [vmem:[#allocation12 + $0x10] sm:$0xf]
        %v2904 = vld [vmem:[#allocation12 + $0x14] sm:$0xf]
        %v2905 = vld [vmem:[#allocation12 + $0x18] sm:$0xf]
        %v2906 = vld [vmem:[#allocation12 + $0x1c] sm:$0xf]
        %v2907 = vld [vmem:[#allocation12 + $0x20] sm:$0xf]
        %v2908 = vld [vmem:[#allocation12 + $0x24] sm:$0xf]
        %v2909 = vld [vmem:[#allocation12 + $0x28] sm:$0xf]
        %v2910 = vld [vmem:[#allocation12 + $0x2c] sm:$0xf]
        %v2911 = vld [vmem:[#allocation12 + $0x30] sm:$0xf]
        %v2912 = vld [vmem:[#allocation12 + $0x34] sm:$0xf]
        %v2913 = vld [vmem:[#allocation12 + $0x38] sm:$0xf]
        %v2914 = vld [vmem:[#allocation12 + $0x3c] sm:$0xf]
        %v2915 = vld [vmem:[#allocation12 + $0x40] sm:$0xf]
        %v2916 = vld [vmem:[#allocation12 + $0x44] sm:$0xf]
        %v2917 = vld [vmem:[#allocation12 + $0x48] sm:$0xf]
        %v2918 = vld [vmem:[#allocation12 + $0x4c] sm:$0xf]
        %v2919 = vld [vmem:[#allocation12 + $0x50] sm:$0xf]
        %v2920 = vld [vmem:[#allocation12 + $0x54] sm:$0xf]
        %v2921 = vld [vmem:[#allocation12 + $0x58] sm:$0xf]
        %v2922 = vld [vmem:[#allocation12 + $0x5c] sm:$0xf]
        %v2923 = vld [vmem:[%s8] sm:$0x1]
        %v2925 = vlaneseq
        %v2926 = vshrl.u32 %v2925, 7
        %v2927 = vsub.s32 0, %v2926
        %v2928 = vrot.slane %v2923, %v2927
        %v2954 = vunpack.c.l.b16 %v2899
        %v2955 = vunpack.c.l.b16 %v2900
        %v2956 = vunpack.c.l.b16 %v2901
        %v2957 = vunpack.c.l.b16 %v2902
        %v2958 = vunpack.c.l.b16 %v2903
        %v2959 = vunpack.c.l.b16 %v2904
        %v2960 = vunpack.c.l.b16 %v2905
        %v2961 = vunpack.c.l.b16 %v2906
        %v2962 = vunpack.c.l.b16 %v2907
        %v2963 = vunpack.c.l.b16 %v2908
        %v2964 = vunpack.c.l.b16 %v2909
        %v2965 = vunpack.c.l.b16 %v2910
        %v2966 = vunpack.c.l.b16 %v2911
        %v2967 = vunpack.c.l.b16 %v2912
        %v2968 = vunpack.c.l.b16 %v2913
        %v2969 = vunpack.c.l.b16 %v2914
        %v2970 = vunpack.c.l.b16 %v2915
        %v2971 = vunpack.c.l.b16 %v2916
        %v2972 = vunpack.c.l.b16 %v2917
        %v2973 = vunpack.c.l.b16 %v2918
        %v2974 = vunpack.c.l.b16 %v2919
        %v2975 = vunpack.c.l.b16 %v2920
        %v2976 = vunpack.c.l.b16 %v2921
        %v2977 = vunpack.c.l.b16 %v2922
        %v2978 = vpack.c.b16 %v2955, %v2954
        %v2979 = vpack.c.b16 %v2957, %v2956
        %v2980 = vpack.c.b16 %v2959, %v2958
        %v2981 = vpack.c.b16 %v2961, %v2960
        %v2982 = vpack.c.b16 %v2963, %v2962
        %v2983 = vpack.c.b16 %v2965, %v2964
        %v2984 = vpack.c.b16 %v2967, %v2966
        %v2985 = vpack.c.b16 %v2969, %v2968
        %v2986 = vpack.c.b16 %v2971, %v2970
        %v2987 = vpack.c.b16 %v2973, %v2972
        %v2988 = vpack.c.b16 %v2975, %v2974
        %v2989 = vpack.c.b16 %v2977, %v2976
        %v3003 = vsel %vm802, %v2898, 0
        %3005 = vmatprep.subr.bf16.mxu0 0
        %3006 = vmatpush1.bf16.msra.mxu0 %v2985
        %3007 = vmatprep.subr.bf16.mxu0 0
        %3008 = vmatpush1.bf16.msra.mxu0 %v2984
        %3009 = vmatprep.subr.bf16.mxu0 0
        %3010 = vmatpush1.bf16.msra.mxu0 %v2983
        %3011 = vmatprep.subr.bf16.mxu0 0
        %3012 = vmatpush1.bf16.msra.mxu0 %v2982
        %3013 = vmatprep.subr.bf16.mxu0 0
        %3014 = vmatpush1.bf16.msra.mxu0 %v2981
        %3015 = vmatprep.subr.bf16.mxu0 0
        %3016 = vmatpush1.bf16.msra.mxu0 %v2980
        %3017 = vmatprep.subr.bf16.mxu0 0
        %3018 = vmatpush1.bf16.msra.mxu0 %v2979
        %3019 = vmatprep.subr.bf16.mxu0 0
        %3020 = vmatpush1.bf16.msra.mxu0 %v2978
        %3021 = vmatprep.subr.bf16.mxu0 0
        %3022 = vmatpush2.bf16.msra.mxu0 0
        %3023 = vmatprep.subr.bf16.mxu0 0
        %3024 = vmatpush2.bf16.msra.mxu0 0
        %3025 = vmatprep.subr.bf16.mxu0 0
        %3026 = vmatpush2.bf16.msra.mxu0 0
        %3027 = vmatprep.subr.bf16.mxu0 0
        %3028 = vmatpush2.bf16.msra.mxu0 0
        %3029 = vmatprep.subr.bf16.mxu0 0
        %3030 = vmatpush2.bf16.msra.mxu0 %v2989
        %3031 = vmatprep.subr.bf16.mxu0 0
        %3032 = vmatpush2.bf16.msra.mxu0 %v2988
        %3033 = vmatprep.subr.bf16.mxu0 0
        %3034 = vmatpush2.bf16.msra.mxu0 %v2987
        %3035 = vmatprep.subr.bf16.mxu0 0
        %3036 = vmatpush2.bf16.msra.mxu0 %v2986
        %3037 = vmatprep.mubr.bf16.mxu0 %v3003
        %3038 = vmatmul.mubr.bf16.gmra.mxu0 %v2897
        %v3039 = vpop.f32.mrf.mxu0
        %v3040 = vadd.f32 %v2928, %v3039
        %v3041 = vpop.f32.mrf.mxu0
        %v3042 = vpop.f32.mrf.mxu0
        %v3043 = vpop.f32.mrf.mxu0
        %3044 = vdwg.mxu0
        %v3047 = vunpack.c.l.s4 1966171168
        %v3048 = vunpack.c.0.s8 %v3047
        %v3049 = vlaneseq
        %v3050 = vshrl.u32 %v3049, 7
        %v3051 = vsub.s32 %v3048, %v3050
        %v3052 = vrot.slane %v3040, %v3051
        %v3053 = vcombine.high %v3052, %v3052
        %v3055 = vunpack.c.l.s4 1966171168
        %v3056 = vunpack.c.0.s8 %v3055
        %v3057 = vlaneseq
        %v3058 = vshrl.u32 %v3057, 7
        %v3059 = vsub.s32 %v3056, %v3058
        %v3060 = vrot.slane %v3052, %v3059
        %v3062 = vunpack.c.l.s4 1966171168
        %v3063 = vunpack.c.0.s8 %v3062
        %v3064 = vlaneseq
        %v3065 = vshrl.u32 %v3064, 7
        %v3066 = vsub.s32 %v3063, %v3065
        %v3067 = vrot.slane %v3053, %v3066
        %v3068 = vlaneseq
        %v3069 = vshrl.u32 %v3068, 7
        %v3070 = vsub.s32 0, %v3069
        %v3071 = vrot.slane %v3060, %v3070
        %v3072 = vlaneseq
        %v3073 = vshrl.u32 %v3072, 7
        %v3074 = vsub.s32 0, %v3073
        %v3075 = vrot.slane %v3067, %v3074
        %v3078 = vadd.f32 %v2862, %v3071
        %v3079 = vadd.f32 %v2863, %v3071
        %v3080 = vadd.f32 %v2864, %v3071
        %v3081 = vadd.f32 %v2865, %v3071
        %v3082 = vadd.f32 %v2866, %v3071
        %v3083 = vadd.f32 %v2867, %v3071
        %v3084 = vadd.f32 %v2868, %v3071
        %v3085 = vadd.f32 %v2869, %v3071
        %v3086 = vadd.f32 %v2870, %v3075
        %v3087 = vadd.f32 %v2871, %v3075
        %v3088 = vadd.f32 %v2872, %v3075
        %v3089 = vadd.f32 %v2873, %v3075
        %v3090 = vadd.f32 %v2874, %v3075
        %v3091 = vadd.f32 %v2875, %v3075
        %v3092 = vadd.f32 %v2876, %v3075
        %v3093 = vadd.f32 %v2877, %v3075
        %v3094 = vld [vmem:[#allocation13] sm:$0xff]
        %v3095 = vld [vmem:[#allocation13 + $0x8] sm:$0xff]
        %v3096 = vld [vmem:[#allocation13 + $0x10] sm:$0xff]
        %v3097 = vld [vmem:[#allocation13 + $0x18] sm:$0xff]
        %v3098 = vld [vmem:[#allocation13 + $0x20] sm:$0xff]
        %v3099 = vld [vmem:[#allocation13 + $0x28] sm:$0xff]
        %v3100 = vld [vmem:[#allocation13 + $0x30] sm:$0xff]
        %v3101 = vld [vmem:[#allocation13 + $0x38] sm:$0xff]
        %v3102 = vld [vmem:[#allocation13 + $0x40] sm:$0xff]
        %v3103 = vld [vmem:[#allocation13 + $0x48] sm:$0xff]
        %v3104 = vld [vmem:[#allocation13 + $0x50] sm:$0xff]
        %v3105 = vld [vmem:[#allocation13 + $0x58] sm:$0xff]
        %v3106 = vld [vmem:[#allocation13 + $0x60] sm:$0xff]
        %v3107 = vld [vmem:[#allocation13 + $0x68] sm:$0xff]
        %v3108 = vld [vmem:[#allocation13 + $0x70] sm:$0xff]
        %v3109 = vld [vmem:[#allocation13 + $0x78] sm:$0xff]
        %v3110 = vld [vmem:[%s10] sm:$0x1]
        %v3111 = vld [vmem:[%s11] sm:$0x1]
        %v3112 = vadd.f32 %v3078, %v3079
        %v3113 = vadd.f32 %v3112, %v3080
        %v3114 = vadd.f32 %v3113, %v3081
        %v3115 = vadd.f32 %v3114, %v3082
        %v3116 = vadd.f32 %v3115, %v3083
        %v3117 = vadd.f32 %v3116, %v3084
        %v3118 = vadd.f32 %v3117, %v3085
        %v3119 = vrot.slane %v3118, 4
        %v3120 = vadd.f32 %v3118, %v3119
        %v3121 = vrot.slane %v3120, 2
        %v3122 = vadd.f32 %v3120, %v3121
        %v3123 = vrot.slane %v3122, 1
        %v3124 = vadd.f32 %v3122, %v3123
        %v3125 = vadd.f32 %v3086, %v3087
        %v3126 = vadd.f32 %v3125, %v3088
        %v3127 = vadd.f32 %v3126, %v3089
        %v3128 = vadd.f32 %v3127, %v3090
        %v3129 = vadd.f32 %v3128, %v3091
        %v3130 = vadd.f32 %v3129, %v3092
        %v3131 = vadd.f32 %v3130, %v3093
        %v3132 = vrot.slane %v3131, 4
        %v3133 = vadd.f32 %v3131, %v3132
        %v3134 = vrot.slane %v3133, 2
        %v3135 = vadd.f32 %v3133, %v3134
        %v3136 = vrot.slane %v3135, 1
        %v3137 = vadd.f32 %v3135, %v3136
        %v3138 = vmul.f32 %v3124, %v845
        %v3139 = vmul.f32 %v3137, %v845
        %v3140 = vmul.f32 %v3078, %v3078
        %v3141 = vmul.f32 %v3079, %v3079
        %v3142 = vmul.f32 %v3080, %v3080
        %v3143 = vmul.f32 %v3081, %v3081
        %v3144 = vmul.f32 %v3082, %v3082
        %v3145 = vmul.f32 %v3083, %v3083
        %v3146 = vmul.f32 %v3084, %v3084
        %v3147 = vmul.f32 %v3085, %v3085
        %v3148 = vmul.f32 %v3086, %v3086
        %v3149 = vmul.f32 %v3087, %v3087
        %v3150 = vmul.f32 %v3088, %v3088
        %v3151 = vmul.f32 %v3089, %v3089
        %v3152 = vmul.f32 %v3090, %v3090
        %v3153 = vmul.f32 %v3091, %v3091
        %v3154 = vmul.f32 %v3092, %v3092
        %v3155 = vmul.f32 %v3093, %v3093
        %v3156 = vadd.f32 %v3140, %v3141
        %v3157 = vadd.f32 %v3156, %v3142
        %v3158 = vadd.f32 %v3157, %v3143
        %v3159 = vadd.f32 %v3158, %v3144
        %v3160 = vadd.f32 %v3159, %v3145
        %v3161 = vadd.f32 %v3160, %v3146
        %v3162 = vadd.f32 %v3161, %v3147
        %v3163 = vrot.slane %v3162, 4
        %v3164 = vadd.f32 %v3162, %v3163
        %v3165 = vrot.slane %v3164, 2
        %v3166 = vadd.f32 %v3164, %v3165
        %v3167 = vrot.slane %v3166, 1
        %v3168 = vadd.f32 %v3166, %v3167
        %v3169 = vadd.f32 %v3148, %v3149
        %v3170 = vadd.f32 %v3169, %v3150
        %v3171 = vadd.f32 %v3170, %v3151
        %v3172 = vadd.f32 %v3171, %v3152
        %v3173 = vadd.f32 %v3172, %v3153
        %v3174 = vadd.f32 %v3173, %v3154
        %v3175 = vadd.f32 %v3174, %v3155
        %v3176 = vrot.slane %v3175, 4
        %v3177 = vadd.f32 %v3175, %v3176
        %v3178 = vrot.slane %v3177, 2
        %v3179 = vadd.f32 %v3177, %v3178
        %v3180 = vrot.slane %v3179, 1
        %v3181 = vadd.f32 %v3179, %v3180
        %v3182 = vmul.f32 %v3168, %v845
        %v3183 = vmul.f32 %v3181, %v845
        %v3186 = vsel %vm910, %v3139, %v3138
        %v3190 = vsel %vm915, %v3183, %v3182
        %v3192 = vsel %vm918, %v3186, %v3190
        %3193 = vmatprep.subr.mxu0 0.0
        %3194 = vmatpush1.msra.mxu0 %v3109
        %3195 = vmatprep.subr.mxu0 0.0
        %3196 = vmatpush1.msra.mxu0 %v3108
        %3197 = vmatprep.subr.mxu0 0.0
        %3198 = vmatpush1.msra.mxu0 %v3107
        %3199 = vmatprep.subr.mxu0 0.0
        %3200 = vmatpush1.msra.mxu0 %v3106
        %3201 = vmatprep.subr.mxu0 0.0
        %3202 = vmatpush1.msra.mxu0 %v3105
        %3203 = vmatprep.subr.mxu0 0.0
        %3204 = vmatpush1.msra.mxu0 %v3104
        %3205 = vmatprep.subr.mxu0 0.0
        %3206 = vmatpush1.msra.mxu0 %v3103
        %3207 = vmatprep.subr.mxu0 0.0
        %3208 = vmatpush1.msra.mxu0 %v3102
        %3209 = vmatprep.subr.mxu0 0.0
        %3210 = vmatpush1.msra.mxu0 %v3101
        %3211 = vmatprep.subr.mxu0 0.0
        %3212 = vmatpush1.msra.mxu0 %v3100
        %3213 = vmatprep.subr.mxu0 0.0
        %3214 = vmatpush1.msra.mxu0 %v3099
        %3215 = vmatprep.subr.mxu0 0.0
        %3216 = vmatpush1.msra.mxu0 %v3098
        %3217 = vmatprep.subr.mxu0 0.0
        %3218 = vmatpush1.msra.mxu0 %v3097
        %3219 = vmatprep.subr.mxu0 0.0
        %3220 = vmatpush1.msra.mxu0 %v3096
        %3221 = vmatprep.subr.mxu0 0.0
        %3222 = vmatpush1.msra.mxu0 %v3095
        %3223 = vmatprep.subr.mxu0 0.0
        %3224 = vmatpush1.msra.mxu0 %v3094
        %3225 = vmatprep.subr.mxu0 0.0
        %3226 = vmatpush2.msra.mxu0 0.0
        %3227 = vmatprep.subr.mxu0 0.0
        %3228 = vmatpush2.msra.mxu0 0.0
        %3229 = vmatprep.subr.mxu0 0.0
        %3230 = vmatpush2.msra.mxu0 0.0
        %3231 = vmatprep.subr.mxu0 0.0
        %3232 = vmatpush2.msra.mxu0 0.0
        %3233 = vmatprep.subr.mxu0 0.0
        %3234 = vmatpush2.msra.mxu0 0.0
        %3235 = vmatprep.subr.mxu0 0.0
        %3236 = vmatpush2.msra.mxu0 0.0
        %3237 = vmatprep.subr.mxu0 0.0
        %3238 = vmatpush2.msra.mxu0 0.0
        %3239 = vmatprep.subr.mxu0 0.0
        %3240 = vmatpush2.msra.mxu0 0.0
        %3241 = vmatprep.subr.mxu0 0.0
        %3242 = vmatpush2.msra.mxu0 0.0
        %3243 = vmatprep.subr.mxu0 0.0
        %3244 = vmatpush2.msra.mxu0 0.0
        %3245 = vmatprep.subr.mxu0 0.0
        %3246 = vmatpush2.msra.mxu0 0.0
        %3247 = vmatprep.subr.mxu0 0.0
        %3248 = vmatpush2.msra.mxu0 0.0
        %3249 = vmatprep.subr.mxu0 0.0
        %3250 = vmatpush2.msra.mxu0 0.0
        %3251 = vmatprep.subr.mxu0 0.0
        %3252 = vmatpush2.msra.mxu0 0.0
        %3253 = vmatprep.subr.mxu0 0.0
        %3254 = vmatpush2.msra.mxu0 0.0
        %3255 = vmatprep.subr.mxu0 0.0
        %3256 = vmatpush2.msra.mxu0 0.0
        %3257 = vmatprep.mubr.f32.mxu0 0.0
        %3258 = vmatmul.mubr.f32.gmra.mxu0 %v3192
        %v3259 = vpop.f32.mrf.mxu0
        %v3260 = vadd.f32 0.0, %v3259
        %v3261 = vpop.f32.mrf.mxu0
        %3262 = vdwg.mxu0
        %v3265 = vunpack.c.l.s4 1966171168
        %v3266 = vunpack.c.0.s8 %v3265
        %v3267 = vlaneseq
        %v3268 = vshrl.u32 %v3267, 7
        %v3269 = vsub.s32 %v3266, %v3268
        %v3270 = vrot.slane %v3260, %v3269
        %v3271 = vcombine.high %v3270, %v3270
        %v3273 = vunpack.c.l.s4 1966171168
        %v3274 = vunpack.c.0.s8 %v3273
        %v3275 = vlaneseq
        %v3276 = vshrl.u32 %v3275, 7
        %v3277 = vsub.s32 %v3274, %v3276
        %v3278 = vrot.slane %v3270, %v3277
        %v3280 = vunpack.c.l.s4 1966171168
        %v3281 = vunpack.c.0.s8 %v3280
        %v3282 = vlaneseq
        %v3283 = vshrl.u32 %v3282, 7
        %v3284 = vsub.s32 %v3281, %v3283
        %v3285 = vrot.slane %v3271, %v3284
        %v3288 = vcombine.high %v3278, %v3278
        %v3289 = vcombine.high %v3285, %v3285
        %v3292 = vmul.f32 %v3278, %v3278
        %v3293 = vmul.f32 %v3285, %v3285
        %v3294 = vsub.f32 %v3288, %v3292
        %v3295 = vsub.f32 %v3289, %v3293
        %v3296 = vmax.f32 %v3294, 0.0
        %v3297 = vmax.f32 %v3295, 0.0
        %v3298 = vadd.f32 %v3296, 1e-05
        %v3299 = vadd.f32 %v3297, 1e-05
        %v3300 = vrsqrt.pop %v3298
        %v3301 = vrsqrt.pop %v3299
        %v3302 = vmul.f32 %v3300, %v3110
        %v3303 = vmul.f32 %v3301, %v3110
        %v3304 = vlaneseq
        %v3305 = vshrl.u32 %v3304, 7
        %v3306 = vsub.s32 0, %v3305
        %v3307 = vrot.slane %v3278, %v3306
        %v3308 = vlaneseq
        %v3309 = vshrl.u32 %v3308, 7
        %v3310 = vsub.s32 0, %v3309
        %v3311 = vrot.slane %v3285, %v3310
        %v3314 = vsub.f32 %v3078, %v3307
        %v3315 = vsub.f32 %v3079, %v3307
        %v3316 = vsub.f32 %v3080, %v3307
        %v3317 = vsub.f32 %v3081, %v3307
        %v3318 = vsub.f32 %v3082, %v3307
        %v3319 = vsub.f32 %v3083, %v3307
        %v3320 = vsub.f32 %v3084, %v3307
        %v3321 = vsub.f32 %v3085, %v3307
        %v3322 = vsub.f32 %v3086, %v3311
        %v3323 = vsub.f32 %v3087, %v3311
        %v3324 = vsub.f32 %v3088, %v3311
        %v3325 = vsub.f32 %v3089, %v3311
        %v3326 = vsub.f32 %v3090, %v3311
        %v3327 = vsub.f32 %v3091, %v3311
        %v3328 = vsub.f32 %v3092, %v3311
        %v3329 = vsub.f32 %v3093, %v3311
        %v3332 = vlaneseq
        %v3333 = vshrl.u32 %v3332, 7
        %v3334 = vsub.s32 0, %v3333
        %v3335 = vrot.slane %v3302, %v3334
        %v3336 = vlaneseq
        %v3337 = vshrl.u32 %v3336, 7
        %v3338 = vsub.s32 0, %v3337
        %v3339 = vrot.slane %v3303, %v3338
        %v3342 = vmul.f32 %v3314, %v3335
        %v3343 = vmul.f32 %v3315, %v3335
        %v3344 = vmul.f32 %v3316, %v3335
        %v3345 = vmul.f32 %v3317, %v3335
        %v3346 = vmul.f32 %v3318, %v3335
        %v3347 = vmul.f32 %v3319, %v3335
        %v3348 = vmul.f32 %v3320, %v3335
        %v3349 = vmul.f32 %v3321, %v3335
        %v3350 = vmul.f32 %v3322, %v3339
        %v3351 = vmul.f32 %v3323, %v3339
        %v3352 = vmul.f32 %v3324, %v3339
        %v3353 = vmul.f32 %v3325, %v3339
        %v3354 = vmul.f32 %v3326, %v3339
        %v3355 = vmul.f32 %v3327, %v3339
        %v3356 = vmul.f32 %v3328, %v3339
        %v3357 = vmul.f32 %v3329, %v3339
        %v3359 = vlaneseq
        %v3360 = vshrl.u32 %v3359, 7
        %v3361 = vsub.s32 0, %v3360
        %v3362 = vrot.slane %v3111, %v3361
        %v3364 = vadd.f32 %v3342, %v3362
        %v3365 = vadd.f32 %v3343, %v3362
        %v3366 = vadd.f32 %v3344, %v3362
        %v3367 = vadd.f32 %v3345, %v3362
        %v3368 = vadd.f32 %v3346, %v3362
        %v3369 = vadd.f32 %v3347, %v3362
        %v3370 = vadd.f32 %v3348, %v3362
        %v3371 = vadd.f32 %v3349, %v3362
        %v3372 = vadd.f32 %v3350, %v3362
        %v3373 = vadd.f32 %v3351, %v3362
        %v3374 = vadd.f32 %v3352, %v3362
        %v3375 = vadd.f32 %v3353, %v3362
        %v3376 = vadd.f32 %v3354, %v3362
        %v3377 = vadd.f32 %v3355, %v3362
        %v3378 = vadd.f32 %v3356, %v3362
        %v3379 = vadd.f32 %v3357, %v3362
        %v3380 = vxor.u32 %v3364, 2147483648
        %v3381 = vxor.u32 %v3365, 2147483648
        %v3382 = vxor.u32 %v3366, 2147483648
        %v3383 = vxor.u32 %v3367, 2147483648
        %v3384 = vxor.u32 %v3368, 2147483648
        %v3385 = vxor.u32 %v3369, 2147483648
        %v3386 = vxor.u32 %v3370, 2147483648
        %v3387 = vxor.u32 %v3371, 2147483648
        %v3388 = vxor.u32 %v3372, 2147483648
        %v3389 = vxor.u32 %v3373, 2147483648
        %v3390 = vxor.u32 %v3374, 2147483648
        %v3391 = vxor.u32 %v3375, 2147483648
        %v3392 = vxor.u32 %v3376, 2147483648
        %v3393 = vxor.u32 %v3377, 2147483648
        %v3394 = vxor.u32 %v3378, 2147483648
        %v3395 = vxor.u32 %v3379, 2147483648
        %v3396 = vmul.f32 %v3380, 1.442695
        %v3397 = vpow.pop %v3396
        %v3398 = vmul.f32 %v3381, 1.442695
        %v3399 = vpow.pop %v3398
        %v3400 = vmul.f32 %v3382, 1.442695
        %v3401 = vpow.pop %v3400
        %v3402 = vmul.f32 %v3383, 1.442695
        %v3403 = vpow.pop %v3402
        %v3404 = vmul.f32 %v3384, 1.442695
        %v3405 = vpow.pop %v3404
        %v3406 = vmul.f32 %v3385, 1.442695
        %v3407 = vpow.pop %v3406
        %v3408 = vmul.f32 %v3386, 1.442695
        %v3409 = vpow.pop %v3408
        %v3410 = vmul.f32 %v3387, 1.442695
        %v3411 = vpow.pop %v3410
        %v3412 = vmul.f32 %v3388, 1.442695
        %v3413 = vpow.pop %v3412
        %v3414 = vmul.f32 %v3389, 1.442695
        %v3415 = vpow.pop %v3414
        %v3416 = vmul.f32 %v3390, 1.442695
        %v3417 = vpow.pop %v3416
        %v3418 = vmul.f32 %v3391, 1.442695
        %v3419 = vpow.pop %v3418
        %v3420 = vmul.f32 %v3392, 1.442695
        %v3421 = vpow.pop %v3420
        %v3422 = vmul.f32 %v3393, 1.442695
        %v3423 = vpow.pop %v3422
        %v3424 = vmul.f32 %v3394, 1.442695
        %v3425 = vpow.pop %v3424
        %v3426 = vmul.f32 %v3395, 1.442695
        %v3427 = vpow.pop %v3426
        %v3428 = vadd.f32 %v3397, 1.0
        %v3429 = vadd.f32 %v3399, 1.0
        %v3430 = vadd.f32 %v3401, 1.0
        %v3431 = vadd.f32 %v3403, 1.0
        %v3432 = vadd.f32 %v3405, 1.0
        %v3433 = vadd.f32 %v3407, 1.0
        %v3434 = vadd.f32 %v3409, 1.0
        %v3435 = vadd.f32 %v3411, 1.0
        %v3436 = vadd.f32 %v3413, 1.0
        %v3437 = vadd.f32 %v3415, 1.0
        %v3438 = vadd.f32 %v3417, 1.0
        %v3439 = vadd.f32 %v3419, 1.0
        %v3440 = vadd.f32 %v3421, 1.0
        %v3441 = vadd.f32 %v3423, 1.0
        %v3442 = vadd.f32 %v3425, 1.0
        %v3443 = vadd.f32 %v3427, 1.0
        %v3444 = vrcp.pop %v3428
        %v3445 = vmul.f32 1.0, %v3444
        %v3446 = vrcp.pop %v3429
        %v3447 = vmul.f32 1.0, %v3446
        %v3448 = vrcp.pop %v3430
        %v3449 = vmul.f32 1.0, %v3448
        %v3450 = vrcp.pop %v3431
        %v3451 = vmul.f32 1.0, %v3450
        %v3452 = vrcp.pop %v3432
        %v3453 = vmul.f32 1.0, %v3452
        %v3454 = vrcp.pop %v3433
        %v3455 = vmul.f32 1.0, %v3454
        %v3456 = vrcp.pop %v3434
        %v3457 = vmul.f32 1.0, %v3456
        %v3458 = vrcp.pop %v3435
        %v3459 = vmul.f32 1.0, %v3458
        %v3460 = vrcp.pop %v3436
        %v3461 = vmul.f32 1.0, %v3460
        %v3462 = vrcp.pop %v3437
        %v3463 = vmul.f32 1.0, %v3462
        %v3464 = vrcp.pop %v3438
        %v3465 = vmul.f32 1.0, %v3464
        %v3466 = vrcp.pop %v3439
        %v3467 = vmul.f32 1.0, %v3466
        %v3468 = vrcp.pop %v3440
        %v3469 = vmul.f32 1.0, %v3468
        %v3470 = vrcp.pop %v3441
        %v3471 = vmul.f32 1.0, %v3470
        %v3472 = vrcp.pop %v3442
        %v3473 = vmul.f32 1.0, %v3472
        %v3474 = vrcp.pop %v3443
        %v3475 = vmul.f32 1.0, %v3474
        %v3476 = vmul.f32 %v3364, %v3445
        %v3477 = vmul.f32 %v3365, %v3447
        %v3478 = vmul.f32 %v3366, %v3449
        %v3479 = vmul.f32 %v3367, %v3451
        %v3480 = vmul.f32 %v3368, %v3453
        %v3481 = vmul.f32 %v3369, %v3455
        %v3482 = vmul.f32 %v3370, %v3457
        %v3483 = vmul.f32 %v3371, %v3459
        %v3484 = vmul.f32 %v3372, %v3461
        %v3485 = vmul.f32 %v3373, %v3463
        %v3486 = vmul.f32 %v3374, %v3465
        %v3487 = vmul.f32 %v3375, %v3467
        %v3488 = vmul.f32 %v3376, %v3469
        %v3489 = vmul.f32 %v3377, %v3471
        %v3490 = vmul.f32 %v3378, %v3473
        %v3491 = vmul.f32 %v3379, %v3475
        %v3492 = vld [vmem:[%s13] sm:$0x1]
        %v3493 = vpack.c.bf16 %v3477, %v3476
        %v3494 = vpack.c.bf16 %v3479, %v3478
        %v3495 = vpack.c.bf16 %v3481, %v3480
        %v3496 = vpack.c.bf16 %v3483, %v3482
        %v3497 = vpack.c.bf16 %v3485, %v3484
        %v3498 = vpack.c.bf16 %v3487, %v3486
        %v3499 = vpack.c.bf16 %v3489, %v3488
        %v3500 = vpack.c.bf16 %v3491, %v3490
        %v3501 = vsel %vm1283, 0, %v3493
        %v3502 = vsel %vm1284, 0, %v3494
        %v3503 = vsel %vm1285, 0, %v3495
        %v3504 = vsel %vm1286, 0, %v3496
        %v3505 = vsel %vm1283, 0, %v3497
        %v3506 = vsel %vm1284, 0, %v3498
        %v3507 = vsel %vm1285, 0, %v3499
        %v3508 = vsel %vm1286, 0, %v3500
        %v3509 = vsel %vm1347, 0, %v3493
        %v3510 = vsel %vm1348, 0, %v3494
        %v3511 = vsel %vm1349, 0, %v3495
        %v3512 = vsel %vm1350, 0, %v3496
        %v3513 = vsel %vm1347, 0, %v3497
        %v3514 = vsel %vm1348, 0, %v3498
        %v3515 = vsel %vm1349, 0, %v3499
        %v3516 = vsel %vm1350, 0, %v3500
        %3517 = vst [vmem:[#allocation3 + $0xc] sm:$0xff] 0
        %3518 = vst [vmem:[#allocation3 + $0x14] sm:$0xf] 0
        %vm3519 = vcmask 1044484
        %vm3520 = vmand %vm3519, %vm1367
        %vm3521 = vmor %vm3520, %vm1365
        %v3522 = vld [vmem:[#allocation3 + $0x18] sm:$0x11]
        %v3523 = vsel %vm3521, 0, %v3522
        %3524 = vst [vmem:[#allocation3 + $0x18] sm:$0x11] %v3523
        %v3525 = vld [vmem:[#allocation3 + $0x20] sm:$0x1]
        %v3526 = vsel %vm1365, 0, %v3525
        %3527 = vst [vmem:[#allocation3 + $0x20] sm:$0x1] %v3526
        %3528 = vst [vmem:[#allocation3 + $0x9c] sm:$0xff] 0
        %3529 = vst [vmem:[#allocation3 + $0xa4] sm:$0xf] 0
        %v3530 = vld [vmem:[#allocation3 + $0xa8] sm:$0x11]
        %v3531 = vsel %vm3521, 0, %v3530
        %3532 = vst [vmem:[#allocation3 + $0xa8] sm:$0x11] %v3531
        %v3533 = vld [vmem:[#allocation3 + $0xb0] sm:$0x1]
        %v3534 = vsel %vm1365, 0, %v3533
        %3535 = vst [vmem:[#allocation3 + $0xb0] sm:$0x1] %v3534
        %vm3536 = vcmask 1047559
        %vm3537 = vmand %vm3536, %vm1381
        %vm3538 = vmor %vm3537, %vm1379
        %v3539 = vld [vmem:[#allocation3 + $0x6c] sm:$0x88]
        %v3540 = vsel %vm3538, 0, %v3539
        %3541 = vst [vmem:[#allocation3 + $0x6c] sm:$0x88] %v3540
        %v3542 = vld [vmem:[#allocation3 + $0x74] sm:$0x8]
        %v3543 = vsel %vm1379, 0, %v3542
        %3544 = vst [vmem:[#allocation3 + $0x74] sm:$0x8] %v3543
        %3545 = vst [vmem:[#allocation3 + $0x78] sm:$0xff] 0
        %3546 = vst [vmem:[#allocation3 + $0x80] sm:$0xf] 0
        %v3547 = vld [vmem:[#allocation3 + $0xfc] sm:$0x88]
        %v3548 = vsel %vm3538, 0, %v3547
        %3549 = vst [vmem:[#allocation3 + $0xfc] sm:$0x88] %v3548
        %v3550 = vld [vmem:[#allocation3 + $0x104] sm:$0x8]
        %v3551 = vsel %vm1379, 0, %v3550
        %3552 = vst [vmem:[#allocation3 + $0x104] sm:$0x8] %v3551
        %3553 = vst [vmem:[#allocation3 + $0x108] sm:$0xff] 0
        %3554 = vst [vmem:[#allocation3 + $0x110] sm:$0xf] 0
        %v3563 = vunpack.c.l.b16 %v3501
        %v3564 = vunpack.c.h.b16 %v3501
        %v3565 = vunpack.c.l.b16 %v3502
        %v3566 = vunpack.c.h.b16 %v3502
        %v3567 = vunpack.c.l.b16 %v3503
        %v3568 = vunpack.c.h.b16 %v3503
        %v3569 = vunpack.c.l.b16 %v3504
        %v3570 = vunpack.c.h.b16 %v3504
        %v3571 = vunpack.c.l.b16 %v3505
        %v3572 = vunpack.c.h.b16 %v3505
        %v3573 = vunpack.c.l.b16 %v3506
        %v3574 = vunpack.c.h.b16 %v3506
        %v3575 = vunpack.c.l.b16 %v3507
        %v3576 = vunpack.c.h.b16 %v3507
        %v3577 = vunpack.c.l.b16 %v3508
        %v3578 = vunpack.c.h.b16 %v3508
        %v3579 = vpack.c.b16 %v3563, %v3563
        %v3580 = vpack.c.b16 %v3564, %v3564
        %v3581 = vpack.c.b16 %v3565, %v3565
        %v3582 = vpack.c.b16 %v3566, %v3566
        %v3583 = vpack.c.b16 %v3567, %v3567
        %v3584 = vpack.c.b16 %v3568, %v3568
        %v3585 = vpack.c.b16 %v3569, %v3569
        %v3586 = vpack.c.b16 %v3570, %v3570
        %v3587 = vpack.c.b16 %v3571, %v3571
        %v3588 = vpack.c.b16 %v3572, %v3572
        %v3589 = vpack.c.b16 %v3573, %v3573
        %v3590 = vpack.c.b16 %v3574, %v3574
        %v3591 = vpack.c.b16 %v3575, %v3575
        %v3592 = vpack.c.b16 %v3576, %v3576
        %v3593 = vpack.c.b16 %v3577, %v3577
        %v3594 = vpack.c.b16 %v3578, %v3578
        %v3596 = vshrl.u32 %v3579, 16
        %v3598 = vrot.slane %v3596, 7
        %v3599 = vshll.u32 %v3579, 16
        %v3601 = vor.u32 %v3598, %v3599
        %v3602 = vrot.slane %v3598, 4
        %v3604 = vshrl.u32 %v3580, 16
        %v3606 = vrot.slane %v3604, 7
        %v3607 = vshll.u32 %v3580, 16
        %v3609 = vor.u32 %v3606, %v3607
        %v3610 = vsel %vm1433, %v3602, %v3609
        %v3611 = vrot.slane %v3606, 4
        %v3613 = vshrl.u32 %v3581, 16
        %v3615 = vrot.slane %v3613, 7
        %v3616 = vshll.u32 %v3581, 16
        %v3618 = vor.u32 %v3615, %v3616
        %v3619 = vsel %vm1433, %v3611, %v3618
        %v3620 = vrot.slane %v3615, 4
        %v3622 = vshrl.u32 %v3582, 16
        %v3624 = vrot.slane %v3622, 7
        %v3625 = vshll.u32 %v3582, 16
        %v3627 = vor.u32 %v3624, %v3625
        %v3628 = vsel %vm1433, %v3620, %v3627
        %v3629 = vrot.slane %v3624, 4
        %v3631 = vshrl.u32 %v3583, 16
        %v3633 = vrot.slane %v3631, 7
        %v3634 = vshll.u32 %v3583, 16
        %v3636 = vor.u32 %v3633, %v3634
        %v3637 = vsel %vm1433, %v3629, %v3636
        %v3638 = vrot.slane %v3633, 4
        %v3640 = vshrl.u32 %v3584, 16
        %v3642 = vrot.slane %v3640, 7
        %v3643 = vshll.u32 %v3584, 16
        %v3645 = vor.u32 %v3642, %v3643
        %v3646 = vsel %vm1433, %v3638, %v3645
        %v3647 = vrot.slane %v3642, 4
        %v3649 = vshrl.u32 %v3585, 16
        %v3651 = vrot.slane %v3649, 7
        %v3652 = vshll.u32 %v3585, 16
        %v3654 = vor.u32 %v3651, %v3652
        %v3655 = vsel %vm1433, %v3647, %v3654
        %v3656 = vrot.slane %v3651, 4
        %v3658 = vshrl.u32 %v3586, 16
        %v3660 = vrot.slane %v3658, 7
        %v3661 = vshll.u32 %v3586, 16
        %v3663 = vor.u32 %v3660, %v3661
        %v3664 = vsel %vm1433, %v3656, %v3663
        %v3665 = vrot.slane %v3660, 4
        %v3667 = vshrl.u32 %v3587, 16
        %v3669 = vrot.slane %v3667, 7
        %v3670 = vshll.u32 %v3587, 16
        %v3672 = vor.u32 %v3669, %v3670
        %v3673 = vrot.slane %v3669, 4
        %v3675 = vshrl.u32 %v3588, 16
        %v3677 = vrot.slane %v3675, 7
        %v3678 = vshll.u32 %v3588, 16
        %v3680 = vor.u32 %v3677, %v3678
        %v3681 = vsel %vm1433, %v3673, %v3680
        %v3682 = vrot.slane %v3677, 4
        %v3684 = vshrl.u32 %v3589, 16
        %v3686 = vrot.slane %v3684, 7
        %v3687 = vshll.u32 %v3589, 16
        %v3689 = vor.u32 %v3686, %v3687
        %v3690 = vsel %vm1433, %v3682, %v3689
        %v3691 = vrot.slane %v3686, 4
        %v3693 = vshrl.u32 %v3590, 16
        %v3695 = vrot.slane %v3693, 7
        %v3696 = vshll.u32 %v3590, 16
        %v3698 = vor.u32 %v3695, %v3696
        %v3699 = vsel %vm1433, %v3691, %v3698
        %v3700 = vrot.slane %v3695, 4
        %v3702 = vshrl.u32 %v3591, 16
        %v3704 = vrot.slane %v3702, 7
        %v3705 = vshll.u32 %v3591, 16
        %v3707 = vor.u32 %v3704, %v3705
        %v3708 = vsel %vm1433, %v3700, %v3707
        %v3709 = vrot.slane %v3704, 4
        %v3711 = vshrl.u32 %v3592, 16
        %v3713 = vrot.slane %v3711, 7
        %v3714 = vshll.u32 %v3592, 16
        %v3716 = vor.u32 %v3713, %v3714
        %v3717 = vsel %vm1433, %v3709, %v3716
        %v3718 = vrot.slane %v3713, 4
        %v3720 = vshrl.u32 %v3593, 16
        %v3722 = vrot.slane %v3720, 7
        %v3723 = vshll.u32 %v3593, 16
        %v3725 = vor.u32 %v3722, %v3723
        %v3726 = vsel %vm1433, %v3718, %v3725
        %v3727 = vrot.slane %v3722, 4
        %v3729 = vshrl.u32 %v3594, 16
        %v3731 = vrot.slane %v3729, 7
        %v3732 = vshll.u32 %v3594, 16
        %v3734 = vor.u32 %v3731, %v3732
        %v3735 = vsel %vm1433, %v3727, %v3734
        %v3736 = vrot.slane %v3731, 4
        %vm3755 = vcmask 1043456
        %vm3756 = vmand %vm3755, %vm1595
        %v3757 = vld [vmem:[#allocation3 + $0x18] sm:$0xf]
        %v3758 = vsel %vm3756, %v3601, %v3757
        %3759 = vst [vmem:[#allocation3 + $0x18] sm:$0xf] %v3758
        %3760 = vst [vmem:[#allocation3 + $0x24] sm:$0xf] %v3610
        %3761 = vst [vmem:[#allocation3 + $0x30] sm:$0xf] %v3619
        %3762 = vst [vmem:[#allocation3 + $0x3c] sm:$0xf] %v3628
        %3763 = vst [vmem:[#allocation3 + $0x48] sm:$0xf] %v3637
        %3764 = vst [vmem:[#allocation3 + $0x54] sm:$0xf] %v3646
        %3765 = vst [vmem:[#allocation3 + $0x60] sm:$0xf] %v3655
        %3766 = vst [vmem:[#allocation3 + $0x6c] sm:$0xf] %v3664
        %v3767 = vld [vmem:[#allocation3 + $0x78] sm:$0x1]
        %v3768 = vsel %vm1365, %v3665, %v3767
        %3769 = vst [vmem:[#allocation3 + $0x78] sm:$0x1] %v3768
        %v3770 = vld [vmem:[#allocation3 + $0xa8] sm:$0xf]
        %v3771 = vsel %vm3756, %v3672, %v3770
        %3772 = vst [vmem:[#allocation3 + $0xa8] sm:$0xf] %v3771
        %3773 = vst [vmem:[#allocation3 + $0xb4] sm:$0xf] %v3681
        %3774 = vst [vmem:[#allocation3 + $0xc0] sm:$0xf] %v3690
        %3775 = vst [vmem:[#allocation3 + $0xcc] sm:$0xf] %v3699
        %3776 = vst [vmem:[#allocation3 + $0xd8] sm:$0xf] %v3708
        %3777 = vst [vmem:[#allocation3 + $0xe4] sm:$0xf] %v3717
        %3778 = vst [vmem:[#allocation3 + $0xf0] sm:$0xf] %v3726
        %3779 = vst [vmem:[#allocation3 + $0xfc] sm:$0xf] %v3735
        %v3780 = vld [vmem:[#allocation3 + $0x108] sm:$0x1]
        %v3781 = vsel %vm1365, %v3736, %v3780
        %3782 = vst [vmem:[#allocation3 + $0x108] sm:$0x1] %v3781
        %v3791 = vunpack.c.l.b16 %v3493
        %v3792 = vunpack.c.h.b16 %v3493
        %v3793 = vunpack.c.l.b16 %v3494
        %v3794 = vunpack.c.h.b16 %v3494
        %v3795 = vunpack.c.l.b16 %v3495
        %v3796 = vunpack.c.h.b16 %v3495
        %v3797 = vunpack.c.l.b16 %v3496
        %v3798 = vunpack.c.h.b16 %v3496
        %v3799 = vunpack.c.l.b16 %v3497
        %v3800 = vunpack.c.h.b16 %v3497
        %v3801 = vunpack.c.l.b16 %v3498
        %v3802 = vunpack.c.h.b16 %v3498
        %v3803 = vunpack.c.l.b16 %v3499
        %v3804 = vunpack.c.h.b16 %v3499
        %v3805 = vunpack.c.l.b16 %v3500
        %v3806 = vunpack.c.h.b16 %v3500
        %v3807 = vpack.c.b16 %v3791, %v3791
        %v3808 = vpack.c.b16 %v3792, %v3792
        %v3809 = vpack.c.b16 %v3793, %v3793
        %v3810 = vpack.c.b16 %v3794, %v3794
        %v3811 = vpack.c.b16 %v3795, %v3795
        %v3812 = vpack.c.b16 %v3796, %v3796
        %v3813 = vpack.c.b16 %v3797, %v3797
        %v3814 = vpack.c.b16 %v3798, %v3798
        %v3815 = vpack.c.b16 %v3799, %v3799
        %v3816 = vpack.c.b16 %v3800, %v3800
        %v3817 = vpack.c.b16 %v3801, %v3801
        %v3818 = vpack.c.b16 %v3802, %v3802
        %v3819 = vpack.c.b16 %v3803, %v3803
        %v3820 = vpack.c.b16 %v3804, %v3804
        %v3821 = vpack.c.b16 %v3805, %v3805
        %v3822 = vpack.c.b16 %v3806, %v3806
        %3839 = vst [vmem:[#allocation3 + $0x1c] sm:$0xf] %v3807
        %3840 = vst [vmem:[#allocation3 + $0x28] sm:$0xf] %v3808
        %3841 = vst [vmem:[#allocation3 + $0x34] sm:$0xf] %v3809
        %3842 = vst [vmem:[#allocation3 + $0x40] sm:$0xf] %v3810
        %3843 = vst [vmem:[#allocation3 + $0x4c] sm:$0xf] %v3811
        %3844 = vst [vmem:[#allocation3 + $0x58] sm:$0xf] %v3812
        %3845 = vst [vmem:[#allocation3 + $0x64] sm:$0xf] %v3813
        %3846 = vst [vmem:[#allocation3 + $0x70] sm:$0xf] %v3814
        %3847 = vst [vmem:[#allocation3 + $0xac] sm:$0xf] %v3815
        %3848 = vst [vmem:[#allocation3 + $0xb8] sm:$0xf] %v3816
        %3849 = vst [vmem:[#allocation3 + $0xc4] sm:$0xf] %v3817
        %3850 = vst [vmem:[#allocation3 + $0xd0] sm:$0xf] %v3818
        %3851 = vst [vmem:[#allocation3 + $0xdc] sm:$0xf] %v3819
        %3852 = vst [vmem:[#allocation3 + $0xe8] sm:$0xf] %v3820
        %3853 = vst [vmem:[#allocation3 + $0xf4] sm:$0xf] %v3821
        %3854 = vst [vmem:[#allocation3 + $0x100] sm:$0xf] %v3822
        %v3863 = vunpack.c.l.b16 %v3509
        %v3864 = vunpack.c.h.b16 %v3509
        %v3865 = vunpack.c.l.b16 %v3510
        %v3866 = vunpack.c.h.b16 %v3510
        %v3867 = vunpack.c.l.b16 %v3511
        %v3868 = vunpack.c.h.b16 %v3511
        %v3869 = vunpack.c.l.b16 %v3512
        %v3870 = vunpack.c.h.b16 %v3512
        %v3871 = vunpack.c.l.b16 %v3513
        %v3872 = vunpack.c.h.b16 %v3513
        %v3873 = vunpack.c.l.b16 %v3514
        %v3874 = vunpack.c.h.b16 %v3514
        %v3875 = vunpack.c.l.b16 %v3515
        %v3876 = vunpack.c.h.b16 %v3515
        %v3877 = vunpack.c.l.b16 %v3516
        %v3878 = vunpack.c.h.b16 %v3516
        %v3879 = vpack.c.b16 %v3863, %v3863
        %v3880 = vpack.c.b16 %v3864, %v3864
        %v3881 = vpack.c.b16 %v3865, %v3865
        %v3882 = vpack.c.b16 %v3866, %v3866
        %v3883 = vpack.c.b16 %v3867, %v3867
        %v3884 = vpack.c.b16 %v3868, %v3868
        %v3885 = vpack.c.b16 %v3869, %v3869
        %v3886 = vpack.c.b16 %v3870, %v3870
        %v3887 = vpack.c.b16 %v3871, %v3871
        %v3888 = vpack.c.b16 %v3872, %v3872
        %v3889 = vpack.c.b16 %v3873, %v3873
        %v3890 = vpack.c.b16 %v3874, %v3874
        %v3891 = vpack.c.b16 %v3875, %v3875
        %v3892 = vpack.c.b16 %v3876, %v3876
        %v3893 = vpack.c.b16 %v3877, %v3877
        %v3894 = vpack.c.b16 %v3878, %v3878
        %v3896 = vshll.u32 %v3879, 16
        %v3898 = vrot.slane %v3896, 5
        %v3899 = vshrl.u32 %v3879, 16
        %v3901 = vrot.slane %v3899, 4
        %v3902 = vor.u32 %v3901, %v3898
        %v3903 = vrot.slane %v3902, 4
        %v3905 = vshll.u32 %v3880, 16
        %v3907 = vrot.slane %v3905, 5
        %v3908 = vsel %vm1773, %v3903, %v3907
        %v3909 = vshrl.u32 %v3880, 16
        %v3911 = vrot.slane %v3909, 4
        %v3912 = vor.u32 %v3911, %v3907
        %v3913 = vrot.slane %v3912, 4
        %v3915 = vshll.u32 %v3881, 16
        %v3917 = vrot.slane %v3915, 5
        %v3918 = vsel %vm1773, %v3913, %v3917
        %v3919 = vshrl.u32 %v3881, 16
        %v3921 = vrot.slane %v3919, 4
        %v3922 = vor.u32 %v3921, %v3917
        %v3923 = vrot.slane %v3922, 4
        %v3925 = vshll.u32 %v3882, 16
        %v3927 = vrot.slane %v3925, 5
        %v3928 = vsel %vm1773, %v3923, %v3927
        %v3929 = vshrl.u32 %v3882, 16
        %v3931 = vrot.slane %v3929, 4
        %v3932 = vor.u32 %v3931, %v3927
        %v3933 = vrot.slane %v3932, 4
        %v3935 = vshll.u32 %v3883, 16
        %v3937 = vrot.slane %v3935, 5
        %v3938 = vsel %vm1773, %v3933, %v3937
        %v3939 = vshrl.u32 %v3883, 16
        %v3941 = vrot.slane %v3939, 4
        %v3942 = vor.u32 %v3941, %v3937
        %v3943 = vrot.slane %v3942, 4
        %v3945 = vshll.u32 %v3884, 16
        %v3947 = vrot.slane %v3945, 5
        %v3948 = vsel %vm1773, %v3943, %v3947
        %v3949 = vshrl.u32 %v3884, 16
        %v3951 = vrot.slane %v3949, 4
        %v3952 = vor.u32 %v3951, %v3947
        %v3953 = vrot.slane %v3952, 4
        %v3955 = vshll.u32 %v3885, 16
        %v3957 = vrot.slane %v3955, 5
        %v3958 = vsel %vm1773, %v3953, %v3957
        %v3959 = vshrl.u32 %v3885, 16
        %v3961 = vrot.slane %v3959, 4
        %v3962 = vor.u32 %v3961, %v3957
        %v3963 = vrot.slane %v3962, 4
        %v3965 = vshll.u32 %v3886, 16
        %v3967 = vrot.slane %v3965, 5
        %v3968 = vsel %vm1773, %v3963, %v3967
        %v3969 = vshrl.u32 %v3886, 16
        %v3971 = vrot.slane %v3969, 4
        %v3972 = vor.u32 %v3971, %v3967
        %v3973 = vrot.slane %v3972, 4
        %v3975 = vshll.u32 %v3887, 16
        %v3977 = vrot.slane %v3975, 5
        %v3978 = vshrl.u32 %v3887, 16
        %v3980 = vrot.slane %v3978, 4
        %v3981 = vor.u32 %v3980, %v3977
        %v3982 = vrot.slane %v3981, 4
        %v3984 = vshll.u32 %v3888, 16
        %v3986 = vrot.slane %v3984, 5
        %v3987 = vsel %vm1773, %v3982, %v3986
        %v3988 = vshrl.u32 %v3888, 16
        %v3990 = vrot.slane %v3988, 4
        %v3991 = vor.u32 %v3990, %v3986
        %v3992 = vrot.slane %v3991, 4
        %v3994 = vshll.u32 %v3889, 16
        %v3996 = vrot.slane %v3994, 5
        %v3997 = vsel %vm1773, %v3992, %v3996
        %v3998 = vshrl.u32 %v3889, 16
        %v4000 = vrot.slane %v3998, 4
        %v4001 = vor.u32 %v4000, %v3996
        %v4002 = vrot.slane %v4001, 4
        %v4004 = vshll.u32 %v3890, 16
        %v4006 = vrot.slane %v4004, 5
        %v4007 = vsel %vm1773, %v4002, %v4006
        %v4008 = vshrl.u32 %v3890, 16
        %v4010 = vrot.slane %v4008, 4
        %v4011 = vor.u32 %v4010, %v4006
        %v4012 = vrot.slane %v4011, 4
        %v4014 = vshll.u32 %v3891, 16
        %v4016 = vrot.slane %v4014, 5
        %v4017 = vsel %vm1773, %v4012, %v4016
        %v4018 = vshrl.u32 %v3891, 16
        %v4020 = vrot.slane %v4018, 4
        %v4021 = vor.u32 %v4020, %v4016
        %v4022 = vrot.slane %v4021, 4
        %v4024 = vshll.u32 %v3892, 16
        %v4026 = vrot.slane %v4024, 5
        %v4027 = vsel %vm1773, %v4022, %v4026
        %v4028 = vshrl.u32 %v3892, 16
        %v4030 = vrot.slane %v4028, 4
        %v4031 = vor.u32 %v4030, %v4026
        %v4032 = vrot.slane %v4031, 4
        %v4034 = vshll.u32 %v3893, 16
        %v4036 = vrot.slane %v4034, 5
        %v4037 = vsel %vm1773, %v4032, %v4036
        %v4038 = vshrl.u32 %v3893, 16
        %v4040 = vrot.slane %v4038, 4
        %v4041 = vor.u32 %v4040, %v4036
        %v4042 = vrot.slane %v4041, 4
        %v4044 = vshll.u32 %v3894, 16
        %v4046 = vrot.slane %v4044, 5
        %v4047 = vsel %vm1773, %v4042, %v4046
        %v4048 = vshrl.u32 %v3894, 16
        %v4050 = vrot.slane %v4048, 4
        %v4051 = vor.u32 %v4050, %v4046
        %v4052 = vrot.slane %v4051, 4
        %v4071 = vld [vmem:[#allocation3 + $0x14] sm:$0x8]
        %v4072 = vsel %vm1379, %v3898, %v4071
        %4073 = vst [vmem:[#allocation3 + $0x14] sm:$0x8] %v4072
        %4074 = vst [vmem:[#allocation3 + $0x20] sm:$0xf] %v3908
        %4075 = vst [vmem:[#allocation3 + $0x2c] sm:$0xf] %v3918
        %4076 = vst [vmem:[#allocation3 + $0x38] sm:$0xf] %v3928
        %4077 = vst [vmem:[#allocation3 + $0x44] sm:$0xf] %v3938
        %4078 = vst [vmem:[#allocation3 + $0x50] sm:$0xf] %v3948
        %4079 = vst [vmem:[#allocation3 + $0x5c] sm:$0xf] %v3958
        %4080 = vst [vmem:[#allocation3 + $0x68] sm:$0xf] %v3968
        %vm4081 = vmand %vm3755, %vm1771
        %v4082 = vld [vmem:[#allocation3 + $0x74] sm:$0xf]
        %v4083 = vsel %vm4081, %v3973, %v4082
        %4084 = vst [vmem:[#allocation3 + $0x74] sm:$0xf] %v4083
        %v4085 = vld [vmem:[#allocation3 + $0xa4] sm:$0x8]
        %v4086 = vsel %vm1379, %v3977, %v4085
        %4087 = vst [vmem:[#allocation3 + $0xa4] sm:$0x8] %v4086
        %4088 = vst [vmem:[#allocation3 + $0xb0] sm:$0xf] %v3987
        %4089 = vst [vmem:[#allocation3 + $0xbc] sm:$0xf] %v3997
        %4090 = vst [vmem:[#allocation3 + $0xc8] sm:$0xf] %v4007
        %4091 = vst [vmem:[#allocation3 + $0xd4] sm:$0xf] %v4017
        %4092 = vst [vmem:[#allocation3 + $0xe0] sm:$0xf] %v4027
        %4093 = vst [vmem:[#allocation3 + $0xec] sm:$0xf] %v4037
        %4094 = vst [vmem:[#allocation3 + $0xf8] sm:$0xf] %v4047
        %v4095 = vld [vmem:[#allocation3 + $0x104] sm:$0xf]
        %v4096 = vsel %vm4081, %v4052, %v4095
        %4097 = vst [vmem:[#allocation3 + $0x104] sm:$0xf] %v4096
        %v4098 = vld [vmem:[#allocation3 + $0xc] sm:$0xff]
        %v4099 = vld [vmem:[#allocation3 + $0x14] sm:$0xf]
        %v4100 = vld [vmem:[#allocation3 + $0x18] sm:$0xff]
        %v4101 = vld [vmem:[#allocation3 + $0x20] sm:$0xf]
        %v4102 = vld [vmem:[#allocation3 + $0x24] sm:$0xff]
        %v4103 = vld [vmem:[#allocation3 + $0x2c] sm:$0xf]
        %v4104 = vld [vmem:[#allocation3 + $0x30] sm:$0xff]
        %v4105 = vld [vmem:[#allocation3 + $0x38] sm:$0xf]
        %v4106 = vld [vmem:[#allocation3 + $0x3c] sm:$0xff]
        %v4107 = vld [vmem:[#allocation3 + $0x44] sm:$0xf]
        %v4108 = vld [vmem:[#allocation3 + $0x48] sm:$0xff]
        %v4109 = vld [vmem:[#allocation3 + $0x50] sm:$0xf]
        %v4110 = vld [vmem:[#allocation3 + $0x54] sm:$0xff]
        %v4111 = vld [vmem:[#allocation3 + $0x5c] sm:$0xf]
        %v4112 = vld [vmem:[#allocation3 + $0x60] sm:$0xff]
        %v4113 = vld [vmem:[#allocation3 + $0x68] sm:$0xf]
        %v4114 = vld [vmem:[#allocation3 + $0x9c] sm:$0xff]
        %v4115 = vld [vmem:[#allocation3 + $0xa4] sm:$0xf]
        %v4116 = vld [vmem:[#allocation3 + $0xa8] sm:$0xff]
        %v4117 = vld [vmem:[#allocation3 + $0xb0] sm:$0xf]
        %v4118 = vld [vmem:[#allocation3 + $0xb4] sm:$0xff]
        %v4119 = vld [vmem:[#allocation3 + $0xbc] sm:$0xf]
        %v4120 = vld [vmem:[#allocation3 + $0xc0] sm:$0xff]
        %v4121 = vld [vmem:[#allocation3 + $0xc8] sm:$0xf]
        %v4122 = vld [vmem:[#allocation3 + $0xcc] sm:$0xff]
        %v4123 = vld [vmem:[#allocation3 + $0xd4] sm:$0xf]
        %v4124 = vld [vmem:[#allocation3 + $0xd8] sm:$0xff]
        %v4125 = vld [vmem:[#allocation3 + $0xe0] sm:$0xf]
        %v4126 = vld [vmem:[#allocation3 + $0xe4] sm:$0xff]
        %v4127 = vld [vmem:[#allocation3 + $0xec] sm:$0xf]
        %v4128 = vld [vmem:[#allocation3 + $0xf0] sm:$0xff]
        %v4129 = vld [vmem:[#allocation3 + $0xf8] sm:$0xf]
        %v4130 = vld [vmem:[#allocation15] sm:$0xf]
        %v4131 = vld [vmem:[#allocation15 + $0x4] sm:$0xf]
        %v4132 = vld [vmem:[#allocation15 + $0x8] sm:$0xf]
        %v4133 = vld [vmem:[#allocation15 + $0xc] sm:$0xf]
        %v4134 = vld [vmem:[#allocation15 + $0x10] sm:$0xf]
        %v4135 = vld [vmem:[#allocation15 + $0x14] sm:$0xf]
        %v4136 = vld [vmem:[#allocation15 + $0x18] sm:$0xf]
        %v4137 = vld [vmem:[#allocation15 + $0x1c] sm:$0xf]
        %v4138 = vld [vmem:[#allocation15 + $0x20] sm:$0xf]
        %v4139 = vld [vmem:[#allocation15 + $0x24] sm:$0xf]
        %v4140 = vld [vmem:[#allocation15 + $0x28] sm:$0xf]
        %v4141 = vld [vmem:[#allocation15 + $0x2c] sm:$0xf]
        %v4142 = vld [vmem:[#allocation15 + $0x30] sm:$0xf]
        %v4143 = vld [vmem:[#allocation15 + $0x34] sm:$0xf]
        %v4144 = vld [vmem:[#allocation15 + $0x38] sm:$0xf]
        %v4145 = vld [vmem:[#allocation15 + $0x3c] sm:$0xf]
        %v4146 = vld [vmem:[#allocation15 + $0x40] sm:$0xf]
        %v4147 = vld [vmem:[#allocation15 + $0x44] sm:$0xf]
        %v4148 = vld [vmem:[#allocation15 + $0x48] sm:$0xf]
        %v4149 = vld [vmem:[#allocation15 + $0x4c] sm:$0xf]
        %v4150 = vld [vmem:[#allocation15 + $0x50] sm:$0xf]
        %v4151 = vld [vmem:[#allocation15 + $0x54] sm:$0xf]
        %v4152 = vld [vmem:[#allocation15 + $0x58] sm:$0xf]
        %v4153 = vld [vmem:[#allocation15 + $0x5c] sm:$0xf]
        %v4154 = vld [vmem:[#allocation15 + $0x60] sm:$0xf]
        %v4155 = vld [vmem:[#allocation15 + $0x64] sm:$0xf]
        %v4156 = vld [vmem:[#allocation15 + $0x68] sm:$0xf]
        %v4157 = vld [vmem:[#allocation15 + $0x6c] sm:$0xf]
        %v4158 = vld [vmem:[#allocation15 + $0x70] sm:$0xf]
        %v4159 = vld [vmem:[#allocation15 + $0x74] sm:$0xf]
        %v4160 = vld [vmem:[#allocation15 + $0x78] sm:$0xf]
        %v4161 = vld [vmem:[#allocation15 + $0x7c] sm:$0xf]
        %v4162 = vld [vmem:[#allocation15 + $0x80] sm:$0xf]
        %v4163 = vld [vmem:[#allocation15 + $0x84] sm:$0xf]
        %v4164 = vld [vmem:[#allocation15 + $0x88] sm:$0xf]
        %v4165 = vld [vmem:[#allocation15 + $0x8c] sm:$0xf]
        %v4166 = vld [vmem:[#allocation15 + $0x90] sm:$0xf]
        %v4167 = vld [vmem:[#allocation15 + $0x94] sm:$0xf]
        %v4168 = vld [vmem:[#allocation15 + $0x98] sm:$0xf]
        %v4169 = vld [vmem:[#allocation15 + $0x9c] sm:$0xf]
        %v4170 = vld [vmem:[#allocation15 + $0xa0] sm:$0xf]
        %v4171 = vld [vmem:[#allocation15 + $0xa4] sm:$0xf]
        %v4172 = vld [vmem:[#allocation15 + $0xa8] sm:$0xf]
        %v4173 = vld [vmem:[#allocation15 + $0xac] sm:$0xf]
        %v4174 = vld [vmem:[#allocation15 + $0xb0] sm:$0xf]
        %v4175 = vld [vmem:[#allocation15 + $0xb4] sm:$0xf]
        %v4176 = vld [vmem:[#allocation15 + $0xb8] sm:$0xf]
        %v4177 = vld [vmem:[#allocation15 + $0xbc] sm:$0xf]
        %v4178 = vld [vmem:[#allocation3 + $0x6c] sm:$0xff]
        %v4179 = vld [vmem:[#allocation3 + $0x74] sm:$0xf]
        %v4180 = vld [vmem:[#allocation3 + $0xfc] sm:$0xff]
        %v4181 = vld [vmem:[#allocation3 + $0x104] sm:$0xf]
        %s4182 = scalar_lea.vmem [#allocation15], 192
        %v4183 = vld [vmem:[%s4182] sm:$0xf]
        %v4184 = vld [vmem:[%s4182 + $0x4] sm:$0xf]
        %v4185 = vld [vmem:[%s4182 + $0x8] sm:$0xf]
        %v4186 = vld [vmem:[%s4182 + $0xc] sm:$0xf]
        %v4187 = vld [vmem:[%s4182 + $0x10] sm:$0xf]
        %v4188 = vld [vmem:[%s4182 + $0x14] sm:$0xf]
        %v4189 = vld [vmem:[%s4182 + $0x18] sm:$0xf]
        %v4190 = vld [vmem:[%s4182 + $0x1c] sm:$0xf]
        %v4191 = vld [vmem:[%s4182 + $0x20] sm:$0xf]
        %v4192 = vld [vmem:[%s4182 + $0x24] sm:$0xf]
        %v4193 = vld [vmem:[%s4182 + $0x28] sm:$0xf]
        %v4194 = vld [vmem:[%s4182 + $0x2c] sm:$0xf]
        %v4195 = vld [vmem:[%s4182 + $0x30] sm:$0xf]
        %v4196 = vld [vmem:[%s4182 + $0x34] sm:$0xf]
        %v4197 = vld [vmem:[%s4182 + $0x38] sm:$0xf]
        %v4198 = vld [vmem:[%s4182 + $0x3c] sm:$0xf]
        %v4199 = vld [vmem:[%s4182 + $0x40] sm:$0xf]
        %v4200 = vld [vmem:[%s4182 + $0x44] sm:$0xf]
        %v4201 = vld [vmem:[%s4182 + $0x48] sm:$0xf]
        %v4202 = vld [vmem:[%s4182 + $0x4c] sm:$0xf]
        %v4203 = vld [vmem:[%s4182 + $0x50] sm:$0xf]
        %v4204 = vld [vmem:[%s4182 + $0x54] sm:$0xf]
        %v4205 = vld [vmem:[%s4182 + $0x58] sm:$0xf]
        %v4206 = vld [vmem:[%s4182 + $0x5c] sm:$0xf]
        %v4207 = vld [vmem:[%s4182 + $0x60] sm:$0xf]
        %v4208 = vld [vmem:[%s4182 + $0x64] sm:$0xf]
        %v4209 = vld [vmem:[%s4182 + $0x68] sm:$0xf]
        %v4210 = vld [vmem:[%s4182 + $0x6c] sm:$0xf]
        %v4211 = vld [vmem:[%s4182 + $0x70] sm:$0xf]
        %v4212 = vld [vmem:[%s4182 + $0x74] sm:$0xf]
        %v4213 = vld [vmem:[%s4182 + $0x78] sm:$0xf]
        %v4214 = vld [vmem:[%s4182 + $0x7c] sm:$0xf]
        %v4215 = vld [vmem:[%s4182 + $0x80] sm:$0xf]
        %v4216 = vld [vmem:[%s4182 + $0x84] sm:$0xf]
        %v4217 = vld [vmem:[%s4182 + $0x88] sm:$0xf]
        %v4218 = vld [vmem:[%s4182 + $0x8c] sm:$0xf]
        %v4219 = vld [vmem:[%s4182 + $0x90] sm:$0xf]
        %v4220 = vld [vmem:[%s4182 + $0x94] sm:$0xf]
        %v4221 = vld [vmem:[%s4182 + $0x98] sm:$0xf]
        %v4222 = vld [vmem:[%s4182 + $0x9c] sm:$0xf]
        %v4223 = vld [vmem:[%s4182 + $0xa0] sm:$0xf]
        %v4224 = vld [vmem:[%s4182 + $0xa4] sm:$0xf]
        %v4225 = vld [vmem:[%s4182 + $0xa8] sm:$0xf]
        %v4226 = vld [vmem:[%s4182 + $0xac] sm:$0xf]
        %v4227 = vld [vmem:[%s4182 + $0xb0] sm:$0xf]
        %v4228 = vld [vmem:[%s4182 + $0xb4] sm:$0xf]
        %v4229 = vld [vmem:[%s4182 + $0xb8] sm:$0xf]
        %v4230 = vld [vmem:[%s4182 + $0xbc] sm:$0xf]
        %v4263 = vunpack.c.l.b16 %v4100
        %v4264 = vunpack.c.h.b16 %v4100
        %v4265 = vunpack.c.l.b16 %v4101
        %v4266 = vunpack.c.l.b16 %v4102
        %v4267 = vunpack.c.h.b16 %v4102
        %v4268 = vunpack.c.l.b16 %v4103
        %v4269 = vunpack.c.l.b16 %v4104
        %v4270 = vunpack.c.h.b16 %v4104
        %v4271 = vunpack.c.l.b16 %v4105
        %v4272 = vunpack.c.l.b16 %v4106
        %v4273 = vunpack.c.h.b16 %v4106
        %v4274 = vunpack.c.l.b16 %v4107
        %v4275 = vunpack.c.l.b16 %v4108
        %v4276 = vunpack.c.h.b16 %v4108
        %v4277 = vunpack.c.l.b16 %v4109
        %v4278 = vunpack.c.l.b16 %v4110
        %v4279 = vunpack.c.h.b16 %v4110
        %v4280 = vunpack.c.l.b16 %v4111
        %v4281 = vunpack.c.l.b16 %v4112
        %v4282 = vunpack.c.h.b16 %v4112
        %v4283 = vunpack.c.l.b16 %v4113
        %v4284 = vunpack.c.l.b16 %v4178
        %v4285 = vunpack.c.h.b16 %v4178
        %v4286 = vunpack.c.l.b16 %v4179
        %v4287 = vunpack.c.l.b16 %v4116
        %v4288 = vunpack.c.h.b16 %v4116
        %v4289 = vunpack.c.l.b16 %v4117
        %v4290 = vunpack.c.l.b16 %v4118
        %v4291 = vunpack.c.h.b16 %v4118
        %v4292 = vunpack.c.l.b16 %v4119
        %v4293 = vunpack.c.l.b16 %v4120
        %v4294 = vunpack.c.h.b16 %v4120
        %v4295 = vunpack.c.l.b16 %v4121
        %v4296 = vunpack.c.l.b16 %v4122
        %v4297 = vunpack.c.h.b16 %v4122
        %v4298 = vunpack.c.l.b16 %v4123
        %v4299 = vunpack.c.l.b16 %v4124
        %v4300 = vunpack.c.h.b16 %v4124
        %v4301 = vunpack.c.l.b16 %v4125
        %v4302 = vunpack.c.l.b16 %v4126
        %v4303 = vunpack.c.h.b16 %v4126
        %v4304 = vunpack.c.l.b16 %v4127
        %v4305 = vunpack.c.l.b16 %v4128
        %v4306 = vunpack.c.h.b16 %v4128
        %v4307 = vunpack.c.l.b16 %v4129
        %v4308 = vunpack.c.l.b16 %v4180
        %v4309 = vunpack.c.h.b16 %v4180
        %v4310 = vunpack.c.l.b16 %v4181
        %v4311 = vpack.c.b16 %v4266, %v4263
        %v4312 = vpack.c.b16 %v4267, %v4264
        %v4313 = vpack.c.b16 %v4268, %v4265
        %v4314 = vpack.c.b16 %v4272, %v4269
        %v4315 = vpack.c.b16 %v4273, %v4270
        %v4316 = vpack.c.b16 %v4274, %v4271
        %v4317 = vpack.c.b16 %v4278, %v4275
        %v4318 = vpack.c.b16 %v4279, %v4276
        %v4319 = vpack.c.b16 %v4280, %v4277
        %v4320 = vpack.c.b16 %v4284, %v4281
        %v4321 = vpack.c.b16 %v4285, %v4282
        %v4322 = vpack.c.b16 %v4286, %v4283
        %v4323 = vpack.c.b16 %v4290, %v4287
        %v4324 = vpack.c.b16 %v4291, %v4288
        %v4325 = vpack.c.b16 %v4292, %v4289
        %v4326 = vpack.c.b16 %v4296, %v4293
        %v4327 = vpack.c.b16 %v4297, %v4294
        %v4328 = vpack.c.b16 %v4298, %v4295
        %v4329 = vpack.c.b16 %v4302, %v4299
        %v4330 = vpack.c.b16 %v4303, %v4300
        %v4331 = vpack.c.b16 %v4304, %v4301
        %v4332 = vpack.c.b16 %v4308, %v4305
        %v4333 = vpack.c.b16 %v4309, %v4306
        %v4334 = vpack.c.b16 %v4310, %v4307
        %v4407 = vunpack.c.l.b16 %v4183
        %v4408 = vunpack.c.l.b16 %v4184
        %v4409 = vunpack.c.l.b16 %v4185
        %v4410 = vunpack.c.l.b16 %v4186
        %v4411 = vunpack.c.l.b16 %v4187
        %v4412 = vunpack.c.l.b16 %v4188
        %v4413 = vunpack.c.l.b16 %v4189
        %v4414 = vunpack.c.l.b16 %v4190
        %v4415 = vunpack.c.l.b16 %v4191
        %v4416 = vunpack.c.l.b16 %v4192
        %v4417 = vunpack.c.l.b16 %v4193
        %v4418 = vunpack.c.l.b16 %v4194
        %v4419 = vunpack.c.l.b16 %v4195
        %v4420 = vunpack.c.l.b16 %v4196
        %v4421 = vunpack.c.l.b16 %v4197
        %v4422 = vunpack.c.l.b16 %v4198
        %v4423 = vunpack.c.l.b16 %v4199
        %v4424 = vunpack.c.l.b16 %v4200
        %v4425 = vunpack.c.l.b16 %v4201
        %v4426 = vunpack.c.l.b16 %v4202
        %v4427 = vunpack.c.l.b16 %v4203
        %v4428 = vunpack.c.l.b16 %v4204
        %v4429 = vunpack.c.l.b16 %v4205
        %v4430 = vunpack.c.l.b16 %v4206
        %v4431 = vunpack.c.l.b16 %v4207
        %v4432 = vunpack.c.l.b16 %v4208
        %v4433 = vunpack.c.l.b16 %v4209
        %v4434 = vunpack.c.l.b16 %v4210
        %v4435 = vunpack.c.l.b16 %v4211
        %v4436 = vunpack.c.l.b16 %v4212
        %v4437 = vunpack.c.l.b16 %v4213
        %v4438 = vunpack.c.l.b16 %v4214
        %v4439 = vunpack.c.l.b16 %v4215
        %v4440 = vunpack.c.l.b16 %v4216
        %v4441 = vunpack.c.l.b16 %v4217
        %v4442 = vunpack.c.l.b16 %v4218
        %v4443 = vunpack.c.l.b16 %v4219
        %v4444 = vunpack.c.l.b16 %v4220
        %v4445 = vunpack.c.l.b16 %v4221
        %v4446 = vunpack.c.l.b16 %v4222
        %v4447 = vunpack.c.l.b16 %v4223
        %v4448 = vunpack.c.l.b16 %v4224
        %v4449 = vunpack.c.l.b16 %v4225
        %v4450 = vunpack.c.l.b16 %v4226
        %v4451 = vunpack.c.l.b16 %v4227
        %v4452 = vunpack.c.l.b16 %v4228
        %v4453 = vunpack.c.l.b16 %v4229
        %v4454 = vunpack.c.l.b16 %v4230
        %v4455 = vpack.c.b16 %v4408, %v4407
        %v4456 = vpack.c.b16 %v4410, %v4409
        %v4457 = vpack.c.b16 %v4412, %v4411
        %v4458 = vpack.c.b16 %v4414, %v4413
        %v4459 = vpack.c.b16 %v4416, %v4415
        %v4460 = vpack.c.b16 %v4418, %v4417
        %v4461 = vpack.c.b16 %v4420, %v4419
        %v4462 = vpack.c.b16 %v4422, %v4421
        %v4463 = vpack.c.b16 %v4424, %v4423
        %v4464 = vpack.c.b16 %v4426, %v4425
        %v4465 = vpack.c.b16 %v4428, %v4427
        %v4466 = vpack.c.b16 %v4430, %v4429
        %v4467 = vpack.c.b16 %v4432, %v4431
        %v4468 = vpack.c.b16 %v4434, %v4433
        %v4469 = vpack.c.b16 %v4436, %v4435
        %v4470 = vpack.c.b16 %v4438, %v4437
        %v4471 = vpack.c.b16 %v4440, %v4439
        %v4472 = vpack.c.b16 %v4442, %v4441
        %v4473 = vpack.c.b16 %v4444, %v4443
        %v4474 = vpack.c.b16 %v4446, %v4445
        %v4475 = vpack.c.b16 %v4448, %v4447
        %v4476 = vpack.c.b16 %v4450, %v4449
        %v4477 = vpack.c.b16 %v4452, %v4451
        %v4478 = vpack.c.b16 %v4454, %v4453
        %4503 = vmatprep.subr.bf16.mxu0 0
        %4504 = vmatpush1.bf16.msra.mxu0 %v4462
        %4505 = vmatprep.subr.bf16.mxu0 0
        %4506 = vmatpush1.bf16.msra.mxu0 %v4461
        %4507 = vmatprep.subr.bf16.mxu0 0
        %4508 = vmatpush1.bf16.msra.mxu0 %v4460
        %4509 = vmatprep.subr.bf16.mxu0 0
        %4510 = vmatpush1.bf16.msra.mxu0 %v4459
        %4511 = vmatprep.subr.bf16.mxu0 0
        %4512 = vmatpush1.bf16.msra.mxu0 %v4458
        %4513 = vmatprep.subr.bf16.mxu0 0
        %4514 = vmatpush1.bf16.msra.mxu0 %v4457
        %4515 = vmatprep.subr.bf16.mxu0 0
        %4516 = vmatpush1.bf16.msra.mxu0 %v4456
        %4517 = vmatprep.subr.bf16.mxu0 0
        %4518 = vmatpush1.bf16.msra.mxu0 %v4455
        %4519 = vmatprep.subr.bf16.mxu0 0
        %4520 = vmatpush2.bf16.msra.mxu0 %v4470
        %4521 = vmatprep.subr.bf16.mxu0 0
        %4522 = vmatpush2.bf16.msra.mxu0 %v4469
        %4523 = vmatprep.subr.bf16.mxu0 0
        %4524 = vmatpush2.bf16.msra.mxu0 %v4468
        %4525 = vmatprep.subr.bf16.mxu0 0
        %4526 = vmatpush2.bf16.msra.mxu0 %v4467
        %4527 = vmatprep.subr.bf16.mxu0 0
        %4528 = vmatpush2.bf16.msra.mxu0 %v4466
        %4529 = vmatprep.subr.bf16.mxu0 0
        %4530 = vmatpush2.bf16.msra.mxu0 %v4465
        %4531 = vmatprep.subr.bf16.mxu0 0
        %4532 = vmatpush2.bf16.msra.mxu0 %v4464
        %4533 = vmatprep.subr.bf16.mxu0 0
        %4534 = vmatpush2.bf16.msra.mxu0 %v4463
        %4535 = vmatprep.mubr.bf16.mxu0 %v4312
        %4536 = vmatmul.mubr.bf16.gmra.mxu0 %v4311
        %v4537 = vpop.f32.mrf.mxu0
        %v4538 = vadd.f32 0.0, %v4537
        %v4539 = vpop.f32.mrf.mxu0
        %v4540 = vpop.f32.mrf.mxu0
        %v4541 = vadd.f32 0.0, %v4540
        %v4542 = vpop.f32.mrf.mxu0
        %4543 = vmatprep.mubr.bf16.mxu0 %v4315
        %4544 = vmatmul.mubr.bf16.gmra.mxu0 %v4314
        %v4545 = vpop.f32.mrf.mxu0
        %v4546 = vadd.f32 0.0, %v4545
        %v4547 = vpop.f32.mrf.mxu0
        %v4548 = vpop.f32.mrf.mxu0
        %v4549 = vadd.f32 0.0, %v4548
        %v4550 = vpop.f32.mrf.mxu0
        %4551 = vmatprep.mubr.bf16.mxu0 %v4318
        %4552 = vmatmul.mubr.bf16.gmra.mxu0 %v4317
        %v4553 = vpop.f32.mrf.mxu0
        %v4554 = vadd.f32 0.0, %v4553
        %v4555 = vpop.f32.mrf.mxu0
        %v4556 = vpop.f32.mrf.mxu0
        %v4557 = vadd.f32 0.0, %v4556
        %v4558 = vpop.f32.mrf.mxu0
        %4559 = vmatprep.mubr.bf16.mxu0 %v4321
        %4560 = vmatmul.mubr.bf16.gmra.mxu0 %v4320
        %v4561 = vpop.f32.mrf.mxu0
        %v4562 = vadd.f32 0.0, %v4561
        %v4563 = vpop.f32.mrf.mxu0
        %v4564 = vpop.f32.mrf.mxu0
        %v4565 = vadd.f32 0.0, %v4564
        %v4566 = vpop.f32.mrf.mxu0
        %4567 = vmatprep.mubr.bf16.mxu0 %v4324
        %4568 = vmatmul.mubr.bf16.gmra.mxu0 %v4323
        %v4569 = vpop.f32.mrf.mxu0
        %v4570 = vadd.f32 0.0, %v4569
        %v4571 = vpop.f32.mrf.mxu0
        %v4572 = vpop.f32.mrf.mxu0
        %v4573 = vadd.f32 0.0, %v4572
        %v4574 = vpop.f32.mrf.mxu0
        %4575 = vmatprep.mubr.bf16.mxu0 %v4327
        %4576 = vmatmul.mubr.bf16.gmra.mxu0 %v4326
        %v4577 = vpop.f32.mrf.mxu0
        %v4578 = vadd.f32 0.0, %v4577
        %v4579 = vpop.f32.mrf.mxu0
        %v4580 = vpop.f32.mrf.mxu0
        %v4581 = vadd.f32 0.0, %v4580
        %v4582 = vpop.f32.mrf.mxu0
        %4583 = vmatprep.mubr.bf16.mxu0 %v4330
        %4584 = vmatmul.mubr.bf16.gmra.mxu0 %v4329
        %v4585 = vpop.f32.mrf.mxu0
        %v4586 = vadd.f32 0.0, %v4585
        %v4587 = vpop.f32.mrf.mxu0
        %v4588 = vpop.f32.mrf.mxu0
        %v4589 = vadd.f32 0.0, %v4588
        %v4590 = vpop.f32.mrf.mxu0
        %4591 = vmatprep.mubr.bf16.mxu0 %v4333
        %4592 = vmatmul.mubr.bf16.gmra.mxu0 %v4332
        %v4593 = vpop.f32.mrf.mxu0
        %v4594 = vadd.f32 0.0, %v4593
        %v4595 = vpop.f32.mrf.mxu0
        %v4596 = vpop.f32.mrf.mxu0
        %v4597 = vadd.f32 0.0, %v4596
        %v4598 = vpop.f32.mrf.mxu0
        %4599 = vdwg.mxu0
        %4600 = vmatprep.subr.bf16.mxu0 0
        %4601 = vmatpush1.bf16.msra.mxu0 %v4478
        %4602 = vmatprep.subr.bf16.mxu0 0
        %4603 = vmatpush1.bf16.msra.mxu0 %v4477
        %4604 = vmatprep.subr.bf16.mxu0 0
        %4605 = vmatpush1.bf16.msra.mxu0 %v4476
        %4606 = vmatprep.subr.bf16.mxu0 0
        %4607 = vmatpush1.bf16.msra.mxu0 %v4475
        %4608 = vmatprep.subr.bf16.mxu0 0
        %4609 = vmatpush1.bf16.msra.mxu0 %v4474
        %4610 = vmatprep.subr.bf16.mxu0 0
        %4611 = vmatpush1.bf16.msra.mxu0 %v4473
        %4612 = vmatprep.subr.bf16.mxu0 0
        %4613 = vmatpush1.bf16.msra.mxu0 %v4472
        %4614 = vmatprep.subr.bf16.mxu0 0
        %4615 = vmatpush1.bf16.msra.mxu0 %v4471
        %4616 = vmatprep.subr.bf16.mxu0 0
        %4617 = vmatpush2.bf16.msra.mxu0 0
        %4618 = vmatprep.subr.bf16.mxu0 0
        %4619 = vmatpush2.bf16.msra.mxu0 0
        %4620 = vmatprep.subr.bf16.mxu0 0
        %4621 = vmatpush2.bf16.msra.mxu0 0
        %4622 = vmatprep.subr.bf16.mxu0 0
        %4623 = vmatpush2.bf16.msra.mxu0 0
        %4624 = vmatprep.subr.bf16.mxu0 0
        %4625 = vmatpush2.bf16.msra.mxu0 0
        %4626 = vmatprep.subr.bf16.mxu0 0
        %4627 = vmatpush2.bf16.msra.mxu0 0
        %4628 = vmatprep.subr.bf16.mxu0 0
        %4629 = vmatpush2.bf16.msra.mxu0 0
        %4630 = vmatprep.subr.bf16.mxu0 0
        %4631 = vmatpush2.bf16.msra.mxu0 0
        %4632 = vmatprep.mubr.bf16.mxu0 0
        %4633 = vmatmul.mubr.bf16.gmra.mxu0 %v4313
        %v4634 = vpop.f32.mrf.mxu0
        %v4635 = vadd.f32 %v4538, %v4634
        %v4636 = vpop.f32.mrf.mxu0
        %v4637 = vpop.f32.mrf.mxu0
        %v4638 = vadd.f32 %v4541, %v4637
        %v4639 = vpop.f32.mrf.mxu0
        %4640 = vmatprep.mubr.bf16.mxu0 0
        %4641 = vmatmul.mubr.bf16.gmra.mxu0 %v4316
        %v4642 = vpop.f32.mrf.mxu0
        %v4643 = vadd.f32 %v4546, %v4642
        %v4644 = vpop.f32.mrf.mxu0
        %v4645 = vpop.f32.mrf.mxu0
        %v4646 = vadd.f32 %v4549, %v4645
        %v4647 = vpop.f32.mrf.mxu0
        %4648 = vmatprep.mubr.bf16.mxu0 0
        %4649 = vmatmul.mubr.bf16.gmra.mxu0 %v4319
        %v4650 = vpop.f32.mrf.mxu0
        %v4651 = vadd.f32 %v4554, %v4650
        %v4652 = vpop.f32.mrf.mxu0
        %v4653 = vpop.f32.mrf.mxu0
        %v4654 = vadd.f32 %v4557, %v4653
        %v4655 = vpop.f32.mrf.mxu0
        %4656 = vmatprep.mubr.bf16.mxu0 0
        %4657 = vmatmul.mubr.bf16.gmra.mxu0 %v4322
        %v4658 = vpop.f32.mrf.mxu0
        %v4659 = vadd.f32 %v4562, %v4658
        %v4660 = vpop.f32.mrf.mxu0
        %v4661 = vpop.f32.mrf.mxu0
        %v4662 = vadd.f32 %v4565, %v4661
        %v4663 = vpop.f32.mrf.mxu0
        %4664 = vmatprep.mubr.bf16.mxu0 0
        %4665 = vmatmul.mubr.bf16.gmra.mxu0 %v4325
        %v4666 = vpop.f32.mrf.mxu0
        %v4667 = vadd.f32 %v4570, %v4666
        %v4668 = vpop.f32.mrf.mxu0
        %v4669 = vpop.f32.mrf.mxu0
        %v4670 = vadd.f32 %v4573, %v4669
        %v4671 = vpop.f32.mrf.mxu0
        %4672 = vmatprep.mubr.bf16.mxu0 0
        %4673 = vmatmul.mubr.bf16.gmra.mxu0 %v4328
        %v4674 = vpop.f32.mrf.mxu0
        %v4675 = vadd.f32 %v4578, %v4674
        %v4676 = vpop.f32.mrf.mxu0
        %v4677 = vpop.f32.mrf.mxu0
        %v4678 = vadd.f32 %v4581, %v4677
        %v4679 = vpop.f32.mrf.mxu0
        %4680 = vmatprep.mubr.bf16.mxu0 0
        %4681 = vmatmul.mubr.bf16.gmra.mxu0 %v4331
        %v4682 = vpop.f32.mrf.mxu0
        %v4683 = vadd.f32 %v4586, %v4682
        %v4684 = vpop.f32.mrf.mxu0
        %v4685 = vpop.f32.mrf.mxu0
        %v4686 = vadd.f32 %v4589, %v4685
        %v4687 = vpop.f32.mrf.mxu0
        %4688 = vmatprep.mubr.bf16.mxu0 0
        %4689 = vmatmul.mubr.bf16.gmra.mxu0 %v4334
        %v4690 = vpop.f32.mrf.mxu0
        %v4691 = vadd.f32 %v4594, %v4690
        %v4692 = vpop.f32.mrf.mxu0
        %v4693 = vpop.f32.mrf.mxu0
        %v4694 = vadd.f32 %v4597, %v4693
        %v4695 = vpop.f32.mrf.mxu0
        %4696 = vdwg.mxu0
        %v4701 = vunpack.c.l.b16 %v4098
        %v4702 = vunpack.c.h.b16 %v4098
        %v4703 = vunpack.c.l.b16 %v4099
        %v4704 = vunpack.c.l.b16 %v4114
        %v4705 = vunpack.c.h.b16 %v4114
        %v4706 = vunpack.c.l.b16 %v4115
        %v4707 = vpack.c.b16 %v4263, %v4701
        %v4708 = vpack.c.b16 %v4264, %v4702
        %v4709 = vpack.c.b16 %v4265, %v4703
        %v4710 = vpack.c.b16 %v4269, %v4266
        %v4711 = vpack.c.b16 %v4270, %v4267
        %v4712 = vpack.c.b16 %v4271, %v4268
        %v4713 = vpack.c.b16 %v4275, %v4272
        %v4714 = vpack.c.b16 %v4276, %v4273
        %v4715 = vpack.c.b16 %v4277, %v4274
        %v4716 = vpack.c.b16 %v4281, %v4278
        %v4717 = vpack.c.b16 %v4282, %v4279
        %v4718 = vpack.c.b16 %v4283, %v4280
        %v4719 = vpack.c.b16 %v4287, %v4704
        %v4720 = vpack.c.b16 %v4288, %v4705
        %v4721 = vpack.c.b16 %v4289, %v4706
        %v4722 = vpack.c.b16 %v4293, %v4290
        %v4723 = vpack.c.b16 %v4294, %v4291
        %v4724 = vpack.c.b16 %v4295, %v4292
        %v4725 = vpack.c.b16 %v4299, %v4296
        %v4726 = vpack.c.b16 %v4300, %v4297
        %v4727 = vpack.c.b16 %v4301, %v4298
        %v4728 = vpack.c.b16 %v4305, %v4302
        %v4729 = vpack.c.b16 %v4306, %v4303
        %v4730 = vpack.c.b16 %v4307, %v4304
        %v4803 = vunpack.c.l.b16 %v4130
        %v4804 = vunpack.c.l.b16 %v4131
        %v4805 = vunpack.c.l.b16 %v4132
        %v4806 = vunpack.c.l.b16 %v4133
        %v4807 = vunpack.c.l.b16 %v4134
        %v4808 = vunpack.c.l.b16 %v4135
        %v4809 = vunpack.c.l.b16 %v4136
        %v4810 = vunpack.c.l.b16 %v4137
        %v4811 = vunpack.c.l.b16 %v4138
        %v4812 = vunpack.c.l.b16 %v4139
        %v4813 = vunpack.c.l.b16 %v4140
        %v4814 = vunpack.c.l.b16 %v4141
        %v4815 = vunpack.c.l.b16 %v4142
        %v4816 = vunpack.c.l.b16 %v4143
        %v4817 = vunpack.c.l.b16 %v4144
        %v4818 = vunpack.c.l.b16 %v4145
        %v4819 = vunpack.c.l.b16 %v4146
        %v4820 = vunpack.c.l.b16 %v4147
        %v4821 = vunpack.c.l.b16 %v4148
        %v4822 = vunpack.c.l.b16 %v4149
        %v4823 = vunpack.c.l.b16 %v4150
        %v4824 = vunpack.c.l.b16 %v4151
        %v4825 = vunpack.c.l.b16 %v4152
        %v4826 = vunpack.c.l.b16 %v4153
        %v4827 = vunpack.c.l.b16 %v4154
        %v4828 = vunpack.c.l.b16 %v4155
        %v4829 = vunpack.c.l.b16 %v4156
        %v4830 = vunpack.c.l.b16 %v4157
        %v4831 = vunpack.c.l.b16 %v4158
        %v4832 = vunpack.c.l.b16 %v4159
        %v4833 = vunpack.c.l.b16 %v4160
        %v4834 = vunpack.c.l.b16 %v4161
        %v4835 = vunpack.c.l.b16 %v4162
        %v4836 = vunpack.c.l.b16 %v4163
        %v4837 = vunpack.c.l.b16 %v4164
        %v4838 = vunpack.c.l.b16 %v4165
        %v4839 = vunpack.c.l.b16 %v4166
        %v4840 = vunpack.c.l.b16 %v4167
        %v4841 = vunpack.c.l.b16 %v4168
        %v4842 = vunpack.c.l.b16 %v4169
        %v4843 = vunpack.c.l.b16 %v4170
        %v4844 = vunpack.c.l.b16 %v4171
        %v4845 = vunpack.c.l.b16 %v4172
        %v4846 = vunpack.c.l.b16 %v4173
        %v4847 = vunpack.c.l.b16 %v4174
        %v4848 = vunpack.c.l.b16 %v4175
        %v4849 = vunpack.c.l.b16 %v4176
        %v4850 = vunpack.c.l.b16 %v4177
        %v4851 = vpack.c.b16 %v4804, %v4803
        %v4852 = vpack.c.b16 %v4806, %v4805
        %v4853 = vpack.c.b16 %v4808, %v4807
        %v4854 = vpack.c.b16 %v4810, %v4809
        %v4855 = vpack.c.b16 %v4812, %v4811
        %v4856 = vpack.c.b16 %v4814, %v4813
        %v4857 = vpack.c.b16 %v4816, %v4815
        %v4858 = vpack.c.b16 %v4818, %v4817
        %v4859 = vpack.c.b16 %v4820, %v4819
        %v4860 = vpack.c.b16 %v4822, %v4821
        %v4861 = vpack.c.b16 %v4824, %v4823
        %v4862 = vpack.c.b16 %v4826, %v4825
        %v4863 = vpack.c.b16 %v4828, %v4827
        %v4864 = vpack.c.b16 %v4830, %v4829
        %v4865 = vpack.c.b16 %v4832, %v4831
        %v4866 = vpack.c.b16 %v4834, %v4833
        %v4867 = vpack.c.b16 %v4836, %v4835
        %v4868 = vpack.c.b16 %v4838, %v4837
        %v4869 = vpack.c.b16 %v4840, %v4839
        %v4870 = vpack.c.b16 %v4842, %v4841
        %v4871 = vpack.c.b16 %v4844, %v4843
        %v4872 = vpack.c.b16 %v4846, %v4845
        %v4873 = vpack.c.b16 %v4848, %v4847
        %v4874 = vpack.c.b16 %v4850, %v4849
        %4899 = vmatprep.subr.bf16.mxu0 0
        %4900 = vmatpush1.bf16.msra.mxu0 %v4858
        %4901 = vmatprep.subr.bf16.mxu0 0
        %4902 = vmatpush1.bf16.msra.mxu0 %v4857
        %4903 = vmatprep.subr.bf16.mxu0 0
        %4904 = vmatpush1.bf16.msra.mxu0 %v4856
        %4905 = vmatprep.subr.bf16.mxu0 0
        %4906 = vmatpush1.bf16.msra.mxu0 %v4855
        %4907 = vmatprep.subr.bf16.mxu0 0
        %4908 = vmatpush1.bf16.msra.mxu0 %v4854
        %4909 = vmatprep.subr.bf16.mxu0 0
        %4910 = vmatpush1.bf16.msra.mxu0 %v4853
        %4911 = vmatprep.subr.bf16.mxu0 0
        %4912 = vmatpush1.bf16.msra.mxu0 %v4852
        %4913 = vmatprep.subr.bf16.mxu0 0
        %4914 = vmatpush1.bf16.msra.mxu0 %v4851
        %4915 = vmatprep.subr.bf16.mxu0 0
        %4916 = vmatpush2.bf16.msra.mxu0 %v4866
        %4917 = vmatprep.subr.bf16.mxu0 0
        %4918 = vmatpush2.bf16.msra.mxu0 %v4865
        %4919 = vmatprep.subr.bf16.mxu0 0
        %4920 = vmatpush2.bf16.msra.mxu0 %v4864
        %4921 = vmatprep.subr.bf16.mxu0 0
        %4922 = vmatpush2.bf16.msra.mxu0 %v4863
        %4923 = vmatprep.subr.bf16.mxu0 0
        %4924 = vmatpush2.bf16.msra.mxu0 %v4862
        %4925 = vmatprep.subr.bf16.mxu0 0
        %4926 = vmatpush2.bf16.msra.mxu0 %v4861
        %4927 = vmatprep.subr.bf16.mxu0 0
        %4928 = vmatpush2.bf16.msra.mxu0 %v4860
        %4929 = vmatprep.subr.bf16.mxu0 0
        %4930 = vmatpush2.bf16.msra.mxu0 %v4859
        %4931 = vmatprep.mubr.bf16.mxu0 %v4708
        %4932 = vmatmul.mubr.bf16.gmra.mxu0 %v4707
        %v4933 = vpop.f32.mrf.mxu0
        %v4934 = vadd.f32 %v4635, %v4933
        %v4935 = vpop.f32.mrf.mxu0
        %v4936 = vpop.f32.mrf.mxu0
        %v4937 = vadd.f32 %v4638, %v4936
        %v4938 = vpop.f32.mrf.mxu0
        %4939 = vmatprep.mubr.bf16.mxu0 %v4711
        %4940 = vmatmul.mubr.bf16.gmra.mxu0 %v4710
        %v4941 = vpop.f32.mrf.mxu0
        %v4942 = vadd.f32 %v4643, %v4941
        %v4943 = vpop.f32.mrf.mxu0
        %v4944 = vpop.f32.mrf.mxu0
        %v4945 = vadd.f32 %v4646, %v4944
        %v4946 = vpop.f32.mrf.mxu0
        %4947 = vmatprep.mubr.bf16.mxu0 %v4714
        %4948 = vmatmul.mubr.bf16.gmra.mxu0 %v4713
        %v4949 = vpop.f32.mrf.mxu0
        %v4950 = vadd.f32 %v4651, %v4949
        %v4951 = vpop.f32.mrf.mxu0
        %v4952 = vpop.f32.mrf.mxu0
        %v4953 = vadd.f32 %v4654, %v4952
        %v4954 = vpop.f32.mrf.mxu0
        %4955 = vmatprep.mubr.bf16.mxu0 %v4717
        %4956 = vmatmul.mubr.bf16.gmra.mxu0 %v4716
        %v4957 = vpop.f32.mrf.mxu0
        %v4958 = vadd.f32 %v4659, %v4957
        %v4959 = vpop.f32.mrf.mxu0
        %v4960 = vpop.f32.mrf.mxu0
        %v4961 = vadd.f32 %v4662, %v4960
        %v4962 = vpop.f32.mrf.mxu0
        %4963 = vmatprep.mubr.bf16.mxu0 %v4720
        %4964 = vmatmul.mubr.bf16.gmra.mxu0 %v4719
        %v4965 = vpop.f32.mrf.mxu0
        %v4966 = vadd.f32 %v4667, %v4965
        %v4967 = vpop.f32.mrf.mxu0
        %v4968 = vpop.f32.mrf.mxu0
        %v4969 = vadd.f32 %v4670, %v4968
        %v4970 = vpop.f32.mrf.mxu0
        %4971 = vmatprep.mubr.bf16.mxu0 %v4723
        %4972 = vmatmul.mubr.bf16.gmra.mxu0 %v4722
        %v4973 = vpop.f32.mrf.mxu0
        %v4974 = vadd.f32 %v4675, %v4973
        %v4975 = vpop.f32.mrf.mxu0
        %v4976 = vpop.f32.mrf.mxu0
        %v4977 = vadd.f32 %v4678, %v4976
        %v4978 = vpop.f32.mrf.mxu0
        %4979 = vmatprep.mubr.bf16.mxu0 %v4726
        %4980 = vmatmul.mubr.bf16.gmra.mxu0 %v4725
        %v4981 = vpop.f32.mrf.mxu0
        %v4982 = vadd.f32 %v4683, %v4981
        %v4983 = vpop.f32.mrf.mxu0
        %v4984 = vpop.f32.mrf.mxu0
        %v4985 = vadd.f32 %v4686, %v4984
        %v4986 = vpop.f32.mrf.mxu0
        %4987 = vmatprep.mubr.bf16.mxu0 %v4729
        %4988 = vmatmul.mubr.bf16.gmra.mxu0 %v4728
        %v4989 = vpop.f32.mrf.mxu0
        %v4990 = vadd.f32 %v4691, %v4989
        %v4991 = vpop.f32.mrf.mxu0
        %v4992 = vpop.f32.mrf.mxu0
        %v4993 = vadd.f32 %v4694, %v4992
        %v4994 = vpop.f32.mrf.mxu0
        %4995 = vdwg.mxu0
        %4996 = vmatprep.subr.bf16.mxu0 0
        %4997 = vmatpush1.bf16.msra.mxu0 %v4874
        %4998 = vmatprep.subr.bf16.mxu0 0
        %4999 = vmatpush1.bf16.msra.mxu0 %v4873
        %5000 = vmatprep.subr.bf16.mxu0 0
        %5001 = vmatpush1.bf16.msra.mxu0 %v4872
        %5002 = vmatprep.subr.bf16.mxu0 0
        %5003 = vmatpush1.bf16.msra.mxu0 %v4871
        %5004 = vmatprep.subr.bf16.mxu0 0
        %5005 = vmatpush1.bf16.msra.mxu0 %v4870
        %5006 = vmatprep.subr.bf16.mxu0 0
        %5007 = vmatpush1.bf16.msra.mxu0 %v4869
        %5008 = vmatprep.subr.bf16.mxu0 0
        %5009 = vmatpush1.bf16.msra.mxu0 %v4868
        %5010 = vmatprep.subr.bf16.mxu0 0
        %5011 = vmatpush1.bf16.msra.mxu0 %v4867
        %5012 = vmatprep.subr.bf16.mxu0 0
        %5013 = vmatpush2.bf16.msra.mxu0 0
        %5014 = vmatprep.subr.bf16.mxu0 0
        %5015 = vmatpush2.bf16.msra.mxu0 0
        %5016 = vmatprep.subr.bf16.mxu0 0
        %5017 = vmatpush2.bf16.msra.mxu0 0
        %5018 = vmatprep.subr.bf16.mxu0 0
        %5019 = vmatpush2.bf16.msra.mxu0 0
        %5020 = vmatprep.subr.bf16.mxu0 0
        %5021 = vmatpush2.bf16.msra.mxu0 0
        %5022 = vmatprep.subr.bf16.mxu0 0
        %5023 = vmatpush2.bf16.msra.mxu0 0
        %5024 = vmatprep.subr.bf16.mxu0 0
        %5025 = vmatpush2.bf16.msra.mxu0 0
        %5026 = vmatprep.subr.bf16.mxu0 0
        %5027 = vmatpush2.bf16.msra.mxu0 0
        %5028 = vmatprep.mubr.bf16.mxu0 0
        %5029 = vmatmul.mubr.bf16.gmra.mxu0 %v4709
        %v5030 = vpop.f32.mrf.mxu0
        %v5031 = vadd.f32 %v4934, %v5030
        %v5032 = vpop.f32.mrf.mxu0
        %v5033 = vpop.f32.mrf.mxu0
        %v5034 = vadd.f32 %v4937, %v5033
        %v5035 = vpop.f32.mrf.mxu0
        %5036 = vmatprep.mubr.bf16.mxu0 0
        %5037 = vmatmul.mubr.bf16.gmra.mxu0 %v4712
        %v5038 = vpop.f32.mrf.mxu0
        %v5039 = vadd.f32 %v4942, %v5038
        %v5040 = vpop.f32.mrf.mxu0
        %v5041 = vpop.f32.mrf.mxu0
        %v5042 = vadd.f32 %v4945, %v5041
        %v5043 = vpop.f32.mrf.mxu0
        %5044 = vmatprep.mubr.bf16.mxu0 0
        %5045 = vmatmul.mubr.bf16.gmra.mxu0 %v4715
        %v5046 = vpop.f32.mrf.mxu0
        %v5047 = vadd.f32 %v4950, %v5046
        %v5048 = vpop.f32.mrf.mxu0
        %v5049 = vpop.f32.mrf.mxu0
        %v5050 = vadd.f32 %v4953, %v5049
        %v5051 = vpop.f32.mrf.mxu0
        %5052 = vmatprep.mubr.bf16.mxu0 0
        %5053 = vmatmul.mubr.bf16.gmra.mxu0 %v4718
        %v5054 = vpop.f32.mrf.mxu0
        %v5055 = vadd.f32 %v4958, %v5054
        %v5056 = vpop.f32.mrf.mxu0
        %v5057 = vpop.f32.mrf.mxu0
        %v5058 = vadd.f32 %v4961, %v5057
        %v5059 = vpop.f32.mrf.mxu0
        %5060 = vmatprep.mubr.bf16.mxu0 0
        %5061 = vmatmul.mubr.bf16.gmra.mxu0 %v4721
        %v5062 = vpop.f32.mrf.mxu0
        %v5063 = vadd.f32 %v4966, %v5062
        %v5064 = vpop.f32.mrf.mxu0
        %v5065 = vpop.f32.mrf.mxu0
        %v5066 = vadd.f32 %v4969, %v5065
        %v5067 = vpop.f32.mrf.mxu0
        %5068 = vmatprep.mubr.bf16.mxu0 0
        %5069 = vmatmul.mubr.bf16.gmra.mxu0 %v4724
        %v5070 = vpop.f32.mrf.mxu0
        %v5071 = vadd.f32 %v4974, %v5070
        %v5072 = vpop.f32.mrf.mxu0
        %v5073 = vpop.f32.mrf.mxu0
        %v5074 = vadd.f32 %v4977, %v5073
        %v5075 = vpop.f32.mrf.mxu0
        %5076 = vmatprep.mubr.bf16.mxu0 0
        %5077 = vmatmul.mubr.bf16.gmra.mxu0 %v4727
        %v5078 = vpop.f32.mrf.mxu0
        %v5079 = vadd.f32 %v4982, %v5078
        %v5080 = vpop.f32.mrf.mxu0
        %v5081 = vpop.f32.mrf.mxu0
        %v5082 = vadd.f32 %v4985, %v5081
        %v5083 = vpop.f32.mrf.mxu0
        %5084 = vmatprep.mubr.bf16.mxu0 0
        %5085 = vmatmul.mubr.bf16.gmra.mxu0 %v4730
        %v5086 = vpop.f32.mrf.mxu0
        %v5087 = vadd.f32 %v4990, %v5086
        %v5088 = vpop.f32.mrf.mxu0
        %v5089 = vpop.f32.mrf.mxu0
        %v5090 = vadd.f32 %v4993, %v5089
        %v5091 = vpop.f32.mrf.mxu0
        %5092 = vdwg.mxu0
        %v5093 = vld [vmem:[#allocation3 + $0x24] sm:$0xff]
        %v5094 = vld [vmem:[#allocation3 + $0x2c] sm:$0xf]
        %v5095 = vld [vmem:[#allocation3 + $0x30] sm:$0xff]
        %v5096 = vld [vmem:[#allocation3 + $0x38] sm:$0xf]
        %v5097 = vld [vmem:[#allocation3 + $0x3c] sm:$0xff]
        %v5098 = vld [vmem:[#allocation3 + $0x44] sm:$0xf]
        %v5099 = vld [vmem:[#allocation3 + $0x48] sm:$0xff]
        %v5100 = vld [vmem:[#allocation3 + $0x50] sm:$0xf]
        %v5101 = vld [vmem:[#allocation3 + $0x54] sm:$0xff]
        %v5102 = vld [vmem:[#allocation3 + $0x5c] sm:$0xf]
        %v5103 = vld [vmem:[#allocation3 + $0x60] sm:$0xff]
        %v5104 = vld [vmem:[#allocation3 + $0x68] sm:$0xf]
        %v5105 = vld [vmem:[#allocation3 + $0x6c] sm:$0xff]
        %v5106 = vld [vmem:[#allocation3 + $0x74] sm:$0xf]
        %v5107 = vld [vmem:[#allocation3 + $0x78] sm:$0xff]
        %v5108 = vld [vmem:[#allocation3 + $0x80] sm:$0xf]
        %v5109 = vld [vmem:[#allocation3 + $0xb4] sm:$0xff]
        %v5110 = vld [vmem:[#allocation3 + $0xbc] sm:$0xf]
        %v5111 = vld [vmem:[#allocation3 + $0xc0] sm:$0xff]
        %v5112 = vld [vmem:[#allocation3 + $0xc8] sm:$0xf]
        %v5113 = vld [vmem:[#allocation3 + $0xcc] sm:$0xff]
        %v5114 = vld [vmem:[#allocation3 + $0xd4] sm:$0xf]
        %v5115 = vld [vmem:[#allocation3 + $0xd8] sm:$0xff]
        %v5116 = vld [vmem:[#allocation3 + $0xe0] sm:$0xf]
        %v5117 = vld [vmem:[#allocation3 + $0xe4] sm:$0xff]
        %v5118 = vld [vmem:[#allocation3 + $0xec] sm:$0xf]
        %v5119 = vld [vmem:[#allocation3 + $0xf0] sm:$0xff]
        %v5120 = vld [vmem:[#allocation3 + $0xf8] sm:$0xf]
        %v5121 = vld [vmem:[#allocation3 + $0xfc] sm:$0xff]
        %v5122 = vld [vmem:[#allocation3 + $0x104] sm:$0xf]
        %v5123 = vld [vmem:[#allocation3 + $0x108] sm:$0xff]
        %v5124 = vld [vmem:[#allocation3 + $0x110] sm:$0xf]
        %s5125 = scalar_lea.vmem [#allocation15], 384
        %v5126 = vld [vmem:[%s5125] sm:$0xf]
        %v5127 = vld [vmem:[%s5125 + $0x4] sm:$0xf]
        %v5128 = vld [vmem:[%s5125 + $0x8] sm:$0xf]
        %v5129 = vld [vmem:[%s5125 + $0xc] sm:$0xf]
        %v5130 = vld [vmem:[%s5125 + $0x10] sm:$0xf]
        %v5131 = vld [vmem:[%s5125 + $0x14] sm:$0xf]
        %v5132 = vld [vmem:[%s5125 + $0x18] sm:$0xf]
        %v5133 = vld [vmem:[%s5125 + $0x1c] sm:$0xf]
        %v5134 = vld [vmem:[%s5125 + $0x20] sm:$0xf]
        %v5135 = vld [vmem:[%s5125 + $0x24] sm:$0xf]
        %v5136 = vld [vmem:[%s5125 + $0x28] sm:$0xf]
        %v5137 = vld [vmem:[%s5125 + $0x2c] sm:$0xf]
        %v5138 = vld [vmem:[%s5125 + $0x30] sm:$0xf]
        %v5139 = vld [vmem:[%s5125 + $0x34] sm:$0xf]
        %v5140 = vld [vmem:[%s5125 + $0x38] sm:$0xf]
        %v5141 = vld [vmem:[%s5125 + $0x3c] sm:$0xf]
        %v5142 = vld [vmem:[%s5125 + $0x40] sm:$0xf]
        %v5143 = vld [vmem:[%s5125 + $0x44] sm:$0xf]
        %v5144 = vld [vmem:[%s5125 + $0x48] sm:$0xf]
        %v5145 = vld [vmem:[%s5125 + $0x4c] sm:$0xf]
        %v5146 = vld [vmem:[%s5125 + $0x50] sm:$0xf]
        %v5147 = vld [vmem:[%s5125 + $0x54] sm:$0xf]
        %v5148 = vld [vmem:[%s5125 + $0x58] sm:$0xf]
        %v5149 = vld [vmem:[%s5125 + $0x5c] sm:$0xf]
        %v5150 = vld [vmem:[%s5125 + $0x60] sm:$0xf]
        %v5151 = vld [vmem:[%s5125 + $0x64] sm:$0xf]
        %v5152 = vld [vmem:[%s5125 + $0x68] sm:$0xf]
        %v5153 = vld [vmem:[%s5125 + $0x6c] sm:$0xf]
        %v5154 = vld [vmem:[%s5125 + $0x70] sm:$0xf]
        %v5155 = vld [vmem:[%s5125 + $0x74] sm:$0xf]
        %v5156 = vld [vmem:[%s5125 + $0x78] sm:$0xf]
        %v5157 = vld [vmem:[%s5125 + $0x7c] sm:$0xf]
        %v5158 = vld [vmem:[%s5125 + $0x80] sm:$0xf]
        %v5159 = vld [vmem:[%s5125 + $0x84] sm:$0xf]
        %v5160 = vld [vmem:[%s5125 + $0x88] sm:$0xf]
        %v5161 = vld [vmem:[%s5125 + $0x8c] sm:$0xf]
        %v5162 = vld [vmem:[%s5125 + $0x90] sm:$0xf]
        %v5163 = vld [vmem:[%s5125 + $0x94] sm:$0xf]
        %v5164 = vld [vmem:[%s5125 + $0x98] sm:$0xf]
        %v5165 = vld [vmem:[%s5125 + $0x9c] sm:$0xf]
        %v5166 = vld [vmem:[%s5125 + $0xa0] sm:$0xf]
        %v5167 = vld [vmem:[%s5125 + $0xa4] sm:$0xf]
        %v5168 = vld [vmem:[%s5125 + $0xa8] sm:$0xf]
        %v5169 = vld [vmem:[%s5125 + $0xac] sm:$0xf]
        %v5170 = vld [vmem:[%s5125 + $0xb0] sm:$0xf]
        %v5171 = vld [vmem:[%s5125 + $0xb4] sm:$0xf]
        %v5172 = vld [vmem:[%s5125 + $0xb8] sm:$0xf]
        %v5173 = vld [vmem:[%s5125 + $0xbc] sm:$0xf]
        %v5206 = vunpack.c.l.b16 %v5093
        %v5207 = vunpack.c.h.b16 %v5093
        %v5208 = vunpack.c.l.b16 %v5094
        %v5209 = vunpack.c.l.b16 %v5095
        %v5210 = vunpack.c.h.b16 %v5095
        %v5211 = vunpack.c.l.b16 %v5096
        %v5212 = vunpack.c.l.b16 %v5097
        %v5213 = vunpack.c.h.b16 %v5097
        %v5214 = vunpack.c.l.b16 %v5098
        %v5215 = vunpack.c.l.b16 %v5099
        %v5216 = vunpack.c.h.b16 %v5099
        %v5217 = vunpack.c.l.b16 %v5100
        %v5218 = vunpack.c.l.b16 %v5101
        %v5219 = vunpack.c.h.b16 %v5101
        %v5220 = vunpack.c.l.b16 %v5102
        %v5221 = vunpack.c.l.b16 %v5103
        %v5222 = vunpack.c.h.b16 %v5103
        %v5223 = vunpack.c.l.b16 %v5104
        %v5224 = vunpack.c.l.b16 %v5105
        %v5225 = vunpack.c.h.b16 %v5105
        %v5226 = vunpack.c.l.b16 %v5106
        %v5227 = vunpack.c.l.b16 %v5107
        %v5228 = vunpack.c.h.b16 %v5107
        %v5229 = vunpack.c.l.b16 %v5108
        %v5230 = vunpack.c.l.b16 %v5109
        %v5231 = vunpack.c.h.b16 %v5109
        %v5232 = vunpack.c.l.b16 %v5110
        %v5233 = vunpack.c.l.b16 %v5111
        %v5234 = vunpack.c.h.b16 %v5111
        %v5235 = vunpack.c.l.b16 %v5112
        %v5236 = vunpack.c.l.b16 %v5113
        %v5237 = vunpack.c.h.b16 %v5113
        %v5238 = vunpack.c.l.b16 %v5114
        %v5239 = vunpack.c.l.b16 %v5115
        %v5240 = vunpack.c.h.b16 %v5115
        %v5241 = vunpack.c.l.b16 %v5116
        %v5242 = vunpack.c.l.b16 %v5117
        %v5243 = vunpack.c.h.b16 %v5117
        %v5244 = vunpack.c.l.b16 %v5118
        %v5245 = vunpack.c.l.b16 %v5119
        %v5246 = vunpack.c.h.b16 %v5119
        %v5247 = vunpack.c.l.b16 %v5120
        %v5248 = vunpack.c.l.b16 %v5121
        %v5249 = vunpack.c.h.b16 %v5121
        %v5250 = vunpack.c.l.b16 %v5122
        %v5251 = vunpack.c.l.b16 %v5123
        %v5252 = vunpack.c.h.b16 %v5123
        %v5253 = vunpack.c.l.b16 %v5124
        %v5254 = vpack.c.b16 %v5209, %v5206
        %v5255 = vpack.c.b16 %v5210, %v5207
        %v5256 = vpack.c.b16 %v5211, %v5208
        %v5257 = vpack.c.b16 %v5215, %v5212
        %v5258 = vpack.c.b16 %v5216, %v5213
        %v5259 = vpack.c.b16 %v5217, %v5214
        %v5260 = vpack.c.b16 %v5221, %v5218
        %v5261 = vpack.c.b16 %v5222, %v5219
        %v5262 = vpack.c.b16 %v5223, %v5220
        %v5263 = vpack.c.b16 %v5227, %v5224
        %v5264 = vpack.c.b16 %v5228, %v5225
        %v5265 = vpack.c.b16 %v5229, %v5226
        %v5266 = vpack.c.b16 %v5233, %v5230
        %v5267 = vpack.c.b16 %v5234, %v5231
        %v5268 = vpack.c.b16 %v5235, %v5232
        %v5269 = vpack.c.b16 %v5239, %v5236
        %v5270 = vpack.c.b16 %v5240, %v5237
        %v5271 = vpack.c.b16 %v5241, %v5238
        %v5272 = vpack.c.b16 %v5245, %v5242
        %v5273 = vpack.c.b16 %v5246, %v5243
        %v5274 = vpack.c.b16 %v5247, %v5244
        %v5275 = vpack.c.b16 %v5251, %v5248
        %v5276 = vpack.c.b16 %v5252, %v5249
        %v5277 = vpack.c.b16 %v5253, %v5250
        %v5350 = vunpack.c.l.b16 %v5126
        %v5351 = vunpack.c.l.b16 %v5127
        %v5352 = vunpack.c.l.b16 %v5128
        %v5353 = vunpack.c.l.b16 %v5129
        %v5354 = vunpack.c.l.b16 %v5130
        %v5355 = vunpack.c.l.b16 %v5131
        %v5356 = vunpack.c.l.b16 %v5132
        %v5357 = vunpack.c.l.b16 %v5133
        %v5358 = vunpack.c.l.b16 %v5134
        %v5359 = vunpack.c.l.b16 %v5135
        %v5360 = vunpack.c.l.b16 %v5136
        %v5361 = vunpack.c.l.b16 %v5137
        %v5362 = vunpack.c.l.b16 %v5138
        %v5363 = vunpack.c.l.b16 %v5139
        %v5364 = vunpack.c.l.b16 %v5140
        %v5365 = vunpack.c.l.b16 %v5141
        %v5366 = vunpack.c.l.b16 %v5142
        %v5367 = vunpack.c.l.b16 %v5143
        %v5368 = vunpack.c.l.b16 %v5144
        %v5369 = vunpack.c.l.b16 %v5145
        %v5370 = vunpack.c.l.b16 %v5146
        %v5371 = vunpack.c.l.b16 %v5147
        %v5372 = vunpack.c.l.b16 %v5148
        %v5373 = vunpack.c.l.b16 %v5149
        %v5374 = vunpack.c.l.b16 %v5150
        %v5375 = vunpack.c.l.b16 %v5151
        %v5376 = vunpack.c.l.b16 %v5152
        %v5377 = vunpack.c.l.b16 %v5153
        %v5378 = vunpack.c.l.b16 %v5154
        %v5379 = vunpack.c.l.b16 %v5155
        %v5380 = vunpack.c.l.b16 %v5156
        %v5381 = vunpack.c.l.b16 %v5157
        %v5382 = vunpack.c.l.b16 %v5158
        %v5383 = vunpack.c.l.b16 %v5159
        %v5384 = vunpack.c.l.b16 %v5160
        %v5385 = vunpack.c.l.b16 %v5161
        %v5386 = vunpack.c.l.b16 %v5162
        %v5387 = vunpack.c.l.b16 %v5163
        %v5388 = vunpack.c.l.b16 %v5164
        %v5389 = vunpack.c.l.b16 %v5165
        %v5390 = vunpack.c.l.b16 %v5166
        %v5391 = vunpack.c.l.b16 %v5167
        %v5392 = vunpack.c.l.b16 %v5168
        %v5393 = vunpack.c.l.b16 %v5169
        %v5394 = vunpack.c.l.b16 %v5170
        %v5395 = vunpack.c.l.b16 %v5171
        %v5396 = vunpack.c.l.b16 %v5172
        %v5397 = vunpack.c.l.b16 %v5173
        %v5398 = vpack.c.b16 %v5351, %v5350
        %v5399 = vpack.c.b16 %v5353, %v5352
        %v5400 = vpack.c.b16 %v5355, %v5354
        %v5401 = vpack.c.b16 %v5357, %v5356
        %v5402 = vpack.c.b16 %v5359, %v5358
        %v5403 = vpack.c.b16 %v5361, %v5360
        %v5404 = vpack.c.b16 %v5363, %v5362
        %v5405 = vpack.c.b16 %v5365, %v5364
        %v5406 = vpack.c.b16 %v5367, %v5366
        %v5407 = vpack.c.b16 %v5369, %v5368
        %v5408 = vpack.c.b16 %v5371, %v5370
        %v5409 = vpack.c.b16 %v5373, %v5372
        %v5410 = vpack.c.b16 %v5375, %v5374
        %v5411 = vpack.c.b16 %v5377, %v5376
        %v5412 = vpack.c.b16 %v5379, %v5378
        %v5413 = vpack.c.b16 %v5381, %v5380
        %v5414 = vpack.c.b16 %v5383, %v5382
        %v5415 = vpack.c.b16 %v5385, %v5384
        %v5416 = vpack.c.b16 %v5387, %v5386
        %v5417 = vpack.c.b16 %v5389, %v5388
        %v5418 = vpack.c.b16 %v5391, %v5390
        %v5419 = vpack.c.b16 %v5393, %v5392
        %v5420 = vpack.c.b16 %v5395, %v5394
        %v5421 = vpack.c.b16 %v5397, %v5396
        %5446 = vmatprep.subr.bf16.mxu0 0
        %5447 = vmatpush1.bf16.msra.mxu0 %v5405
        %5448 = vmatprep.subr.bf16.mxu0 0
        %5449 = vmatpush1.bf16.msra.mxu0 %v5404
        %5450 = vmatprep.subr.bf16.mxu0 0
        %5451 = vmatpush1.bf16.msra.mxu0 %v5403
        %5452 = vmatprep.subr.bf16.mxu0 0
        %5453 = vmatpush1.bf16.msra.mxu0 %v5402
        %5454 = vmatprep.subr.bf16.mxu0 0
        %5455 = vmatpush1.bf16.msra.mxu0 %v5401
        %5456 = vmatprep.subr.bf16.mxu0 0
        %5457 = vmatpush1.bf16.msra.mxu0 %v5400
        %5458 = vmatprep.subr.bf16.mxu0 0
        %5459 = vmatpush1.bf16.msra.mxu0 %v5399
        %5460 = vmatprep.subr.bf16.mxu0 0
        %5461 = vmatpush1.bf16.msra.mxu0 %v5398
        %5462 = vmatprep.subr.bf16.mxu0 0
        %5463 = vmatpush2.bf16.msra.mxu0 %v5413
        %5464 = vmatprep.subr.bf16.mxu0 0
        %5465 = vmatpush2.bf16.msra.mxu0 %v5412
        %5466 = vmatprep.subr.bf16.mxu0 0
        %5467 = vmatpush2.bf16.msra.mxu0 %v5411
        %5468 = vmatprep.subr.bf16.mxu0 0
        %5469 = vmatpush2.bf16.msra.mxu0 %v5410
        %5470 = vmatprep.subr.bf16.mxu0 0
        %5471 = vmatpush2.bf16.msra.mxu0 %v5409
        %5472 = vmatprep.subr.bf16.mxu0 0
        %5473 = vmatpush2.bf16.msra.mxu0 %v5408
        %5474 = vmatprep.subr.bf16.mxu0 0
        %5475 = vmatpush2.bf16.msra.mxu0 %v5407
        %5476 = vmatprep.subr.bf16.mxu0 0
        %5477 = vmatpush2.bf16.msra.mxu0 %v5406
        %5478 = vmatprep.mubr.bf16.mxu0 %v5255
        %5479 = vmatmul.mubr.bf16.gmra.mxu0 %v5254
        %v5480 = vpop.f32.mrf.mxu0
        %v5481 = vadd.f32 0.0, %v5480
        %v5482 = vpop.f32.mrf.mxu0
        %v5483 = vpop.f32.mrf.mxu0
        %v5484 = vadd.f32 0.0, %v5483
        %v5485 = vpop.f32.mrf.mxu0
        %5486 = vmatprep.mubr.bf16.mxu0 %v5258
        %5487 = vmatmul.mubr.bf16.gmra.mxu0 %v5257
        %v5488 = vpop.f32.mrf.mxu0
        %v5489 = vadd.f32 0.0, %v5488
        %v5490 = vpop.f32.mrf.mxu0
        %v5491 = vpop.f32.mrf.mxu0
        %v5492 = vadd.f32 0.0, %v5491
        %v5493 = vpop.f32.mrf.mxu0
        %5494 = vmatprep.mubr.bf16.mxu0 %v5261
        %5495 = vmatmul.mubr.bf16.gmra.mxu0 %v5260
        %v5496 = vpop.f32.mrf.mxu0
        %v5497 = vadd.f32 0.0, %v5496
        %v5498 = vpop.f32.mrf.mxu0
        %v5499 = vpop.f32.mrf.mxu0
        %v5500 = vadd.f32 0.0, %v5499
        %v5501 = vpop.f32.mrf.mxu0
        %5502 = vmatprep.mubr.bf16.mxu0 %v5264
        %5503 = vmatmul.mubr.bf16.gmra.mxu0 %v5263
        %v5504 = vpop.f32.mrf.mxu0
        %v5505 = vadd.f32 0.0, %v5504
        %v5506 = vpop.f32.mrf.mxu0
        %v5507 = vpop.f32.mrf.mxu0
        %v5508 = vadd.f32 0.0, %v5507
        %v5509 = vpop.f32.mrf.mxu0
        %5510 = vmatprep.mubr.bf16.mxu0 %v5267
        %5511 = vmatmul.mubr.bf16.gmra.mxu0 %v5266
        %v5512 = vpop.f32.mrf.mxu0
        %v5513 = vadd.f32 0.0, %v5512
        %v5514 = vpop.f32.mrf.mxu0
        %v5515 = vpop.f32.mrf.mxu0
        %v5516 = vadd.f32 0.0, %v5515
        %v5517 = vpop.f32.mrf.mxu0
        %5518 = vmatprep.mubr.bf16.mxu0 %v5270
        %5519 = vmatmul.mubr.bf16.gmra.mxu0 %v5269
        %v5520 = vpop.f32.mrf.mxu0
        %v5521 = vadd.f32 0.0, %v5520
        %v5522 = vpop.f32.mrf.mxu0
        %v5523 = vpop.f32.mrf.mxu0
        %v5524 = vadd.f32 0.0, %v5523
        %v5525 = vpop.f32.mrf.mxu0
        %5526 = vmatprep.mubr.bf16.mxu0 %v5273
        %5527 = vmatmul.mubr.bf16.gmra.mxu0 %v5272
        %v5528 = vpop.f32.mrf.mxu0
        %v5529 = vadd.f32 0.0, %v5528
        %v5530 = vpop.f32.mrf.mxu0
        %v5531 = vpop.f32.mrf.mxu0
        %v5532 = vadd.f32 0.0, %v5531
        %v5533 = vpop.f32.mrf.mxu0
        %5534 = vmatprep.mubr.bf16.mxu0 %v5276
        %5535 = vmatmul.mubr.bf16.gmra.mxu0 %v5275
        %v5536 = vpop.f32.mrf.mxu0
        %v5537 = vadd.f32 0.0, %v5536
        %v5538 = vpop.f32.mrf.mxu0
        %v5539 = vpop.f32.mrf.mxu0
        %v5540 = vadd.f32 0.0, %v5539
        %v5541 = vpop.f32.mrf.mxu0
        %5542 = vdwg.mxu0
        %5543 = vmatprep.subr.bf16.mxu0 0
        %5544 = vmatpush1.bf16.msra.mxu0 %v5421
        %5545 = vmatprep.subr.bf16.mxu0 0
        %5546 = vmatpush1.bf16.msra.mxu0 %v5420
        %5547 = vmatprep.subr.bf16.mxu0 0
        %5548 = vmatpush1.bf16.msra.mxu0 %v5419
        %5549 = vmatprep.subr.bf16.mxu0 0
        %5550 = vmatpush1.bf16.msra.mxu0 %v5418
        %5551 = vmatprep.subr.bf16.mxu0 0
        %5552 = vmatpush1.bf16.msra.mxu0 %v5417
        %5553 = vmatprep.subr.bf16.mxu0 0
        %5554 = vmatpush1.bf16.msra.mxu0 %v5416
        %5555 = vmatprep.subr.bf16.mxu0 0
        %5556 = vmatpush1.bf16.msra.mxu0 %v5415
        %5557 = vmatprep.subr.bf16.mxu0 0
        %5558 = vmatpush1.bf16.msra.mxu0 %v5414
        %5559 = vmatprep.subr.bf16.mxu0 0
        %5560 = vmatpush2.bf16.msra.mxu0 0
        %5561 = vmatprep.subr.bf16.mxu0 0
        %5562 = vmatpush2.bf16.msra.mxu0 0
        %5563 = vmatprep.subr.bf16.mxu0 0
        %5564 = vmatpush2.bf16.msra.mxu0 0
        %5565 = vmatprep.subr.bf16.mxu0 0
        %5566 = vmatpush2.bf16.msra.mxu0 0
        %5567 = vmatprep.subr.bf16.mxu0 0
        %5568 = vmatpush2.bf16.msra.mxu0 0
        %5569 = vmatprep.subr.bf16.mxu0 0
        %5570 = vmatpush2.bf16.msra.mxu0 0
        %5571 = vmatprep.subr.bf16.mxu0 0
        %5572 = vmatpush2.bf16.msra.mxu0 0
        %5573 = vmatprep.subr.bf16.mxu0 0
        %5574 = vmatpush2.bf16.msra.mxu0 0
        %5575 = vmatprep.mubr.bf16.mxu0 0
        %5576 = vmatmul.mubr.bf16.gmra.mxu0 %v5256
        %v5577 = vpop.f32.mrf.mxu0
        %v5578 = vadd.f32 %v5481, %v5577
        %v5579 = vpop.f32.mrf.mxu0
        %v5580 = vpop.f32.mrf.mxu0
        %v5581 = vadd.f32 %v5484, %v5580
        %v5582 = vpop.f32.mrf.mxu0
        %5583 = vmatprep.mubr.bf16.mxu0 0
        %5584 = vmatmul.mubr.bf16.gmra.mxu0 %v5259
        %v5585 = vpop.f32.mrf.mxu0
        %v5586 = vadd.f32 %v5489, %v5585
        %v5587 = vpop.f32.mrf.mxu0
        %v5588 = vpop.f32.mrf.mxu0
        %v5589 = vadd.f32 %v5492, %v5588
        %v5590 = vpop.f32.mrf.mxu0
        %5591 = vmatprep.mubr.bf16.mxu0 0
        %5592 = vmatmul.mubr.bf16.gmra.mxu0 %v5262
        %v5593 = vpop.f32.mrf.mxu0
        %v5594 = vadd.f32 %v5497, %v5593
        %v5595 = vpop.f32.mrf.mxu0
        %v5596 = vpop.f32.mrf.mxu0
        %v5597 = vadd.f32 %v5500, %v5596
        %v5598 = vpop.f32.mrf.mxu0
        %5599 = vmatprep.mubr.bf16.mxu0 0
        %5600 = vmatmul.mubr.bf16.gmra.mxu0 %v5265
        %v5601 = vpop.f32.mrf.mxu0
        %v5602 = vadd.f32 %v5505, %v5601
        %v5603 = vpop.f32.mrf.mxu0
        %v5604 = vpop.f32.mrf.mxu0
        %v5605 = vadd.f32 %v5508, %v5604
        %v5606 = vpop.f32.mrf.mxu0
        %5607 = vmatprep.mubr.bf16.mxu0 0
        %5608 = vmatmul.mubr.bf16.gmra.mxu0 %v5268
        %v5609 = vpop.f32.mrf.mxu0
        %v5610 = vadd.f32 %v5513, %v5609
        %v5611 = vpop.f32.mrf.mxu0
        %v5612 = vpop.f32.mrf.mxu0
        %v5613 = vadd.f32 %v5516, %v5612
        %v5614 = vpop.f32.mrf.mxu0
        %5615 = vmatprep.mubr.bf16.mxu0 0
        %5616 = vmatmul.mubr.bf16.gmra.mxu0 %v5271
        %v5617 = vpop.f32.mrf.mxu0
        %v5618 = vadd.f32 %v5521, %v5617
        %v5619 = vpop.f32.mrf.mxu0
        %v5620 = vpop.f32.mrf.mxu0
        %v5621 = vadd.f32 %v5524, %v5620
        %v5622 = vpop.f32.mrf.mxu0
        %5623 = vmatprep.mubr.bf16.mxu0 0
        %5624 = vmatmul.mubr.bf16.gmra.mxu0 %v5274
        %v5625 = vpop.f32.mrf.mxu0
        %v5626 = vadd.f32 %v5529, %v5625
        %v5627 = vpop.f32.mrf.mxu0
        %v5628 = vpop.f32.mrf.mxu0
        %v5629 = vadd.f32 %v5532, %v5628
        %v5630 = vpop.f32.mrf.mxu0
        %5631 = vmatprep.mubr.bf16.mxu0 0
        %5632 = vmatmul.mubr.bf16.gmra.mxu0 %v5277
        %v5633 = vpop.f32.mrf.mxu0
        %v5634 = vadd.f32 %v5537, %v5633
        %v5635 = vpop.f32.mrf.mxu0
        %v5636 = vpop.f32.mrf.mxu0
        %v5637 = vadd.f32 %v5540, %v5636
        %v5638 = vpop.f32.mrf.mxu0
        %5639 = vdwg.mxu0
        %v5640 = vadd.f32 %v5031, %v5578
        %v5641 = vadd.f32 %v5034, %v5581
        %v5642 = vadd.f32 %v5039, %v5586
        %v5643 = vadd.f32 %v5042, %v5589
        %v5644 = vadd.f32 %v5047, %v5594
        %v5645 = vadd.f32 %v5050, %v5597
        %v5646 = vadd.f32 %v5055, %v5602
        %v5647 = vadd.f32 %v5058, %v5605
        %v5648 = vadd.f32 %v5063, %v5610
        %v5649 = vadd.f32 %v5066, %v5613
        %v5650 = vadd.f32 %v5071, %v5618
        %v5651 = vadd.f32 %v5074, %v5621
        %v5652 = vadd.f32 %v5079, %v5626
        %v5653 = vadd.f32 %v5082, %v5629
        %v5654 = vadd.f32 %v5087, %v5634
        %v5655 = vadd.f32 %v5090, %v5637
        %v5657 = vlaneseq
        %v5658 = vshrl.u32 %v5657, 7
        %v5659 = vsub.s32 0, %v5658
        %v5660 = vrot.slane %v3492, %v5659
        %v5662 = vadd.f32 %v5640, %v5660
        %v5663 = vadd.f32 %v5641, %v5660
        %v5664 = vadd.f32 %v5642, %v5660
        %v5665 = vadd.f32 %v5643, %v5660
        %v5666 = vadd.f32 %v5644, %v5660
        %v5667 = vadd.f32 %v5645, %v5660
        %v5668 = vadd.f32 %v5646, %v5660
        %v5669 = vadd.f32 %v5647, %v5660
        %v5670 = vadd.f32 %v5648, %v5660
        %v5671 = vadd.f32 %v5649, %v5660
        %v5672 = vadd.f32 %v5650, %v5660
        %v5673 = vadd.f32 %v5651, %v5660
        %v5674 = vadd.f32 %v5652, %v5660
        %v5675 = vadd.f32 %v5653, %v5660
        %v5676 = vadd.f32 %v5654, %v5660
        %v5677 = vadd.f32 %v5655, %v5660
        %v5678 = vpack.c.bf16 %v672, %v671
        %v5679 = vpack.c.bf16 %v674, %v673
        %v5680 = vpack.c.bf16 %v676, %v675
        %v5681 = vpack.c.bf16 %v678, %v677
        %v5682 = vpack.c.bf16 %v680, %v679
        %v5683 = vpack.c.bf16 %v682, %v681
        %v5684 = vpack.c.bf16 %v684, %v683
        %v5685 = vpack.c.bf16 %v686, %v685
        %v5686 = vld [vmem:[#allocation16] sm:$0xf]
        %v5687 = vld [vmem:[#allocation16 + $0x4] sm:$0xf]
        %v5688 = vld [vmem:[#allocation16 + $0x8] sm:$0xf]
        %v5689 = vld [vmem:[#allocation16 + $0xc] sm:$0xf]
        %v5690 = vld [vmem:[#allocation16 + $0x10] sm:$0xf]
        %v5691 = vld [vmem:[#allocation16 + $0x14] sm:$0xf]
        %v5692 = vld [vmem:[#allocation16 + $0x18] sm:$0xf]
        %v5693 = vld [vmem:[#allocation16 + $0x1c] sm:$0xf]
        %v5702 = vunpack.c.l.b16 %v5686
        %v5703 = vunpack.c.l.b16 %v5687
        %v5704 = vunpack.c.l.b16 %v5688
        %v5705 = vunpack.c.l.b16 %v5689
        %v5706 = vunpack.c.l.b16 %v5690
        %v5707 = vunpack.c.l.b16 %v5691
        %v5708 = vunpack.c.l.b16 %v5692
        %v5709 = vunpack.c.l.b16 %v5693
        %v5710 = vpack.c.b16 %v5703, %v5702
        %v5711 = vpack.c.b16 %v5705, %v5704
        %v5712 = vpack.c.b16 %v5707, %v5706
        %v5713 = vpack.c.b16 %v5709, %v5708
        %v5719 = vsel %vm802, %v5678, 0
        %v5722 = vsel %vm802, %v5679, 0
        %v5725 = vsel %vm802, %v5680, 0
        %v5728 = vsel %vm802, %v5681, 0
        %v5731 = vsel %vm802, %v5682, 0
        %v5734 = vsel %vm802, %v5683, 0
        %v5737 = vsel %vm802, %v5684, 0
        %v5740 = vsel %vm802, %v5685, 0
        %5742 = vmatprep.subr.bf16.mxu0 0
        %5743 = vmatpush1.bf16.msra.mxu0 0
        %5744 = vmatprep.subr.bf16.mxu0 0
        %5745 = vmatpush1.bf16.msra.mxu0 0
        %5746 = vmatprep.subr.bf16.mxu0 0
        %5747 = vmatpush1.bf16.msra.mxu0 0
        %5748 = vmatprep.subr.bf16.mxu0 0
        %5749 = vmatpush1.bf16.msra.mxu0 0
        %5750 = vmatprep.subr.bf16.mxu0 0
        %5751 = vmatpush1.bf16.msra.mxu0 %v5713
        %5752 = vmatprep.subr.bf16.mxu0 0
        %5753 = vmatpush1.bf16.msra.mxu0 %v5712
        %5754 = vmatprep.subr.bf16.mxu0 0
        %5755 = vmatpush1.bf16.msra.mxu0 %v5711
        %5756 = vmatprep.subr.bf16.mxu0 0
        %5757 = vmatpush1.bf16.msra.mxu0 %v5710
        %5758 = vmatprep.subr.bf16.mxu0 0
        %5759 = vmatpush2.bf16.msra.mxu0 0
        %5760 = vmatprep.subr.bf16.mxu0 0
        %5761 = vmatpush2.bf16.msra.mxu0 0
        %5762 = vmatprep.subr.bf16.mxu0 0
        %5763 = vmatpush2.bf16.msra.mxu0 0
        %5764 = vmatprep.subr.bf16.mxu0 0
        %5765 = vmatpush2.bf16.msra.mxu0 0
        %5766 = vmatprep.subr.bf16.mxu0 0
        %5767 = vmatpush2.bf16.msra.mxu0 0
        %5768 = vmatprep.subr.bf16.mxu0 0
        %5769 = vmatpush2.bf16.msra.mxu0 0
        %5770 = vmatprep.subr.bf16.mxu0 0
        %5771 = vmatpush2.bf16.msra.mxu0 0
        %5772 = vmatprep.subr.bf16.mxu0 0
        %5773 = vmatpush2.bf16.msra.mxu0 0
        %5774 = vmatprep.mubr.bf16.mxu0 0
        %5775 = vmatmul.mubr.bf16.gmra.mxu0 %v5719
        %v5776 = vpop.f32.mrf.mxu0
        %v5777 = vadd.f32 0.0, %v5776
        %v5778 = vpop.f32.mrf.mxu0
        %v5779 = vpop.f32.mrf.mxu0
        %v5780 = vadd.f32 0.0, %v5779
        %v5781 = vpop.f32.mrf.mxu0
        %5782 = vmatprep.mubr.bf16.mxu0 0
        %5783 = vmatmul.mubr.bf16.gmra.mxu0 %v5722
        %v5784 = vpop.f32.mrf.mxu0
        %v5785 = vadd.f32 0.0, %v5784
        %v5786 = vpop.f32.mrf.mxu0
        %v5787 = vpop.f32.mrf.mxu0
        %v5788 = vadd.f32 0.0, %v5787
        %v5789 = vpop.f32.mrf.mxu0
        %5790 = vmatprep.mubr.bf16.mxu0 0
        %5791 = vmatmul.mubr.bf16.gmra.mxu0 %v5725
        %v5792 = vpop.f32.mrf.mxu0
        %v5793 = vadd.f32 0.0, %v5792
        %v5794 = vpop.f32.mrf.mxu0
        %v5795 = vpop.f32.mrf.mxu0
        %v5796 = vadd.f32 0.0, %v5795
        %v5797 = vpop.f32.mrf.mxu0
        %5798 = vmatprep.mubr.bf16.mxu0 0
        %5799 = vmatmul.mubr.bf16.gmra.mxu0 %v5728
        %v5800 = vpop.f32.mrf.mxu0
        %v5801 = vadd.f32 0.0, %v5800
        %v5802 = vpop.f32.mrf.mxu0
        %v5803 = vpop.f32.mrf.mxu0
        %v5804 = vadd.f32 0.0, %v5803
        %v5805 = vpop.f32.mrf.mxu0
        %5806 = vmatprep.mubr.bf16.mxu0 0
        %5807 = vmatmul.mubr.bf16.gmra.mxu0 %v5731
        %v5808 = vpop.f32.mrf.mxu0
        %v5809 = vadd.f32 0.0, %v5808
        %v5810 = vpop.f32.mrf.mxu0
        %v5811 = vpop.f32.mrf.mxu0
        %v5812 = vadd.f32 0.0, %v5811
        %v5813 = vpop.f32.mrf.mxu0
        %5814 = vmatprep.mubr.bf16.mxu0 0
        %5815 = vmatmul.mubr.bf16.gmra.mxu0 %v5734
        %v5816 = vpop.f32.mrf.mxu0
        %v5817 = vadd.f32 0.0, %v5816
        %v5818 = vpop.f32.mrf.mxu0
        %v5819 = vpop.f32.mrf.mxu0
        %v5820 = vadd.f32 0.0, %v5819
        %v5821 = vpop.f32.mrf.mxu0
        %5822 = vmatprep.mubr.bf16.mxu0 0
        %5823 = vmatmul.mubr.bf16.gmra.mxu0 %v5737
        %v5824 = vpop.f32.mrf.mxu0
        %v5825 = vadd.f32 0.0, %v5824
        %v5826 = vpop.f32.mrf.mxu0
        %v5827 = vpop.f32.mrf.mxu0
        %v5828 = vadd.f32 0.0, %v5827
        %v5829 = vpop.f32.mrf.mxu0
        %5830 = vmatprep.mubr.bf16.mxu0 0
        %5831 = vmatmul.mubr.bf16.gmra.mxu0 %v5740
        %v5832 = vpop.f32.mrf.mxu0
        %v5833 = vadd.f32 0.0, %v5832
        %v5834 = vpop.f32.mrf.mxu0
        %v5835 = vpop.f32.mrf.mxu0
        %v5836 = vadd.f32 0.0, %v5835
        %v5837 = vpop.f32.mrf.mxu0
        %5838 = vdwg.mxu0
        %v5839 = vld [vmem:[%s15] sm:$0x1]
        %v5841 = vlaneseq
        %v5842 = vshrl.u32 %v5841, 7
        %v5843 = vsub.s32 0, %v5842
        %v5844 = vrot.slane %v5839, %v5843
        %v5846 = vadd.f32 %v5777, %v5844
        %v5847 = vadd.f32 %v5780, %v5844
        %v5848 = vadd.f32 %v5785, %v5844
        %v5849 = vadd.f32 %v5788, %v5844
        %v5850 = vadd.f32 %v5793, %v5844
        %v5851 = vadd.f32 %v5796, %v5844
        %v5852 = vadd.f32 %v5801, %v5844
        %v5853 = vadd.f32 %v5804, %v5844
        %v5854 = vadd.f32 %v5809, %v5844
        %v5855 = vadd.f32 %v5812, %v5844
        %v5856 = vadd.f32 %v5817, %v5844
        %v5857 = vadd.f32 %v5820, %v5844
        %v5858 = vadd.f32 %v5825, %v5844
        %v5859 = vadd.f32 %v5828, %v5844
        %v5860 = vadd.f32 %v5833, %v5844
        %v5861 = vadd.f32 %v5836, %v5844
        %v5862 = vadd.f32 %v5662, %v5846
        %v5863 = vadd.f32 %v5663, %v5847
        %v5864 = vadd.f32 %v5664, %v5848
        %v5865 = vadd.f32 %v5665, %v5849
        %v5866 = vadd.f32 %v5666, %v5850
        %v5867 = vadd.f32 %v5667, %v5851
        %v5868 = vadd.f32 %v5668, %v5852
        %v5869 = vadd.f32 %v5669, %v5853
        %v5870 = vadd.f32 %v5670, %v5854
        %v5871 = vadd.f32 %v5671, %v5855
        %v5872 = vadd.f32 %v5672, %v5856
        %v5873 = vadd.f32 %v5673, %v5857
        %v5874 = vadd.f32 %v5674, %v5858
        %v5875 = vadd.f32 %v5675, %v5859
        %v5876 = vadd.f32 %v5676, %v5860
        %v5877 = vadd.f32 %v5677, %v5861
        %5878 = vst [vmem:[%s665] sm:$0xff] %v5862
        %5879 = vst [vmem:[%s665 + $0x8] sm:$0xff] %v5863
        %5880 = vst [vmem:[%s665 + $0x10] sm:$0xff] %v5864
        %5881 = vst [vmem:[%s665 + $0x18] sm:$0xff] %v5865
        %5882 = vst [vmem:[%s665 + $0x20] sm:$0xff] %v5866
        %5883 = vst [vmem:[%s665 + $0x28] sm:$0xff] %v5867
        %5884 = vst [vmem:[%s665 + $0x30] sm:$0xff] %v5868
        %5885 = vst [vmem:[%s665 + $0x38] sm:$0xff] %v5869
        %5886 = vst [vmem:[%s665 + $0x40] sm:$0xff] %v5870
        %5887 = vst [vmem:[%s665 + $0x48] sm:$0xff] %v5871
        %5888 = vst [vmem:[%s665 + $0x50] sm:$0xff] %v5872
        %5889 = vst [vmem:[%s665 + $0x58] sm:$0xff] %v5873
        %5890 = vst [vmem:[%s665 + $0x60] sm:$0xff] %v5874
        %5891 = vst [vmem:[%s665 + $0x68] sm:$0xff] %v5875
        %5892 = vst [vmem:[%s665 + $0x70] sm:$0xff] %v5876
        %5893 = vst [vmem:[%s665 + $0x78] sm:$0xff] %v5877
        %s5894 = sand.u32 %s393, 1
        %s5895 = scalar_lea.sflag [#allocation6], %s5894
        %s5896 = sand.u32 %s393, 1
        %s5897 = smul.addr %s5896, 128
        %s5898 = scalar_lea.vmem [#allocation18], %s5897
        // Predicated region
        $region117: #{tpu_custom_call.1} parent=83 // pred_check
          %p5899 = pneg %p403
        $region118: #{tpu_custom_call.1} parent=83 // pred_check_branch
          %5901 = sbr.rel (%p5899) target = $region120
        $region119: #{tpu_custom_call.1} parent=83 // pred_region
          %s5902 = smul.u32 2, %s39
          %s5904 = ssub.s32 2048, 2048
          %5905 = vsyncadd %s5895, %s5904
          %s5906 = smul.addr %s5902, 8
          %s5907 = smul.addr %s5906, 128
          %s5908 = scalar_lea.hbm %s16, %s5907
          %s5909 = sshll.u32 %s5898, 4
          %s5910 = int_to_ptr.vmem [resolvable:$true] %s5909
          %5915 = dma.vmem_to_hbm [thread:$0]  %s5910, 2048, %s5908, %s5895, 128, 128, 8
        $region120: #{tpu_custom_call.1} parent=83 // pred_fallthru
          _
      $region84: #{tpu_custom_call.1} parent=5 // pred_fallthru
        _
      %p5916 = scmp.le.s32.totalorder 2, %s34
      // Predicated region
      $region121: #{tpu_custom_call.1} parent=5 // pred_check
        %p5917 = pneg %p5916
      $region122: #{tpu_custom_call.1} parent=5 // pred_check_branch
        %5919 = sbr.rel (%p5917) target = $region124
      $region123: #{tpu_custom_call.1} parent=5 // pred_region
        %s5920 = ssub.s32 %s34, 2
        // Predicated region
        $region125: #{tpu_custom_call.1} parent=123 // pred_check
          %p5921 = pneg %p409
        $region126: #{tpu_custom_call.1} parent=123 // pred_check_branch
          %5923 = sbr.rel (%p5921) target = $region128
        $region127: #{tpu_custom_call.1} parent=123 // pred_region
          %s5924 = sand.u32 %s394, 1
          %s5925 = scalar_lea.sflag [#allocation6], %s5924
          %s5926 = sand.u32 %s394, 1
          %s5927 = smul.addr %s5926, 128
          %s5928 = scalar_lea.vmem [#allocation18], %s5927
          %5929 = dma.done %s5925, 2048
        $region128: #{tpu_custom_call.1} parent=123 // pred_fallthru
          _
      $region124: #{tpu_custom_call.1} parent=5 // pred_fallthru
        _
    $region6: #{tpu_custom_call.1} parent=1 // loop_footer
      %s38 = sadd.s32 1, %s34
    $region7: #{tpu_custom_call.1} parent=1 // loop_footer_branch
      %33 = sbr.rel target = $region3
    $region8: #{tpu_custom_call.1} parent=1 // loop_exit
      _
    %5930 = vsyncpa [#allocation5], 1
    %s5931 = scalar_lea.sflag [#allocation5], 1
    %5932 = vsyncpa %s5931, 1
    %5933 = vsyncpa [#allocation8], 1
    %s5934 = scalar_lea.sflag [#allocation8], 1
    %5935 = vsyncpa %s5934, 1
    %5936 = vsyncpa [#allocation11], 1
    %5937 = vsyncpa [#allocation14], 1
    %5938 = vsyncpa [#allocation17], 1
    %5939 = vsyncpa [#allocation6], 1
    %s5940 = scalar_lea.sflag [#allocation6], 1
    %5941 = vsyncpa %s5940, 1

</llo_original>
